<compile_context>
chip_gen: v6e
topology: v6e:2x2x1
jax: 0.10.0
libtpu: 0.0.40
codegen_flags: <defaults>
</compile_context>

<pallas_src>
import math

import jax
import jax.numpy as jnp
from jax import lax
from jax.experimental import pallas as pl
from jax.experimental.pallas import tpu as pltpu

LN_EPS = 1e-5  # torch nn.LayerNorm default
_F32 = jnp.float32
_BF16 = jnp.bfloat16


def _round_up(v, m):
    return -(-v // m) * m


def _layer_norm(x, w, b):
    # x: (M, D) f32 ; w, b: (1, D) f32 (broadcast over rows)
    mu = jnp.mean(x, axis=-1, keepdims=True)
    xc = x - mu
    var = jnp.mean(xc * xc, axis=-1, keepdims=True)
    return xc * lax.rsqrt(var + LN_EPS) * w + b


def _gelu_tanh(x):
    # TODO(synk): torch nn.GELU() default is the exact-erf form; the tanh
    # approximation (max abs deviation ~1e-3) is used per perf review so the
    # transcendental runs on the EUP slot instead of ~10 VALU ops/element.
    c = 0.7978845608028654  # sqrt(2/pi)
    return 0.5 * x * (1.0 + jnp.tanh(c * (x + 0.044715 * (x * x * x))))


# --------------------------------------------------------------------------
# Fused kernel: proj_dec + cls concat -> n_steps decoder blocks -> mask head
# --------------------------------------------------------------------------
def make_fused_kernel(Bt, N, n_cls, n_heads, D, Dff, Din, n_cls_pad, D_pad,
                      n_layers, weights_resident):
    S = N + n_cls
    BS = Bt * S
    hd = D // n_heads

    def kernel(x_in_ref, cls_ref, pdw_ref, vecD_ref, mn_ref, pp_ref, pc_ref,
               lnp_ref, wqkv_ref, bqkv_ref, wo_ref, w1_ref, b1_ref, w2_ref,
               masks_ref, dp_ref, x_work):
        step = pl.program_id(1)
        n_steps = pl.num_programs(1)

        # -------- prologue: x = proj_dec(x); x = cat((x, cls_emb), 1) --------
        @pl.when(step == 0)
        def _():
            xin = x_in_ref[...].reshape(Bt * N, Din)
            proj = (jnp.dot(xin.astype(_BF16), pdw_ref[...],
                            preferred_element_type=_F32)
                    + vecD_ref[0:1, :])                      # proj_dec bias
            x_work[...] = jnp.concatenate(
                [proj.reshape(Bt, N, D),
                 jnp.broadcast_to(cls_ref[...], (Bt, n_cls, D))], axis=1)

        # -------- per-layer parameters (streamed block or resident stack) ----
        lyr = (step % n_layers) if weights_resident else 0
        lnp = lnp_ref[lyr]                                   # (8, D)
        ln1_w, ln1_b = lnp[0:1, :], lnp[1:2, :]
        ln2_w, ln2_b = lnp[2:3, :], lnp[3:4, :]
        bo, b2 = lnp[4:5, :], lnp[5:6, :]
        wqkv = wqkv_ref[lyr]
        bqkv = bqkv_ref[lyr]
        wo = wo_ref[lyr]
        w1 = w1_ref[lyr]
        b1 = b1_ref[lyr]
        w2 = w2_ref[lyr]

        x = x_work[...].reshape(BS, D)

        # -------- pre-norm multi-head self-attention -------------------------
        y = _layer_norm(x, ln1_w, ln1_b)
        # 1/sqrt(hd) is pre-folded into the Q columns of wqkv/bqkv (wrapper).
        qkv = jnp.dot(y.astype(_BF16), wqkv,
                      preferred_element_type=_F32) + bqkv     # (BS, 3D) f32
        qkv_b = qkv.astype(_BF16)            # single bf16 cast reused per head

        # TODO(synk): heads remain a small static Python loop (the concat-fused
        # output projection needs a static list); move to lax.fori_loop with
        # 128-lane-aligned head slabs if n_heads becomes large.
        o_heads = []
        for h in range(n_heads):
            q = qkv_b[:, h * hd:(h + 1) * hd].reshape(Bt, S, hd)
            k = qkv_b[:, D + h * hd:D + (h + 1) * hd].reshape(Bt, S, hd)
            v = qkv_b[:, 2 * D + h * hd:2 * D + (h + 1) * hd].reshape(Bt, S, hd)
            s_att = jnp.einsum("bqd,bkd->bqk", q, k,
                               preferred_element_type=_F32)    # scale folded
            mx = jnp.max(s_att, axis=-1, keepdims=True)
            e = jnp.exp(s_att - mx)
            probs = e * pl.reciprocal(jnp.sum(e, axis=-1, keepdims=True),
                                      approx=True)
            o = jnp.einsum("bqk,bkd->bqd", probs.astype(_BF16), v,
                           preferred_element_type=_F32)        # (Bt, S, hd)
            o_heads.append(o.reshape(BS, hd))
        # Single K=D output projection (MXU-filling) instead of n_heads K=hd
        # matmuls against Wo slabs.
        o_cat = jnp.concatenate(o_heads, axis=-1).astype(_BF16)   # (BS, D)
        x = x + jnp.dot(o_cat, wo, preferred_element_type=_F32) + bo

        # -------- MLP ---------------------------------------------------------
        y2 = _layer_norm(x, ln2_w, ln2_b)
        h1 = _gelu_tanh(jnp.dot(y2.astype(_BF16), w1,
                                preferred_element_type=_F32) + b1)
        x = x + jnp.dot(h1.astype(_BF16), w2,
                        preferred_element_type=_F32) + b2

        x_work[...] = x.reshape(Bt, S, D)

        # -------- epilogue: decoder_norm + cosine-mask head + mask_norm ------
        @pl.when(step == n_steps - 1)
        def _():
            xn = _layer_norm(x, vecD_ref[1:2, :], vecD_ref[2:3, :])
            xn = xn.reshape(Bt, S, D)
            patches = xn[:, :N, :]        # down_patches
            cls_tok = xn[:, N:, :]

            # down_patches: bf16, lane-dense; direct slice store (pad lanes are
            # never read — the wrapper slices them off).
            if D_pad > D:
                dp_ref[:, :, 0:D] = patches.astype(_BF16)
            else:
                dp_ref[...] = patches.astype(_BF16)

            p_proj = jnp.dot(patches.reshape(Bt * N, D).astype(_BF16),
                             pp_ref[...],
                             preferred_element_type=_F32).reshape(Bt, N, D)
            c_proj = jnp.dot(cls_tok.reshape(Bt * n_cls, D).astype(_BF16),
                             pc_ref[...],
                             preferred_element_type=_F32).reshape(Bt, n_cls, D)
            # No eps — matches torch `x / x.norm(dim=-1, keepdim=True)`.
            p_proj = p_proj * lax.rsqrt(
                jnp.sum(p_proj * p_proj, axis=-1, keepdims=True))
            c_proj = c_proj * lax.rsqrt(
                jnp.sum(c_proj * c_proj, axis=-1, keepdims=True))
            m = jnp.einsum("bnd,bkd->bnk", p_proj, c_proj,
                           preferred_element_type=_F32)        # (Bt, N, n_cls)
            m = _layer_norm(m.reshape(Bt * N, n_cls),
                            mn_ref[0:1, :], mn_ref[1:2, :]).reshape(Bt, N, n_cls)
            if n_cls_pad > n_cls:
                masks_ref[:, :, 0:n_cls] = m   # direct slice store, no concat
            else:
                masks_ref[...] = m

    return kernel


# --------------------------------------------------------------------------
# VMEM budget estimate + batch-tile selection
# --------------------------------------------------------------------------
def _estimate_vmem_bytes(Bt, S, N, D, Dff, Din, n_cls_pad, D_pad, n_layers,
                         weights_resident):
    f32, bf16 = 4, 2
    b = Bt * S * D * f32                                # x_work scratch
    b += Bt * S * 3 * D * (f32 + bf16)                  # qkv + bf16 copy
    b += Bt * S * Dff * (f32 + bf16)                    # MLP hidden
    b += 2 * Bt * S * S * f32                           # one head's scores+exp
    b += Bt * S * D * (f32 + bf16)                      # attn staging / result
    b += Bt * N * n_cls_pad * f32 + Bt * N * D_pad * bf16   # resident outputs
    b += Bt * N * Din * f32                             # resident input block
    layer_w = (D * 3 * D + D * D + D * Dff + Dff * D) * bf16 \
        + (8 * D + 3 * D + Dff) * f32
    b += (n_layers if weights_resident else 2) * layer_w
    b += (Din * D + 2 * D * D) * bf16 + n_cls_pad * D * f32 + 16 * D * f32
    return b


def _choose_batch_tiles(B, S, fits, multi_tc):
    divisors = [d for d in range(1, B + 1) if B % d == 0]
    if multi_tc:
        # v7x: the two TensorCores only get work from the parallel bt axis,
        # but only split while each tile keeps >= 256 rows for the MXU M-dim.
        for n_bt in divisors:
            if n_bt >= 2 and (B // n_bt) * S >= 256 and fits(B // n_bt):
                return n_bt
    # single-TC (v5e/v6e) or fallback: biggest tile that fits the VMEM budget.
    for n_bt in divisors:
        if fits(B // n_bt):
            return n_bt
    return B


# --------------------------------------------------------------------------
# Forward wrapper (param packing / single fused pallas_call / unpad)
# --------------------------------------------------------------------------
def mask_transformer_forward(x, params, im_size, patch_size, n_cls, n_heads,
                             n_layers, n_blocks):
    H, W = im_size
    GS = H // patch_size
    B, N, Din = x.shape
    assert N == GS * GS, (N, GS)
    D = params["cls_emb"].shape[-1]
    Dff = params["layers"][0]["w1"].shape[1]
    assert D % n_heads == 0
    S = N + n_cls
    n_steps = n_blocks * n_layers
    n_cls_pad = _round_up(n_cls, 128)
    D_pad = _round_up(D, 128)
    scale = (D // n_heads) ** (-0.5)

    # ---- hardware-aware VMEM budget / tiling --------------------------------
    try:
        vmem_cap = int(pltpu.get_tpu_info().vmem_capacity_bytes)
    except Exception:
        vmem_cap = 64 * 1024 * 1024            # v7x-safe fallback
    try:
        multi_tc = "v7" in jax.devices()[0].device_kind.lower()
    except Exception:
        multi_tc = False
    vmem_budget = int(0.6 * vmem_cap)

    layer_w_bytes = (D * 3 * D + D * D + D * Dff + Dff * D) * 2 \
        + (8 * D + 3 * D + Dff) * 4
    # Keep the whole per-layer weight stack resident when it is small vs the
    # budget (avoids re-streaming weights every block when n_blocks > 1);
    # otherwise stream per step (double-buffered by the BlockSpec pipeline).
    weights_resident = (n_blocks > 1) and \
        (n_layers * layer_w_bytes <= 0.35 * vmem_budget)

    def fits(Bt):
        return _estimate_vmem_bytes(Bt, S, N, D, Dff, Din, n_cls_pad, D_pad,
                                    n_layers, weights_resident) <= vmem_budget

    n_bt = _choose_batch_tiles(B, S, fits, multi_tc)
    Bt = B // n_bt

    layers = params["layers"]

    # ---- pack / stack parameters (matmul weights as bf16 for the MXU) ------
    # Fold the attention scale into the Q columns of wqkv / bqkv.
    qscale = jnp.concatenate(
        [jnp.full((D,), scale, _F32), jnp.ones((2 * D,), _F32)])
    lnp = jnp.stack([
        jnp.concatenate([l["ln1_w"], l["ln1_b"], l["ln2_w"], l["ln2_b"],
                         l["bo"], l["b2"], jnp.zeros((2, D), _F32)], axis=0)
        for l in layers], axis=0)                                # (L, 8, D)
    wqkv = (jnp.stack([l["wqkv"] for l in layers]) * qscale).astype(_BF16)
    bqkv = jnp.stack([l["bqkv"] for l in layers]) * qscale        # (L, 1, 3D)
    wo = jnp.stack([l["wo"] for l in layers]).astype(_BF16)       # (L, D, D)
    w1 = jnp.stack([l["w1"] for l in layers]).astype(_BF16)       # (L, D, Dff)
    b1 = jnp.stack([l["b1"] for l in layers])                     # (L, 1, Dff)
    w2 = jnp.stack([l["w2"] for l in layers]).astype(_BF16)       # (L, Dff, D)

    vecD = jnp.concatenate([params["proj_dec_b"], params["dn_w"],
                            params["dn_b"], jnp.zeros((5, D), _F32)], axis=0)
    mnp = jnp.concatenate([params["mn_w"], params["mn_b"],
                           jnp.zeros((6, n_cls), _F32)], axis=0)
    pdw = params["proj_dec_w"].astype(_BF16)
    pp = params["proj_patch"].astype(_BF16)
    pc = params["proj_classes"].astype(_BF16)
    cls_emb = params["cls_emb"]                                   # (1, n_cls, D)

    def rep(shape):
        nd = len(shape)
        return pl.BlockSpec(tuple(shape), lambda bt, s, nd=nd: (0,) * nd)

    if weights_resident:
        def per_layer(shape):
            return rep((n_layers,) + tuple(shape))
    else:
        def per_layer(shape):
            nd = len(shape)
            return pl.BlockSpec((1,) + tuple(shape),
                                lambda bt, s, nd=nd: (s % n_layers,) + (0,) * nd)

    kernel = make_fused_kernel(Bt, N, n_cls, n_heads, D, Dff, Din,
                               n_cls_pad, D_pad, n_layers, weights_resident)

    vmem_limit = int(min(0.85 * vmem_cap, 100 * 1024 * 1024))

    masks_pad, dp_pad = pl.pallas_call(
        kernel,
        out_shape=(
            jax.ShapeDtypeStruct((B, N, n_cls_pad), _F32),
            jax.ShapeDtypeStruct((B, N, D_pad), _BF16),
        ),
        grid=(n_bt, n_steps),
        in_specs=[
            pl.BlockSpec((Bt, N, Din), lambda bt, s: (bt, 0, 0)),  # x
            rep((1, n_cls, D)),        # cls_emb
            rep((Din, D)),             # proj_dec_w (bf16)
            rep((8, D)),               # [proj_dec_b, dn_w, dn_b, pad...]
            rep((8, n_cls)),           # [mn_w, mn_b, pad...]
            # TODO(synk): proj_patch / proj_classes are epilogue-only; if VMEM
            # gets tight they could be DMA'd manually inside the last-step
            # pl.when instead of sitting resident for the whole grid.
            rep((D, D)),               # proj_patch (bf16)
            rep((D, D)),               # proj_classes (bf16)
            per_layer((8, D)),         # [ln1_w, ln1_b, ln2_w, ln2_b, bo, b2]
            per_layer((D, 3 * D)),     # wqkv (bf16, Q-scaled)
            per_layer((1, 3 * D)),     # bqkv (Q-scaled)
            per_layer((D, D)),         # wo (bf16)
            per_layer((D, Dff)),       # w1 (bf16)
            per_layer((1, Dff)),       # b1
            per_layer((Dff, D)),       # w2 (bf16)
        ],
        out_specs=(
            pl.BlockSpec((Bt, N, n_cls_pad), lambda bt, s: (bt, 0, 0)),
            pl.BlockSpec((Bt, N, D_pad), lambda bt, s: (bt, 0, 0)),
        ),
        scratch_shapes=[pltpu.VMEM((Bt, S, D), _F32)],   # resident activation
        compiler_params=pltpu.CompilerParams(
            dimension_semantics=("parallel", "arbitrary"),
            vmem_limit_bytes=vmem_limit,
        ),
    )(x, cls_emb, pdw, vecD, mnp, pp, pc, lnp, wqkv, bqkv, wo, w1, b1, w2)

    masks = masks_pad[:, :, :n_cls]
    down_patches = dp_pad[:, :, :D].astype(_F32)
    out_feature = None  # add_l1_loss=False
    return masks, out_feature, down_patches


# --------------------------------------------------------------------------
# Pure-JAX reference (same bf16 matmul casts) used only for self-checking
# --------------------------------------------------------------------------
def _reference_forward(x, params, n_cls, n_heads, n_layers, n_blocks):
    B, N, Din = x.shape
    D = params["cls_emb"].shape[-1]
    S = N + n_cls
    hd = D // n_heads
    scale = 1.0 / math.sqrt(hd)

    def mm(a, w):
        return jnp.dot(a.astype(_BF16), w.astype(_BF16),
                       preferred_element_type=_F32)

    h = mm(x.reshape(B * N, Din), params["proj_dec_w"]) + params["proj_dec_b"]
    xs = jnp.concatenate(
        [h.reshape(B, N, D),
         jnp.broadcast_to(params["cls_emb"], (B, n_cls, D))], axis=1)
    xs = xs.reshape(B * S, D)

    for _ in range(n_blocks):
        for l in range(n_layers):
            p = params["layers"][l]
            y = _layer_norm(xs, p["ln1_w"], p["ln1_b"])
            qkv = mm(y, p["wqkv"]) + p["bqkv"]
            attn_proj = jnp.zeros((B * S, D), _F32)
            for hh in range(n_heads):
                q = qkv[:, hh * hd:(hh + 1) * hd].reshape(B, S, hd)
                k = qkv[:, D + hh * hd:D + (hh + 1) * hd].reshape(B, S, hd)
                v = qkv[:, 2 * D + hh * hd:2 * D + (hh + 1) * hd].reshape(B, S, hd)
                s_att = jnp.einsum("bqd,bkd->bqk", q.astype(_BF16),
                                   k.astype(_BF16),
                                   preferred_element_type=_F32) * scale
                probs = jax.nn.softmax(s_att, axis=-1)
                o = jnp.einsum("bqk,bkd->bqd", probs.astype(_BF16),
                               v.astype(_BF16), preferred_element_type=_F32)
                attn_proj = attn_proj + mm(o.reshape(B * S, hd),
                                           p["wo"][hh * hd:(hh + 1) * hd, :])
            xs = xs + attn_proj + p["bo"]
            y2 = _layer_norm(xs, p["ln2_w"], p["ln2_b"])
            h1 = _gelu_tanh(mm(y2, p["w1"]) + p["b1"])
            xs = xs + mm(h1, p["w2"]) + p["b2"]

    xn = _layer_norm(xs, params["dn_w"], params["dn_b"]).reshape(B, S, D)
    patches = xn[:, :N, :]
    cls_tok = xn[:, N:, :]
    p_proj = mm(patches.reshape(B * N, D),
                params["proj_patch"]).reshape(B, N, D)
    c_proj = mm(cls_tok.reshape(B * n_cls, D),
                params["proj_classes"]).reshape(B, n_cls, D)
    p_proj = p_proj * lax.rsqrt(
        jnp.sum(p_proj * p_proj, axis=-1, keepdims=True))
    c_proj = c_proj * lax.rsqrt(
        jnp.sum(c_proj * c_proj, axis=-1, keepdims=True))
    m = jnp.einsum("bnd,bkd->bnk", p_proj, c_proj)
    masks = _layer_norm(m.reshape(B * N, n_cls), params["mn_w"],
                        params["mn_b"]).reshape(B, N, n_cls)
    return masks, None, patches


# --------------------------------------------------------------------------
# Deterministic synthetic parameter initialization
# --------------------------------------------------------------------------
def init_params(key, d_encoder, d_model, d_ff, n_cls, n_layers):
    keys = iter(jax.random.split(key, 16 + 8 * n_layers))
    nxt = lambda: next(keys)
    std = 0.02
    scale = d_model ** (-0.5)

    params = {
        "proj_dec_w": std * jax.random.normal(nxt(), (d_encoder, d_model), _F32),
        "proj_dec_b": jnp.zeros((1, d_model), _F32),
        "cls_emb": std * jax.random.normal(nxt(), (1, n_cls, d_model), _F32),
        "proj_patch": scale * jax.random.normal(nxt(), (d_model, d_model), _F32),
        "proj_classes": scale * jax.random.normal(nxt(), (d_model, d_model), _F32),
        "dn_w": jnp.ones((1, d_model), _F32),
        "dn_b": jnp.zeros((1, d_model), _F32),
        "mn_w": jnp.ones((1, n_cls), _F32),
        "mn_b": jnp.zeros((1, n_cls), _F32),
        "layers": [],
    }
    for _ in range(n_layers):
        layer = {
            "ln1_w": jnp.ones((1, d_model), _F32),
            "ln1_b": jnp.zeros((1, d_model), _F32),
            "wqkv": std * jax.random.normal(nxt(), (d_model, 3 * d_model), _F32),
            "bqkv": jnp.zeros((1, 3 * d_model), _F32),
            "wo": std * jax.random.normal(nxt(), (d_model, d_model), _F32),
            "bo": jnp.zeros((1, d_model), _F32),
            "ln2_w": jnp.ones((1, d_model), _F32),
            "ln2_b": jnp.zeros((1, d_model), _F32),
            "w1": std * jax.random.normal(nxt(), (d_model, d_ff), _F32),
            "b1": jnp.zeros((1, d_ff), _F32),
            "w2": std * jax.random.normal(nxt(), (d_ff, d_model), _F32),
            "b2": jnp.zeros((1, d_model), _F32),
        }
        params["layers"].append(layer)
    return params


if __name__ == "__main__":
    # Small, forward-consistent shapes
    B = 2
    n_cls = 8
    patch_size = 16
    d_encoder = 32
    d_model = 32
    d_ff = 64
    n_heads = 2
    n_layers = 2
    GS = 4
    H = W = GS * patch_size      # 64
    N = GS * GS                  # 16 patch tokens

    key = jax.random.PRNGKey(0)
    kx, kp = jax.random.split(key)
    x = jax.random.normal(kx, (B, N, d_encoder), _F32)
    params = init_params(kp, d_encoder, d_model, d_ff, n_cls, n_layers)

    # n_blocks=1 exercises the streamed-per-layer-weight path;
    # n_blocks=2 exercises the resident-weight-stack path.
    for n_blocks in (1, 2):
        masks, out_feature, down_patches = mask_transformer_forward(
            x, params, im_size=(H, W), patch_size=patch_size, n_cls=n_cls,
            n_heads=n_heads, n_layers=n_layers, n_blocks=n_blocks,
        )
        jax.block_until_ready((masks, down_patches))

        assert masks.shape == (B, N, n_cls), masks.shape
        assert down_patches.shape == (B, N, d_model), down_patches.shape
        assert out_feature is None
        assert bool(jnp.all(jnp.isfinite(masks)))
        assert bool(jnp.all(jnp.isfinite(down_patches)))

        # Pure-JAX reference with the same bf16 casts: checks the fused
        # kernel's plumbing (layer indexing, scale folding, fused output
        # projection, residuals, projections, padded slice stores).
        ref_masks, _, ref_dp = _reference_forward(
            x, params, n_cls, n_heads, n_layers, n_blocks)
        err_m = float(jnp.max(jnp.abs(masks - ref_masks)))
        err_d = float(jnp.max(jnp.abs(down_patches - ref_dp)))
        assert err_m < 5e-2, (n_blocks, err_m)
        assert err_d < 5e-2, (n_blocks, err_d)

    print("KERNEL_OK")
</pallas_src>

<mosaic_0001>
module attributes {stable_mosaic.version = 11 : i64} {
  func.func @kernel(%arg0: i32, %arg1: i32, %arg2: memref<2x16x32xf32, #tpu.memory_space<vmem>>, %arg3: memref<1x8x32xf32, #tpu.memory_space<vmem>>, %arg4: memref<32x32xbf16, #tpu.memory_space<vmem>>, %arg5: memref<8x32xf32, #tpu.memory_space<vmem>>, %arg6: memref<8x8xf32, #tpu.memory_space<vmem>>, %arg7: memref<32x32xbf16, #tpu.memory_space<vmem>>, %arg8: memref<32x32xbf16, #tpu.memory_space<vmem>>, %arg9: memref<1x8x32xf32, #tpu.memory_space<vmem>>, %arg10: memref<1x32x96xbf16, #tpu.memory_space<vmem>>, %arg11: memref<1x1x96xf32, #tpu.memory_space<vmem>>, %arg12: memref<1x32x32xbf16, #tpu.memory_space<vmem>>, %arg13: memref<1x32x64xbf16, #tpu.memory_space<vmem>>, %arg14: memref<1x1x64xf32, #tpu.memory_space<vmem>>, %arg15: memref<1x64x32xbf16, #tpu.memory_space<vmem>>, %arg16: memref<2x16x128xf32, #tpu.memory_space<vmem>>, %arg17: memref<2x16x128xbf16, #tpu.memory_space<vmem>>, %arg18: memref<2x24x32xf32, #tpu.memory_space<vmem>>) attributes {dimension_semantics = [#tpu.dimension_semantics<parallel>, #tpu.dimension_semantics<arbitrary>], iteration_bounds = array<i64: 1, 2>, scalar_prefetch = 0 : i64, scratch_operands = 1 : i64, tpu.core_type = #tpu.core_type<tc>, window_params = [{transform_indices = @transform_0, window_bounds = array<i64: 2, 16, 32>}, {pipeline_mode = #tpu.pipeline_mode<synchronous>, transform_indices = @transform_1, window_bounds = array<i64: 1, 8, 32>}, {pipeline_mode = #tpu.pipeline_mode<synchronous>, transform_indices = @transform_2, window_bounds = array<i64: 32, 32>}, {pipeline_mode = #tpu.pipeline_mode<synchronous>, transform_indices = @transform_3, window_bounds = array<i64: 8, 32>}, {pipeline_mode = #tpu.pipeline_mode<synchronous>, transform_indices = @transform_4, window_bounds = array<i64: 8, 8>}, {pipeline_mode = #tpu.pipeline_mode<synchronous>, transform_indices = @transform_5, window_bounds = array<i64: 32, 32>}, {pipeline_mode = #tpu.pipeline_mode<synchronous>, transform_indices = @transform_6, window_bounds = array<i64: 32, 32>}, {transform_indices = @transform_7, window_bounds = array<i64: 1, 8, 32>}, {transform_indices = @transform_8, window_bounds = array<i64: 1, 32, 96>}, {transform_indices = @transform_9, window_bounds = array<i64: 1, 1, 96>}, {transform_indices = @transform_10, window_bounds = array<i64: 1, 32, 32>}, {transform_indices = @transform_11, window_bounds = array<i64: 1, 32, 64>}, {transform_indices = @transform_12, window_bounds = array<i64: 1, 1, 64>}, {transform_indices = @transform_13, window_bounds = array<i64: 1, 64, 32>}, {transform_indices = @transform_14, window_bounds = array<i64: 2, 16, 128>}, {transform_indices = @transform_15, window_bounds = array<i64: 2, 16, 128>}]} {
    %c0_i32 = arith.constant 0 : i32
    %0 = arith.cmpi eq, %arg1, %c0_i32 : i32
    %1 = arith.extui %0 : i1 to i32
    %c0_i32_0 = arith.constant 0 : i32
    %2 = arith.cmpi ne, %1, %c0_i32_0 : i32
    scf.if %2 {
      %c0_53 = arith.constant 0 : index
      %c0_54 = arith.constant 0 : index
      %c0_55 = arith.constant 0 : index
      %143 = vector.load %arg2[%c0_53, %c0_54, %c0_55] : memref<2x16x32xf32, #tpu.memory_space<vmem>>, vector<2x16x32xf32>
      %144 = vector.shape_cast %143 : vector<2x16x32xf32> to vector<32x32xf32>
      %145 = arith.truncf %144 : vector<32x32xf32> to vector<32x32xbf16>
      %c0_56 = arith.constant 0 : index
      %c0_57 = arith.constant 0 : index
      %146 = vector.load %arg4[%c0_56, %c0_57] : memref<32x32xbf16, #tpu.memory_space<vmem>>, vector<32x32xbf16>
      %cst_58 = arith.constant dense<0.000000e+00> : vector<32x32xf32>
      %147 = tpu.matmul %145, %146, %cst_58 {dimension_numbers = #tpu.dot_dimension_numbers<[1], [0], [0], [1], [0, 0, 1, 1], [], []>} : vector<32x32xbf16>, vector<32x32xbf16>, vector<32x32xf32> -> vector<32x32xf32>
      %c0_59 = arith.constant 0 : index
      %c0_60 = arith.constant 0 : index
      %148 = vector.load %arg5[%c0_59, %c0_60] : memref<8x32xf32, #tpu.memory_space<vmem>>, vector<1x32xf32>
      %149 = vector.broadcast %148 : vector<1x32xf32> to vector<32x32xf32>
      %150 = arith.addf %147, %149 : vector<32x32xf32>
      %151 = vector.shape_cast %150 : vector<32x32xf32> to vector<2x16x32xf32>
      %c0_61 = arith.constant 0 : index
      %c0_62 = arith.constant 0 : index
      %c0_63 = arith.constant 0 : index
      %152 = vector.load %arg3[%c0_61, %c0_62, %c0_63] : memref<1x8x32xf32, #tpu.memory_space<vmem>>, vector<1x8x32xf32>
      %153 = vector.shape_cast %152 : vector<1x8x32xf32> to vector<1x8x32xf32>
      %154 = vector.broadcast %153 : vector<1x8x32xf32> to vector<2x8x32xf32>
      %155 = tpu.concatenate %151, %154 in 1 : vector<2x16x32xf32>, vector<2x8x32xf32> -> vector<2x24x32xf32>
      %c0_64 = arith.constant 0 : index
      %c0_65 = arith.constant 0 : index
      %c0_66 = arith.constant 0 : index
      %156 = vector.load %arg18[%c0_64, %c0_65, %c0_66] : memref<2x24x32xf32, #tpu.memory_space<vmem>>, vector<2x24x32xf32>
      tpu.vector_store %arg18[%c0_64, %c0_65, %c0_66], %155 {strides = array<i32>} : memref<2x24x32xf32, #tpu.memory_space<vmem>>, vector<2x24x32xf32>,
    } else {
    }
    %c0 = arith.constant 0 : index
    %c0_1 = arith.constant 0 : index
    %c0_2 = arith.constant 0 : index
    %3 = vector.load %arg9[%c0, %c0_1, %c0_2] : memref<1x8x32xf32, #tpu.memory_space<vmem>>, vector<1x8x32xf32>
    %4 = vector.shape_cast %3 : vector<1x8x32xf32> to vector<8x32xf32>
    %5 = vector.extract_strided_slice %4 {offsets = [0, 0], sizes = [1, 32], strides = [1, 1]} : vector<8x32xf32> to vector<1x32xf32>
    %6 = vector.extract_strided_slice %4 {offsets = [1, 0], sizes = [1, 32], strides = [1, 1]} : vector<8x32xf32> to vector<1x32xf32>
    %7 = vector.extract_strided_slice %4 {offsets = [2, 0], sizes = [1, 32], strides = [1, 1]} : vector<8x32xf32> to vector<1x32xf32>
    %8 = vector.extract_strided_slice %4 {offsets = [3, 0], sizes = [1, 32], strides = [1, 1]} : vector<8x32xf32> to vector<1x32xf32>
    %9 = vector.extract_strided_slice %4 {offsets = [4, 0], sizes = [1, 32], strides = [1, 1]} : vector<8x32xf32> to vector<1x32xf32>
    %10 = vector.extract_strided_slice %4 {offsets = [5, 0], sizes = [1, 32], strides = [1, 1]} : vector<8x32xf32> to vector<1x32xf32>
    %c0_3 = arith.constant 0 : index
    %c0_4 = arith.constant 0 : index
    %c0_5 = arith.constant 0 : index
    %11 = vector.load %arg10[%c0_3, %c0_4, %c0_5] : memref<1x32x96xbf16, #tpu.memory_space<vmem>>, vector<1x32x96xbf16>
    %12 = vector.shape_cast %11 : vector<1x32x96xbf16> to vector<32x96xbf16>
    %c0_6 = arith.constant 0 : index
    %c0_7 = arith.constant 0 : index
    %c0_8 = arith.constant 0 : index
    %13 = vector.load %arg11[%c0_6, %c0_7, %c0_8] : memref<1x1x96xf32, #tpu.memory_space<vmem>>, vector<1x1x96xf32>
    %14 = vector.shape_cast %13 : vector<1x1x96xf32> to vector<1x96xf32>
    %c0_9 = arith.constant 0 : index
    %c0_10 = arith.constant 0 : index
    %c0_11 = arith.constant 0 : index
    %15 = vector.load %arg12[%c0_9, %c0_10, %c0_11] : memref<1x32x32xbf16, #tpu.memory_space<vmem>>, vector<1x32x32xbf16>
    %16 = vector.shape_cast %15 : vector<1x32x32xbf16> to vector<32x32xbf16>
    %c0_12 = arith.constant 0 : index
    %c0_13 = arith.constant 0 : index
    %c0_14 = arith.constant 0 : index
    %17 = vector.load %arg13[%c0_12, %c0_13, %c0_14] : memref<1x32x64xbf16, #tpu.memory_space<vmem>>, vector<1x32x64xbf16>
    %18 = vector.shape_cast %17 : vector<1x32x64xbf16> to vector<32x64xbf16>
    %c0_15 = arith.constant 0 : index
    %c0_16 = arith.constant 0 : index
    %c0_17 = arith.constant 0 : index
    %19 = vector.load %arg14[%c0_15, %c0_16, %c0_17] : memref<1x1x64xf32, #tpu.memory_space<vmem>>, vector<1x1x64xf32>
    %20 = vector.shape_cast %19 : vector<1x1x64xf32> to vector<1x64xf32>
    %c0_18 = arith.constant 0 : index
    %c0_19 = arith.constant 0 : index
    %c0_20 = arith.constant 0 : index
    %21 = vector.load %arg15[%c0_18, %c0_19, %c0_20] : memref<1x64x32xbf16, #tpu.memory_space<vmem>>, vector<1x64x32xbf16>
    %22 = vector.shape_cast %21 : vector<1x64x32xbf16> to vector<64x32xbf16>
    %c0_21 = arith.constant 0 : index
    %c0_22 = arith.constant 0 : index
    %c0_23 = arith.constant 0 : index
    %23 = vector.load %arg18[%c0_21, %c0_22, %c0_23] : memref<2x24x32xf32, #tpu.memory_space<vmem>>, vector<2x24x32xf32>
    %24 = vector.shape_cast %23 : vector<2x24x32xf32> to vector<48x32xf32>
    %cst = arith.constant dense<0.000000e+00> : vector<48xf32>
    %25 = vector.multi_reduction <add>, %24, %cst [1] : vector<48x32xf32> to vector<48xf32>
    %26 = vector.shape_cast %25 : vector<48xf32> to vector<48x1xf32>
    %cst_24 = arith.constant 3.200000e+01 : f32
    %27 = vector.broadcast %cst_24 : f32 to vector<48x1xf32>
    %28 = arith.divf %26, %27 : vector<48x1xf32>
    %29 = vector.broadcast %28 : vector<48x1xf32> to vector<48x32xf32>
    %30 = arith.subf %24, %29 : vector<48x32xf32>
    %31 = arith.mulf %30, %30 : vector<48x32xf32>
    %cst_25 = arith.constant dense<0.000000e+00> : vector<48xf32>
    %32 = vector.multi_reduction <add>, %31, %cst_25 [1] : vector<48x32xf32> to vector<48xf32>
    %33 = vector.shape_cast %32 : vector<48xf32> to vector<48x1xf32>
    %cst_26 = arith.constant 3.200000e+01 : f32
    %34 = vector.broadcast %cst_26 : f32 to vector<48x1xf32>
    %35 = arith.divf %33, %34 : vector<48x1xf32>
    %cst_27 = arith.constant 9.99999974E-6 : f32
    %36 = vector.broadcast %cst_27 : f32 to vector<48x1xf32>
    %37 = arith.addf %35, %36 : vector<48x1xf32>
    %38 = math.rsqrt %37 : vector<48x1xf32>
    %39 = vector.broadcast %38 : vector<48x1xf32> to vector<48x32xf32>
    %40 = arith.mulf %30, %39 : vector<48x32xf32>
    %41 = vector.broadcast %5 : vector<1x32xf32> to vector<48x32xf32>
    %42 = arith.mulf %40, %41 : vector<48x32xf32>
    %43 = vector.broadcast %6 : vector<1x32xf32> to vector<48x32xf32>
    %44 = arith.addf %42, %43 : vector<48x32xf32>
    %45 = arith.truncf %44 : vector<48x32xf32> to vector<48x32xbf16>
    %cst_28 = arith.constant dense<0.000000e+00> : vector<48x96xf32>
    %46 = tpu.matmul %45, %12, %cst_28 {dimension_numbers = #tpu.dot_dimension_numbers<[1], [0], [0], [1], [0, 0, 1, 1], [], []>} : vector<48x32xbf16>, vector<32x96xbf16>, vector<48x96xf32> -> vector<48x96xf32>
    %47 = vector.broadcast %14 : vector<1x96xf32> to vector<48x96xf32>
    %48 = arith.addf %46, %47 : vector<48x96xf32>
    %49 = arith.truncf %48 : vector<48x96xf32> to vector<48x96xbf16>
    %50 = vector.extract_strided_slice %49 {offsets = [0, 0], sizes = [48, 16], strides = [1, 1]} : vector<48x96xbf16> to vector<48x16xbf16>
    %51 = vector.shape_cast %50 : vector<48x16xbf16> to vector<2x24x16xbf16>
    %52 = vector.extract_strided_slice %49 {offsets = [0, 32], sizes = [48, 16], strides = [1, 1]} : vector<48x96xbf16> to vector<48x16xbf16>
    %53 = vector.shape_cast %52 : vector<48x16xbf16> to vector<2x24x16xbf16>
    %54 = vector.extract_strided_slice %49 {offsets = [0, 64], sizes = [48, 16], strides = [1, 1]} : vector<48x96xbf16> to vector<48x16xbf16>
    %55 = vector.shape_cast %54 : vector<48x16xbf16> to vector<2x24x16xbf16>
    "tpu.trace_start"() <{level = 10 : i32, message = "bqd,bkd->bqk"}> : () -> ()
    %cst_29 = arith.constant dense<0.000000e+00> : vector<2x24x24xf32>
    %56 = tpu.matmul %51, %53, %cst_29 {dimension_numbers = #tpu.dot_dimension_numbers<[2], [2], [1], [1], [0, 0, 0, 1, 1, 1], [0], [0]>} : vector<2x24x16xbf16>, vector<2x24x16xbf16>, vector<2x24x24xf32> -> vector<2x24x24xf32>
    "tpu.trace_stop"() : () -> ()
    %cst_30 = arith.constant dense<0xFF800000> : vector<2x24xf32>
    %57 = vector.multi_reduction <maximumf>, %56, %cst_30 [2] : vector<2x24x24xf32> to vector<2x24xf32>
    %58 = vector.shape_cast %57 : vector<2x24xf32> to vector<2x24x1xf32>
    %59 = vector.broadcast %58 : vector<2x24x1xf32> to vector<2x24x24xf32>
    %60 = arith.subf %56, %59 : vector<2x24x24xf32>
    %61 = math.exp %60 : vector<2x24x24xf32>
    %cst_31 = arith.constant dense<0.000000e+00> : vector<2x24xf32>
    %62 = vector.multi_reduction <add>, %61, %cst_31 [2] : vector<2x24x24xf32> to vector<2x24xf32>
    %63 = vector.shape_cast %62 : vector<2x24xf32> to vector<2x24x1xf32>
    %64 = tpu.reciprocal %63 {approx = true} : vector<2x24x1xf32> -> vector<2x24x1xf32>
    %65 = vector.broadcast %64 : vector<2x24x1xf32> to vector<2x24x24xf32>
    %66 = arith.mulf %61, %65 : vector<2x24x24xf32>
    %67 = arith.truncf %66 : vector<2x24x24xf32> to vector<2x24x24xbf16>
    "tpu.trace_start"() <{level = 10 : i32, message = "bqk,bkd->bqd"}> : () -> ()
    %cst_32 = arith.constant dense<0.000000e+00> : vector<2x24x16xf32>
    %68 = tpu.matmul %67, %55, %cst_32 {dimension_numbers = #tpu.dot_dimension_numbers<[2], [1], [1], [2], [0, 0, 0, 1, 1, 2], [0], [0]>} : vector<2x24x24xbf16>, vector<2x24x16xbf16>, vector<2x24x16xf32> -> vector<2x24x16xf32>
    "tpu.trace_stop"() : () -> ()
    %69 = vector.shape_cast %68 : vector<2x24x16xf32> to vector<48x16xf32>
    %70 = vector.extract_strided_slice %49 {offsets = [0, 16], sizes = [48, 16], strides = [1, 1]} : vector<48x96xbf16> to vector<48x16xbf16>
    %71 = vector.shape_cast %70 : vector<48x16xbf16> to vector<2x24x16xbf16>
    %72 = vector.extract_strided_slice %49 {offsets = [0, 48], sizes = [48, 16], strides = [1, 1]} : vector<48x96xbf16> to vector<48x16xbf16>
    %73 = vector.shape_cast %72 : vector<48x16xbf16> to vector<2x24x16xbf16>
    %74 = vector.extract_strided_slice %49 {offsets = [0, 80], sizes = [48, 16], strides = [1, 1]} : vector<48x96xbf16> to vector<48x16xbf16>
    %75 = vector.shape_cast %74 : vector<48x16xbf16> to vector<2x24x16xbf16>
    "tpu.trace_start"() <{level = 10 : i32, message = "bqd,bkd->bqk"}> : () -> ()
    %cst_33 = arith.constant dense<0.000000e+00> : vector<2x24x24xf32>
    %76 = tpu.matmul %71, %73, %cst_33 {dimension_numbers = #tpu.dot_dimension_numbers<[2], [2], [1], [1], [0, 0, 0, 1, 1, 1], [0], [0]>} : vector<2x24x16xbf16>, vector<2x24x16xbf16>, vector<2x24x24xf32> -> vector<2x24x24xf32>
    "tpu.trace_stop"() : () -> ()
    %cst_34 = arith.constant dense<0xFF800000> : vector<2x24xf32>
    %77 = vector.multi_reduction <maximumf>, %76, %cst_34 [2] : vector<2x24x24xf32> to vector<2x24xf32>
    %78 = vector.shape_cast %77 : vector<2x24xf32> to vector<2x24x1xf32>
    %79 = vector.broadcast %78 : vector<2x24x1xf32> to vector<2x24x24xf32>
    %80 = arith.subf %76, %79 : vector<2x24x24xf32>
    %81 = math.exp %80 : vector<2x24x24xf32>
    %cst_35 = arith.constant dense<0.000000e+00> : vector<2x24xf32>
    %82 = vector.multi_reduction <add>, %81, %cst_35 [2] : vector<2x24x24xf32> to vector<2x24xf32>
    %83 = vector.shape_cast %82 : vector<2x24xf32> to vector<2x24x1xf32>
    %84 = tpu.reciprocal %83 {approx = true} : vector<2x24x1xf32> -> vector<2x24x1xf32>
    %85 = vector.broadcast %84 : vector<2x24x1xf32> to vector<2x24x24xf32>
    %86 = arith.mulf %81, %85 : vector<2x24x24xf32>
    %87 = arith.truncf %86 : vector<2x24x24xf32> to vector<2x24x24xbf16>
    "tpu.trace_start"() <{level = 10 : i32, message = "bqk,bkd->bqd"}> : () -> ()
    %cst_36 = arith.constant dense<0.000000e+00> : vector<2x24x16xf32>
    %88 = tpu.matmul %87, %75, %cst_36 {dimension_numbers = #tpu.dot_dimension_numbers<[2], [1], [1], [2], [0, 0, 0, 1, 1, 2], [0], [0]>} : vector<2x24x24xbf16>, vector<2x24x16xbf16>, vector<2x24x16xf32> -> vector<2x24x16xf32>
    "tpu.trace_stop"() : () -> ()
    %89 = vector.shape_cast %88 : vector<2x24x16xf32> to vector<48x16xf32>
    %90 = tpu.concatenate %69, %89 in 1 : vector<48x16xf32>, vector<48x16xf32> -> vector<48x32xf32>
    %91 = arith.truncf %90 : vector<48x32xf32> to vector<48x32xbf16>
    %cst_37 = arith.constant dense<0.000000e+00> : vector<48x32xf32>
    %92 = tpu.matmul %91, %16, %cst_37 {dimension_numbers = #tpu.dot_dimension_numbers<[1], [0], [0], [1], [0, 0, 1, 1], [], []>} : vector<48x32xbf16>, vector<32x32xbf16>, vector<48x32xf32> -> vector<48x32xf32>
    %93 = arith.addf %24, %92 : vector<48x32xf32>
    %94 = vector.broadcast %9 : vector<1x32xf32> to vector<48x32xf32>
    %95 = arith.addf %93, %94 : vector<48x32xf32>
    %cst_38 = arith.constant dense<0.000000e+00> : vector<48xf32>
    %96 = vector.multi_reduction <add>, %95, %cst_38 [1] : vector<48x32xf32> to vector<48xf32>
    %97 = vector.shape_cast %96 : vector<48xf32> to vector<48x1xf32>
    %cst_39 = arith.constant 3.200000e+01 : f32
    %98 = vector.broadcast %cst_39 : f32 to vector<48x1xf32>
    %99 = arith.divf %97, %98 : vector<48x1xf32>
    %100 = vector.broadcast %99 : vector<48x1xf32> to vector<48x32xf32>
    %101 = arith.subf %95, %100 : vector<48x32xf32>
    %102 = arith.mulf %101, %101 : vector<48x32xf32>
    %cst_40 = arith.constant dense<0.000000e+00> : vector<48xf32>
    %103 = vector.multi_reduction <add>, %102, %cst_40 [1] : vector<48x32xf32> to vector<48xf32>
    %104 = vector.shape_cast %103 : vector<48xf32> to vector<48x1xf32>
    %cst_41 = arith.constant 3.200000e+01 : f32
    %105 = vector.broadcast %cst_41 : f32 to vector<48x1xf32>
    %106 = arith.divf %104, %105 : vector<48x1xf32>
    %cst_42 = arith.constant 9.99999974E-6 : f32
    %107 = vector.broadcast %cst_42 : f32 to vector<48x1xf32>
    %108 = arith.addf %106, %107 : vector<48x1xf32>
    %109 = math.rsqrt %108 : vector<48x1xf32>
    %110 = vector.broadcast %109 : vector<48x1xf32> to vector<48x32xf32>
    %111 = arith.mulf %101, %110 : vector<48x32xf32>
    %112 = vector.broadcast %7 : vector<1x32xf32> to vector<48x32xf32>
    %113 = arith.mulf %111, %112 : vector<48x32xf32>
    %114 = vector.broadcast %8 : vector<1x32xf32> to vector<48x32xf32>
    %115 = arith.addf %113, %114 : vector<48x32xf32>
    %116 = arith.truncf %115 : vector<48x32xf32> to vector<48x32xbf16>
    %cst_43 = arith.constant dense<0.000000e+00> : vector<48x64xf32>
    %117 = tpu.matmul %116, %18, %cst_43 {dimension_numbers = #tpu.dot_dimension_numbers<[1], [0], [0], [1], [0, 0, 1, 1], [], []>} : vector<48x32xbf16>, vector<32x64xbf16>, vector<48x64xf32> -> vector<48x64xf32>
    %118 = vector.broadcast %20 : vector<1x64xf32> to vector<48x64xf32>
    %119 = arith.addf %117, %118 : vector<48x64xf32>
    %cst_44 = arith.constant 5.000000e-01 : f32
    %120 = vector.broadcast %cst_44 : f32 to vector<48x64xf32>
    %121 = arith.mulf %120, %119 : vector<48x64xf32>
    %122 = arith.mulf %119, %119 : vector<48x64xf32>
    %123 = arith.mulf %122, %119 : vector<48x64xf32>
    %cst_45 = arith.constant 4.471500e-02 : f32
    %124 = vector.broadcast %cst_45 : f32 to vector<48x64xf32>
    %125 = arith.mulf %124, %123 : vector<48x64xf32>
    %126 = arith.addf %119, %125 : vector<48x64xf32>
    %cst_46 = arith.constant 0.797884583 : f32
    %127 = vector.broadcast %cst_46 : f32 to vector<48x64xf32>
    %128 = arith.mulf %127, %126 : vector<48x64xf32>
    %129 = math.tanh %128 : vector<48x64xf32>
    %cst_47 = arith.constant 1.000000e+00 : f32
    %130 = vector.broadcast %cst_47 : f32 to vector<48x64xf32>
    %131 = arith.addf %130, %129 : vector<48x64xf32>
    %132 = arith.mulf %121, %131 : vector<48x64xf32>
    %133 = arith.truncf %132 : vector<48x64xf32> to vector<48x64xbf16>
    %cst_48 = arith.constant dense<0.000000e+00> : vector<48x32xf32>
    %134 = tpu.matmul %133, %22, %cst_48 {dimension_numbers = #tpu.dot_dimension_numbers<[1], [0], [0], [1], [0, 0, 1, 1], [], []>} : vector<48x64xbf16>, vector<64x32xbf16>, vector<48x32xf32> -> vector<48x32xf32>
    %135 = arith.addf %95, %134 : vector<48x32xf32>
    %136 = vector.broadcast %10 : vector<1x32xf32> to vector<48x32xf32>
    %137 = arith.addf %135, %136 : vector<48x32xf32>
    %138 = vector.shape_cast %137 : vector<48x32xf32> to vector<2x24x32xf32>
    %c0_49 = arith.constant 0 : index
    %c0_50 = arith.constant 0 : index
    %c0_51 = arith.constant 0 : index
    %139 = vector.load %arg18[%c0_49, %c0_50, %c0_51] : memref<2x24x32xf32, #tpu.memory_space<vmem>>, vector<2x24x32xf32>
    tpu.vector_store %arg18[%c0_49, %c0_50, %c0_51], %138 {strides = array<i32>} : memref<2x24x32xf32, #tpu.memory_space<vmem>>, vector<2x24x32xf32>,
    %c1_i32 = arith.constant 1 : i32
    %140 = arith.cmpi eq, %arg1, %c1_i32 : i32
    %141 = arith.extui %140 : i1 to i32
    %c0_i32_52 = arith.constant 0 : i32
    %142 = arith.cmpi ne, %141, %c0_i32_52 : i32
    scf.if %142 {
      %c1 = arith.constant 1 : index
      %c0_53 = arith.constant 0 : index
      %143 = vector.load %arg5[%c1, %c0_53] : memref<8x32xf32, #tpu.memory_space<vmem>>, vector<1x32xf32>
      %c2 = arith.constant 2 : index
      %c0_54 = arith.constant 0 : index
      %144 = vector.load %arg5[%c2, %c0_54] : memref<8x32xf32, #tpu.memory_space<vmem>>, vector<1x32xf32>
      %cst_55 = arith.constant dense<0.000000e+00> : vector<48xf32>
      %145 = vector.multi_reduction <add>, %137, %cst_55 [1] : vector<48x32xf32> to vector<48xf32>
      %146 = vector.shape_cast %145 : vector<48xf32> to vector<48x1xf32>
      %cst_56 = arith.constant 3.200000e+01 : f32
      %147 = vector.broadcast %cst_56 : f32 to vector<48x1xf32>
      %148 = arith.divf %146, %147 : vector<48x1xf32>
      %149 = vector.broadcast %148 : vector<48x1xf32> to vector<48x32xf32>
      %150 = arith.subf %137, %149 : vector<48x32xf32>
      %151 = arith.mulf %150, %150 : vector<48x32xf32>
      %cst_57 = arith.constant dense<0.000000e+00> : vector<48xf32>
      %152 = vector.multi_reduction <add>, %151, %cst_57 [1] : vector<48x32xf32> to vector<48xf32>
      %153 = vector.shape_cast %152 : vector<48xf32> to vector<48x1xf32>
      %cst_58 = arith.constant 3.200000e+01 : f32
      %154 = vector.broadcast %cst_58 : f32 to vector<48x1xf32>
      %155 = arith.divf %153, %154 : vector<48x1xf32>
      %cst_59 = arith.constant 9.99999974E-6 : f32
      %156 = vector.broadcast %cst_59 : f32 to vector<48x1xf32>
      %157 = arith.addf %155, %156 : vector<48x1xf32>
      %158 = math.rsqrt %157 : vector<48x1xf32>
      %159 = vector.broadcast %158 : vector<48x1xf32> to vector<48x32xf32>
      %160 = arith.mulf %150, %159 : vector<48x32xf32>
      %161 = vector.broadcast %143 : vector<1x32xf32> to vector<48x32xf32>
      %162 = arith.mulf %160, %161 : vector<48x32xf32>
      %163 = vector.broadcast %144 : vector<1x32xf32> to vector<48x32xf32>
      %164 = arith.addf %162, %163 : vector<48x32xf32>
      %165 = vector.shape_cast %164 : vector<48x32xf32> to vector<2x24x32xf32>
      %166 = vector.extract_strided_slice %165 {offsets = [0, 0, 0], sizes = [2, 16, 32], strides = [1, 1, 1]} : vector<2x24x32xf32> to vector<2x16x32xf32>
      %167 = vector.extract_strided_slice %165 {offsets = [0, 16, 0], sizes = [2, 8, 32], strides = [1, 1, 1]} : vector<2x24x32xf32> to vector<2x8x32xf32>
      %168 = arith.truncf %166 : vector<2x16x32xf32> to vector<2x16x32xbf16>
      %c0_60 = arith.constant 0 : index
      %c0_61 = arith.constant 0 : index
      %c0_62 = arith.constant 0 : index
      %169 = vector.load %arg17[%c0_60, %c0_61, %c0_62] : memref<2x16x128xbf16, #tpu.memory_space<vmem>>, vector<2x16x32xbf16>
      tpu.vector_store %arg17[%c0_60, %c0_61, %c0_62], %168 {strides = array<i32>} : memref<2x16x128xbf16, #tpu.memory_space<vmem>>, vector<2x16x32xbf16>,
      %170 = vector.shape_cast %166 : vector<2x16x32xf32> to vector<32x32xf32>
      %171 = arith.truncf %170 : vector<32x32xf32> to vector<32x32xbf16>
      %c0_63 = arith.constant 0 : index
      %c0_64 = arith.constant 0 : index
      %172 = vector.load %arg7[%c0_63, %c0_64] : memref<32x32xbf16, #tpu.memory_space<vmem>>, vector<32x32xbf16>
      %cst_65 = arith.constant dense<0.000000e+00> : vector<32x32xf32>
      %173 = tpu.matmul %171, %172, %cst_65 {dimension_numbers = #tpu.dot_dimension_numbers<[1], [0], [0], [1], [0, 0, 1, 1], [], []>} : vector<32x32xbf16>, vector<32x32xbf16>, vector<32x32xf32> -> vector<32x32xf32>
      %174 = vector.shape_cast %173 : vector<32x32xf32> to vector<2x16x32xf32>
      %175 = vector.shape_cast %167 : vector<2x8x32xf32> to vector<16x32xf32>
      %176 = arith.truncf %175 : vector<16x32xf32> to vector<16x32xbf16>
      %c0_66 = arith.constant 0 : index
      %c0_67 = arith.constant 0 : index
      %177 = vector.load %arg8[%c0_66, %c0_67] : memref<32x32xbf16, #tpu.memory_space<vmem>>, vector<32x32xbf16>
      %cst_68 = arith.constant dense<0.000000e+00> : vector<16x32xf32>
      %178 = tpu.matmul %176, %177, %cst_68 {dimension_numbers = #tpu.dot_dimension_numbers<[1], [0], [0], [1], [0, 0, 1, 1], [], []>} : vector<16x32xbf16>, vector<32x32xbf16>, vector<16x32xf32> -> vector<16x32xf32>
      %179 = vector.shape_cast %178 : vector<16x32xf32> to vector<2x8x32xf32>
      %180 = arith.mulf %174, %174 : vector<2x16x32xf32>
      %cst_69 = arith.constant dense<0.000000e+00> : vector<2x16xf32>
      %181 = vector.multi_reduction <add>, %180, %cst_69 [2] : vector<2x16x32xf32> to vector<2x16xf32>
      %182 = vector.shape_cast %181 : vector<2x16xf32> to vector<2x16x1xf32>
      %183 = math.rsqrt %182 : vector<2x16x1xf32>
      %184 = vector.broadcast %183 : vector<2x16x1xf32> to vector<2x16x32xf32>
      %185 = arith.mulf %174, %184 : vector<2x16x32xf32>
      %186 = arith.mulf %179, %179 : vector<2x8x32xf32>
      %cst_70 = arith.constant dense<0.000000e+00> : vector<2x8xf32>
      %187 = vector.multi_reduction <add>, %186, %cst_70 [2] : vector<2x8x32xf32> to vector<2x8xf32>
      %188 = vector.shape_cast %187 : vector<2x8xf32> to vector<2x8x1xf32>
      %189 = math.rsqrt %188 : vector<2x8x1xf32>
      %190 = vector.broadcast %189 : vector<2x8x1xf32> to vector<2x8x32xf32>
      %191 = arith.mulf %179, %190 : vector<2x8x32xf32>
      "tpu.trace_start"() <{level = 10 : i32, message = "bnd,bkd->bnk"}> : () -> ()
      %cst_71 = arith.constant dense<0.000000e+00> : vector<2x16x8xf32>
      %192 = tpu.matmul %185, %191, %cst_71 {dimension_numbers = #tpu.dot_dimension_numbers<[2], [2], [1], [1], [0, 0, 0, 1, 1, 1], [0], [0]>} : vector<2x16x32xf32>, vector<2x8x32xf32>, vector<2x16x8xf32> -> vector<2x16x8xf32>
      "tpu.trace_stop"() : () -> ()
      %193 = vector.shape_cast %192 : vector<2x16x8xf32> to vector<32x8xf32>
      %c0_72 = arith.constant 0 : index
      %c0_73 = arith.constant 0 : index
      %194 = vector.load %arg6[%c0_72, %c0_73] : memref<8x8xf32, #tpu.memory_space<vmem>>, vector<1x8xf32>
      %c1_74 = arith.constant 1 : index
      %c0_75 = arith.constant 0 : index
      %195 = vector.load %arg6[%c1_74, %c0_75] : memref<8x8xf32, #tpu.memory_space<vmem>>, vector<1x8xf32>
      %cst_76 = arith.constant dense<0.000000e+00> : vector<32xf32>
      %196 = vector.multi_reduction <add>, %193, %cst_76 [1] : vector<32x8xf32> to vector<32xf32>
      %197 = vector.shape_cast %196 : vector<32xf32> to vector<32x1xf32>
      %cst_77 = arith.constant 8.000000e+00 : f32
      %198 = vector.broadcast %cst_77 : f32 to vector<32x1xf32>
      %199 = arith.divf %197, %198 : vector<32x1xf32>
      %200 = vector.broadcast %199 : vector<32x1xf32> to vector<32x8xf32>
      %201 = arith.subf %193, %200 : vector<32x8xf32>
      %202 = arith.mulf %201, %201 : vector<32x8xf32>
      %cst_78 = arith.constant dense<0.000000e+00> : vector<32xf32>
      %203 = vector.multi_reduction <add>, %202, %cst_78 [1] : vector<32x8xf32> to vector<32xf32>
      %204 = vector.shape_cast %203 : vector<32xf32> to vector<32x1xf32>
      %cst_79 = arith.constant 8.000000e+00 : f32
      %205 = vector.broadcast %cst_79 : f32 to vector<32x1xf32>
      %206 = arith.divf %204, %205 : vector<32x1xf32>
      %cst_80 = arith.constant 9.99999974E-6 : f32
      %207 = vector.broadcast %cst_80 : f32 to vector<32x1xf32>
      %208 = arith.addf %206, %207 : vector<32x1xf32>
      %209 = math.rsqrt %208 : vector<32x1xf32>
      %210 = vector.broadcast %209 : vector<32x1xf32> to vector<32x8xf32>
      %211 = arith.mulf %201, %210 : vector<32x8xf32>
      %212 = vector.broadcast %194 : vector<1x8xf32> to vector<32x8xf32>
      %213 = arith.mulf %211, %212 : vector<32x8xf32>
      %214 = vector.broadcast %195 : vector<1x8xf32> to vector<32x8xf32>
      %215 = arith.addf %213, %214 : vector<32x8xf32>
      %216 = vector.shape_cast %215 : vector<32x8xf32> to vector<2x16x8xf32>
      %c0_81 = arith.constant 0 : index
      %c0_82 = arith.constant 0 : index
      %c0_83 = arith.constant 0 : index
      %217 = vector.load %arg16[%c0_81, %c0_82, %c0_83] : memref<2x16x128xf32, #tpu.memory_space<vmem>>, vector<2x16x8xf32>
      tpu.vector_store %arg16[%c0_81, %c0_82, %c0_83], %216 {strides = array<i32>} : memref<2x16x128xf32, #tpu.memory_space<vmem>>, vector<2x16x8xf32>,
    } else {
    }
    return
  }
  func.func @transform_0(%arg0: i32, %arg1: i32) -> (i32, i32, i32) {
    %c0_i32 = arith.constant 0 : i32
    %c0_i32_0 = arith.constant 0 : i32
    %c0_i32_1 = arith.constant 0 : i32
    return %arg0, %c0_i32, %c0_i32_0 : i32, i32, i32
  }
  func.func @transform_1(%arg0: i32, %arg1: i32) -> (i32, i32, i32) {
    %c0_i32 = arith.constant 0 : i32
    %c0_i32_0 = arith.constant 0 : i32
    %c0_i32_1 = arith.constant 0 : i32
    %c0_i32_2 = arith.constant 0 : i32
    return %c0_i32, %c0_i32_0, %c0_i32_1 : i32, i32, i32
  }
  func.func @transform_2(%arg0: i32, %arg1: i32) -> (i32, i32) {
    %c0_i32 = arith.constant 0 : i32
    %c0_i32_0 = arith.constant 0 : i32
    %c0_i32_1 = arith.constant 0 : i32
    return %c0_i32, %c0_i32_0 : i32, i32
  }
  func.func @transform_3(%arg0: i32, %arg1: i32) -> (i32, i32) {
    %c0_i32 = arith.constant 0 : i32
    %c0_i32_0 = arith.constant 0 : i32
    %c0_i32_1 = arith.constant 0 : i32
    return %c0_i32, %c0_i32_0 : i32, i32
  }
  func.func @transform_4(%arg0: i32, %arg1: i32) -> (i32, i32) {
    %c0_i32 = arith.constant 0 : i32
    %c0_i32_0 = arith.constant 0 : i32
    %c0_i32_1 = arith.constant 0 : i32
    return %c0_i32, %c0_i32_0 : i32, i32
  }
  func.func @transform_5(%arg0: i32, %arg1: i32) -> (i32, i32) {
    %c0_i32 = arith.constant 0 : i32
    %c0_i32_0 = arith.constant 0 : i32
    %c0_i32_1 = arith.constant 0 : i32
    return %c0_i32, %c0_i32_0 : i32, i32
  }
  func.func @transform_6(%arg0: i32, %arg1: i32) -> (i32, i32) {
    %c0_i32 = arith.constant 0 : i32
    %c0_i32_0 = arith.constant 0 : i32
    %c0_i32_1 = arith.constant 0 : i32
    return %c0_i32, %c0_i32_0 : i32, i32
  }
  func.func @transform_7(%arg0: i32, %arg1: i32) -> (i32, i32, i32) {
    %c2_i32 = arith.constant 2 : i32
    %c0_i32 = arith.constant 0 : i32
    %0 = arith.cmpi eq, %c2_i32, %c0_i32 : i32
    %c1_i32 = arith.constant 1 : i32
    %1 = arith.select %0, %c1_i32, %c2_i32 : i32
    %2 = arith.remsi %arg1, %1 : i32
    %c0_i32_0 = arith.constant 0 : i32
    %3 = arith.cmpi ne, %2, %c0_i32_0 : i32
    %c0_i32_1 = arith.constant 0 : i32
    %4 = arith.cmpi slt, %2, %c0_i32_1 : i32
    %c0_i32_2 = arith.constant 0 : i32
    %5 = arith.cmpi slt, %1, %c0_i32_2 : i32
    %6 = arith.xori %4, %5 : i1
    %7 = arith.andi %6, %3 : i1
    %8 = arith.addi %2, %1 : i32
    %9 = arith.select %7, %8, %2 : i32
    %c0_i32_3 = arith.constant 0 : i32
    %c0_i32_4 = arith.constant 0 : i32
    %c0_i32_5 = arith.constant 0 : i32
    return %9, %c0_i32_3, %c0_i32_4 : i32, i32, i32
  }
  func.func @transform_8(%arg0: i32, %arg1: i32) -> (i32, i32, i32) {
    %c2_i32 = arith.constant 2 : i32
    %c0_i32 = arith.constant 0 : i32
    %0 = arith.cmpi eq, %c2_i32, %c0_i32 : i32
    %c1_i32 = arith.constant 1 : i32
    %1 = arith.select %0, %c1_i32, %c2_i32 : i32
    %2 = arith.remsi %arg1, %1 : i32
    %c0_i32_0 = arith.constant 0 : i32
    %3 = arith.cmpi ne, %2, %c0_i32_0 : i32
    %c0_i32_1 = arith.constant 0 : i32
    %4 = arith.cmpi slt, %2, %c0_i32_1 : i32
    %c0_i32_2 = arith.constant 0 : i32
    %5 = arith.cmpi slt, %1, %c0_i32_2 : i32
    %6 = arith.xori %4, %5 : i1
    %7 = arith.andi %6, %3 : i1
    %8 = arith.addi %2, %1 : i32
    %9 = arith.select %7, %8, %2 : i32
    %c0_i32_3 = arith.constant 0 : i32
    %c0_i32_4 = arith.constant 0 : i32
    %c0_i32_5 = arith.constant 0 : i32
    return %9, %c0_i32_3, %c0_i32_4 : i32, i32, i32
  }
  func.func @transform_9(%arg0: i32, %arg1: i32) -> (i32, i32, i32) {
    %c2_i32 = arith.constant 2 : i32
    %c0_i32 = arith.constant 0 : i32
    %0 = arith.cmpi eq, %c2_i32, %c0_i32 : i32
    %c1_i32 = arith.constant 1 : i32
    %1 = arith.select %0, %c1_i32, %c2_i32 : i32
    %2 = arith.remsi %arg1, %1 : i32
    %c0_i32_0 = arith.constant 0 : i32
    %3 = arith.cmpi ne, %2, %c0_i32_0 : i32
    %c0_i32_1 = arith.constant 0 : i32
    %4 = arith.cmpi slt, %2, %c0_i32_1 : i32
    %c0_i32_2 = arith.constant 0 : i32
    %5 = arith.cmpi slt, %1, %c0_i32_2 : i32
    %6 = arith.xori %4, %5 : i1
    %7 = arith.andi %6, %3 : i1
    %8 = arith.addi %2, %1 : i32
    %9 = arith.select %7, %8, %2 : i32
    %c0_i32_3 = arith.constant 0 : i32
    %c0_i32_4 = arith.constant 0 : i32
    %c0_i32_5 = arith.constant 0 : i32
    return %9, %c0_i32_3, %c0_i32_4 : i32, i32, i32
  }
  func.func @transform_10(%arg0: i32, %arg1: i32) -> (i32, i32, i32) {
    %c2_i32 = arith.constant 2 : i32
    %c0_i32 = arith.constant 0 : i32
    %0 = arith.cmpi eq, %c2_i32, %c0_i32 : i32
    %c1_i32 = arith.constant 1 : i32
    %1 = arith.select %0, %c1_i32, %c2_i32 : i32
    %2 = arith.remsi %arg1, %1 : i32
    %c0_i32_0 = arith.constant 0 : i32
    %3 = arith.cmpi ne, %2, %c0_i32_0 : i32
    %c0_i32_1 = arith.constant 0 : i32
    %4 = arith.cmpi slt, %2, %c0_i32_1 : i32
    %c0_i32_2 = arith.constant 0 : i32
    %5 = arith.cmpi slt, %1, %c0_i32_2 : i32
    %6 = arith.xori %4, %5 : i1
    %7 = arith.andi %6, %3 : i1
    %8 = arith.addi %2, %1 : i32
    %9 = arith.select %7, %8, %2 : i32
    %c0_i32_3 = arith.constant 0 : i32
    %c0_i32_4 = arith.constant 0 : i32
    %c0_i32_5 = arith.constant 0 : i32
    return %9, %c0_i32_3, %c0_i32_4 : i32, i32, i32
  }
  func.func @transform_11(%arg0: i32, %arg1: i32) -> (i32, i32, i32) {
    %c2_i32 = arith.constant 2 : i32
    %c0_i32 = arith.constant 0 : i32
    %0 = arith.cmpi eq, %c2_i32, %c0_i32 : i32
    %c1_i32 = arith.constant 1 : i32
    %1 = arith.select %0, %c1_i32, %c2_i32 : i32
    %2 = arith.remsi %arg1, %1 : i32
    %c0_i32_0 = arith.constant 0 : i32
    %3 = arith.cmpi ne, %2, %c0_i32_0 : i32
    %c0_i32_1 = arith.constant 0 : i32
    %4 = arith.cmpi slt, %2, %c0_i32_1 : i32
    %c0_i32_2 = arith.constant 0 : i32
    %5 = arith.cmpi slt, %1, %c0_i32_2 : i32
    %6 = arith.xori %4, %5 : i1
    %7 = arith.andi %6, %3 : i1
    %8 = arith.addi %2, %1 : i32
    %9 = arith.select %7, %8, %2 : i32
    %c0_i32_3 = arith.constant 0 : i32
    %c0_i32_4 = arith.constant 0 : i32
    %c0_i32_5 = arith.constant 0 : i32
    return %9, %c0_i32_3, %c0_i32_4 : i32, i32, i32
  }
  func.func @transform_12(%arg0: i32, %arg1: i32) -> (i32, i32, i32) {
    %c2_i32 = arith.constant 2 : i32
    %c0_i32 = arith.constant 0 : i32
    %0 = arith.cmpi eq, %c2_i32, %c0_i32 : i32
    %c1_i32 = arith.constant 1 : i32
    %1 = arith.select %0, %c1_i32, %c2_i32 : i32
    %2 = arith.remsi %arg1, %1 : i32
    %c0_i32_0 = arith.constant 0 : i32
    %3 = arith.cmpi ne, %2, %c0_i32_0 : i32
    %c0_i32_1 = arith.constant 0 : i32
    %4 = arith.cmpi slt, %2, %c0_i32_1 : i32
    %c0_i32_2 = arith.constant 0 : i32
    %5 = arith.cmpi slt, %1, %c0_i32_2 : i32
    %6 = arith.xori %4, %5 : i1
    %7 = arith.andi %6, %3 : i1
    %8 = arith.addi %2, %1 : i32
    %9 = arith.select %7, %8, %2 : i32
    %c0_i32_3 = arith.constant 0 : i32
    %c0_i32_4 = arith.constant 0 : i32
    %c0_i32_5 = arith.constant 0 : i32
    return %9, %c0_i32_3, %c0_i32_4 : i32, i32, i32
  }
  func.func @transform_13(%arg0: i32, %arg1: i32) -> (i32, i32, i32) {
    %c2_i32 = arith.constant 2 : i32
    %c0_i32 = arith.constant 0 : i32
    %0 = arith.cmpi eq, %c2_i32, %c0_i32 : i32
    %c1_i32 = arith.constant 1 : i32
    %1 = arith.select %0, %c1_i32, %c2_i32 : i32
    %2 = arith.remsi %arg1, %1 : i32
    %c0_i32_0 = arith.constant 0 : i32
    %3 = arith.cmpi ne, %2, %c0_i32_0 : i32
    %c0_i32_1 = arith.constant 0 : i32
    %4 = arith.cmpi slt, %2, %c0_i32_1 : i32
    %c0_i32_2 = arith.constant 0 : i32
    %5 = arith.cmpi slt, %1, %c0_i32_2 : i32
    %6 = arith.xori %4, %5 : i1
    %7 = arith.andi %6, %3 : i1
    %8 = arith.addi %2, %1 : i32
    %9 = arith.select %7, %8, %2 : i32
    %c0_i32_3 = arith.constant 0 : i32
    %c0_i32_4 = arith.constant 0 : i32
    %c0_i32_5 = arith.constant 0 : i32
    return %9, %c0_i32_3, %c0_i32_4 : i32, i32, i32
  }
  func.func @transform_14(%arg0: i32, %arg1: i32) -> (i32, i32, i32) {
    %c0_i32 = arith.constant 0 : i32
    %c0_i32_0 = arith.constant 0 : i32
    %c0_i32_1 = arith.constant 0 : i32
    return %arg0, %c0_i32, %c0_i32_0 : i32, i32, i32
  }
  func.func @transform_15(%arg0: i32, %arg1: i32) -> (i32, i32, i32) {
    %c0_i32 = arith.constant 0 : i32
    %c0_i32_0 = arith.constant 0 : i32
    %c0_i32_1 = arith.constant 0 : i32
    return %arg0, %c0_i32, %c0_i32_0 : i32, i32, i32
  }
}

</mosaic_0001>

<llo_original>
// kernel: tpu_custom_call.1
$region0: #{tpu_custom_call.1}
  #allocation0 [shape = 'u32[]', space=smem, size = 0x4, offset = 0x4, fixed_abs, tag = 'smem constant byte address 0x4 - core index']
  #allocation1 [shape = 'u32[144,128]{1,0:T(1,128)}', space=vmem, size = 0x12000, scoped, tag = 'internal scratch']
  #allocation2 [shape = 'f32[2,24,32]{2,1,0:T(8,128)}', space=vmem, size = 0x6000, scoped, tag = 'scratch operand']
  %s0 = inlined_call_operand.vmem [shape: f32[2,16,32], index: 0, kind: input, shape index: {}]
  %s1 = inlined_call_operand.hbm [shape: f32[1,8,32], index: 1, kind: input, shape index: {}]
  %s2 = inlined_call_operand.hbm [shape: bf16[32,32], index: 2, kind: input, shape index: {}]
  %s3 = inlined_call_operand.hbm [shape: f32[8,32], index: 3, kind: input, shape index: {}]
  %s4 = inlined_call_operand.hbm [shape: f32[8,8], index: 4, kind: input, shape index: {}]
  %s5 = inlined_call_operand.hbm [shape: bf16[32,32], index: 5, kind: input, shape index: {}]
  %s6 = inlined_call_operand.hbm [shape: bf16[32,32], index: 6, kind: input, shape index: {}]
  %s7 = inlined_call_operand.hbm [shape: f32[2,8,32], index: 7, kind: input, shape index: {}]
  %s8 = inlined_call_operand.vmem [shape: bf16[2,32,96], index: 8, kind: input, shape index: {}]
  %s9 = inlined_call_operand.vmem [shape: f32[2,1,96], index: 9, kind: input, shape index: {}]
  %s10 = inlined_call_operand.vmem [shape: bf16[2,32,32], index: 10, kind: input, shape index: {}]
  %s11 = inlined_call_operand.hbm [shape: bf16[2,32,64], index: 11, kind: input, shape index: {}]
  %s12 = inlined_call_operand.vmem [shape: f32[2,1,64], index: 12, kind: input, shape index: {}]
  %s13 = inlined_call_operand.vmem [shape: bf16[2,64,32], index: 13, kind: input, shape index: {}]
  %s14 = inlined_call_operand.hbm [shape: f32[2,16,128], index: 14, kind: output, shape index: {0}]
  %s15 = inlined_call_operand.hbm [shape: bf16[2,16,128], index: 15, kind: output, shape index: {1}]
  %16 = xla_tuple %s14, %s15
  %s17 = sld [smem:[#allocation0]]
  $region137: #{tpu_custom_call.1} parent=0
    _
  %s19 = ssub.s32 1, %s17
  %s20 = scalar_select 0, %s19, %s17
  $region1: #{tpu_custom_call.1} parent=0
    #allocation3 [shape = 'u8[4096]{0}', space=vmem, size = 0x1000, scoped, tag = 'input window, operand 1, single buffered']
    #allocation4 [shape = 's32[2]{0}', space=sflag, size = 0x8, scoped, tag = 'scoped memory for tpu_custom_call.1']
    #allocation5 [shape = 's32[2]{0}', space=sflag, size = 0x8, scoped, tag = 'scoped memory for tpu_custom_call.1']
    #allocation6 [shape = 'u8[8192]{0}', space=vmem, size = 0x2000, scoped, tag = 'input window, operand 2, single buffered']
    #allocation7 [shape = 's32[1]{0}', space=sflag, size = 0x4, scoped, tag = 'scoped memory for tpu_custom_call.1']
    #allocation8 [shape = 'u8[4096]{0}', space=vmem, size = 0x1000, scoped, tag = 'input window, operand 3, single buffered']
    #allocation9 [shape = 'u8[4096]{0}', space=vmem, size = 0x1000, scoped, tag = 'input window, operand 4, single buffered']
    #allocation10 [shape = 's32[1]{0}', space=sflag, size = 0x4, scoped, tag = 'scoped memory for tpu_custom_call.1']
    #allocation11 [shape = 'u8[8192]{0}', space=vmem, size = 0x2000, scoped, tag = 'input window, operand 5, single buffered']
    #allocation12 [shape = 'u8[8192]{0}', space=vmem, size = 0x2000, scoped, tag = 'input window, operand 6, single buffered']
    #allocation13 [shape = 's32[1]{0}', space=sflag, size = 0x4, scoped, tag = 'scoped memory for tpu_custom_call.1']
    #allocation14 [shape = 'u8[8192]{0}', space=vmem, size = 0x2000, scoped, tag = 'input window, operand 7']
    #allocation15 [shape = 'u8[16384]{0}', space=vmem, size = 0x4000, scoped, tag = 'input window, operand 11']
    #allocation16 [shape = 'u8[16384]{0}', space=vmem, size = 0x4000, scoped, tag = 'output window, operand 0, single buffered']
    #allocation17 [shape = 'u8[8192]{0}', space=vmem, size = 0x2000, scoped, tag = 'output window, operand 1, single buffered']
    #allocation18 [shape = 's32[1]{0}', space=sflag, size = 0x4, scoped, tag = 'scoped memory for tpu_custom_call.1']
    %21 = vsyncpa [#allocation4], 0
    %22 = vsyncpa [#allocation7], 0
    %23 = vsyncpa [#allocation10], 0
    %24 = vsyncpa [#allocation13], 0
    %25 = vsyncpa [#allocation5], 0
    %26 = vsyncpa [#allocation18], 0
    loop: start=0, step=1, limit=4
    $region2: #{tpu_custom_call.1} parent=1 // loop_pre_header
      _
    $region3: #{tpu_custom_call.1} parent=1 // loop_header
      %s28 = sphi 0, %s32
      %p29 = scmp.ge.s32.totalorder %s28, 4
      %s35 = sphi 0, %s47
      %s36 = sphi 0, %s43
      %s37 = sphi 0, %s35
      %s38 = sphi 0, %s36
      %s39 = sphi 0, %s37
      %s40 = sphi 0, %s38
      %s50 = sphi 0, %s52
      %s53 = sphi 0, %s50
      %s54 = sphi 0, %s53
      %s70 = sphi 0, %s54
      %s74 = sphi 0, %s74
      %s76 = sphi 0, %s74
      %s77 = sphi 0, %s76
      %s91 = sphi 0, %s77
      %s95 = sphi 0, %s95
      %s97 = sphi 0, %s95
      %s98 = sphi 0, %s97
      %s112 = sphi 0, %s98
      %s116 = sphi 0, %s116
      %s118 = sphi 0, %s116
      %s119 = sphi 0, %s118
      %s133 = sphi 0, %s119
      %s137 = sphi 0, %s137
      %s139 = sphi 0, %s137
      %s140 = sphi 0, %s139
      %s154 = sphi 0, %s140
      %s158 = sphi 0, %s158
      %s160 = sphi 0, %s158
      %s161 = sphi 0, %s160
      %s175 = sphi 0, %s161
      %s179 = sphi 0, %s179
      %s181 = sphi 0, %s179
      %s182 = sphi 0, %s181
      %s196 = sphi 0, %s182
      %s226 = sphi 0, %s228
      %s229 = sphi 0, %s226
      %s230 = sphi 0, %s229
      %s246 = sphi 0, %s230
      %s276 = sphi 0, %s278
      %s279 = sphi 0, %s276
      %s280 = sphi 0, %s279
      %s296 = sphi 0, %s280
      %s326 = sphi 0, %s328
      %s329 = sphi 0, %s326
      %s330 = sphi 0, %s329
      %s346 = sphi 0, %s330
      %s376 = sphi 0, %s378
      %s379 = sphi 0, %s376
      %s380 = sphi 0, %s379
      %s396 = sphi 0, %s380
      %s426 = sphi 0, %s428
      %s429 = sphi 0, %s426
      %s430 = sphi 0, %s429
      %s446 = sphi 0, %s430
      %s476 = sphi 0, %s478
      %s479 = sphi 0, %s476
      %s480 = sphi 0, %s479
      %s496 = sphi 0, %s480
      %s526 = sphi 0, %s528
      %s529 = sphi 0, %s526
      %s530 = sphi 0, %s529
      %s546 = sphi 0, %s530
      %s552 = sphi 0, %s554
      %s555 = sphi 0, %s552
      %s556 = sphi 0, %s555
      %s572 = sphi 0, %s556
      %s578 = sphi 0, %s580
      %s581 = sphi 0, %s578
      %s582 = sphi 0, %s581
      %s598 = sphi 0, %s582
    $region4: #{tpu_custom_call.1} parent=1 // loop_header_branch
      %31 = sbr.rel (%p29) target = $region8
    $region5: #{tpu_custom_call.1} parent=1 // loop_body
      %s33 = ssub.s32 %s28, 1
      %s34 = ssub.s32 %s28, 2
      %s41 = sadd.s32 1, %s36
      %p42 = scmp.ge.s32.totalorder %s41, 2
      %s43 = scalar_select %p42, 0, %s41
      %s44 = sadd.s32 1, %s35
      %s45 = scalar_select %p42, %s44, %s35
      %p46 = scmp.ge.s32.totalorder %s45, 1
      %s47 = scalar_select %p46, 0, %s45
      %s48 = ssub.s32 %s35, %s47
      %p49 = scmp.eq.s32.totalorder %s48, 0
      %s51 = sadd.s32 %s50, 1
      %s52 = scalar_select %p49, %s50, %s51
      %p55 = pneg %p49
      %p56 = scmp.eq.s32.totalorder %s28, 1
      %p57 = por %p55, %p56
      %p58 = scmp.ne.s32.totalorder %s50, %s53
      %p59 = scmp.eq.s32.totalorder %s28, 0
      %p60 = por %p58, %p59
      %p61 = scmp.ne.s32.totalorder %s50, %s53
      %p62 = scmp.eq.s32.totalorder %s33, 1
      %p63 = por %p61, %p62
      %p64 = scmp.ne.s32.totalorder %s53, %s54
      %p65 = scmp.eq.s32.totalorder %s33, 0
      %p66 = por %p64, %p65
      %p67 = scmp.ne.s32.totalorder %s53, %s54
      %p68 = scmp.eq.s32.totalorder %s34, 1
      %p69 = por %p67, %p68
      %p71 = scmp.ne.s32.totalorder %s54, %s70
      %p72 = scmp.eq.s32.totalorder %s34, 0
      %p73 = por %p71, %p72
      %s75 = sadd.s32 %s74, 1
      %p78 = scmp.eq.s32.totalorder %s28, 1
      %p79 = scmp.ne.s32.totalorder %s74, %s76
      %p80 = scmp.eq.s32.totalorder %s28, 0
      %p81 = por %p79, %p80
      %p82 = scmp.ne.s32.totalorder %s74, %s76
      %p83 = scmp.eq.s32.totalorder %s33, 1
      %p84 = por %p82, %p83
      %p85 = scmp.ne.s32.totalorder %s76, %s77
      %p86 = scmp.eq.s32.totalorder %s33, 0
      %p87 = por %p85, %p86
      %p88 = scmp.ne.s32.totalorder %s76, %s77
      %p89 = scmp.eq.s32.totalorder %s34, 1
      %p90 = por %p88, %p89
      %p92 = scmp.ne.s32.totalorder %s77, %s91
      %p93 = scmp.eq.s32.totalorder %s34, 0
      %p94 = por %p92, %p93
      %s96 = sadd.s32 %s95, 1
      %p99 = scmp.eq.s32.totalorder %s28, 1
      %p100 = scmp.ne.s32.totalorder %s95, %s97
      %p101 = scmp.eq.s32.totalorder %s28, 0
      %p102 = por %p100, %p101
      %p103 = scmp.ne.s32.totalorder %s95, %s97
      %p104 = scmp.eq.s32.totalorder %s33, 1
      %p105 = por %p103, %p104
      %p106 = scmp.ne.s32.totalorder %s97, %s98
      %p107 = scmp.eq.s32.totalorder %s33, 0
      %p108 = por %p106, %p107
      %p109 = scmp.ne.s32.totalorder %s97, %s98
      %p110 = scmp.eq.s32.totalorder %s34, 1
      %p111 = por %p109, %p110
      %p113 = scmp.ne.s32.totalorder %s98, %s112
      %p114 = scmp.eq.s32.totalorder %s34, 0
      %p115 = por %p113, %p114
      %s117 = sadd.s32 %s116, 1
      %p120 = scmp.eq.s32.totalorder %s28, 1
      %p121 = scmp.ne.s32.totalorder %s116, %s118
      %p122 = scmp.eq.s32.totalorder %s28, 0
      %p123 = por %p121, %p122
      %p124 = scmp.ne.s32.totalorder %s116, %s118
      %p125 = scmp.eq.s32.totalorder %s33, 1
      %p126 = por %p124, %p125
      %p127 = scmp.ne.s32.totalorder %s118, %s119
      %p128 = scmp.eq.s32.totalorder %s33, 0
      %p129 = por %p127, %p128
      %p130 = scmp.ne.s32.totalorder %s118, %s119
      %p131 = scmp.eq.s32.totalorder %s34, 1
      %p132 = por %p130, %p131
      %p134 = scmp.ne.s32.totalorder %s119, %s133
      %p135 = scmp.eq.s32.totalorder %s34, 0
      %p136 = por %p134, %p135
      %s138 = sadd.s32 %s137, 1
      %p141 = scmp.eq.s32.totalorder %s28, 1
      %p142 = scmp.ne.s32.totalorder %s137, %s139
      %p143 = scmp.eq.s32.totalorder %s28, 0
      %p144 = por %p142, %p143
      %p145 = scmp.ne.s32.totalorder %s137, %s139
      %p146 = scmp.eq.s32.totalorder %s33, 1
      %p147 = por %p145, %p146
      %p148 = scmp.ne.s32.totalorder %s139, %s140
      %p149 = scmp.eq.s32.totalorder %s33, 0
      %p150 = por %p148, %p149
      %p151 = scmp.ne.s32.totalorder %s139, %s140
      %p152 = scmp.eq.s32.totalorder %s34, 1
      %p153 = por %p151, %p152
      %p155 = scmp.ne.s32.totalorder %s140, %s154
      %p156 = scmp.eq.s32.totalorder %s34, 0
      %p157 = por %p155, %p156
      %s159 = sadd.s32 %s158, 1
      %p162 = scmp.eq.s32.totalorder %s28, 1
      %p163 = scmp.ne.s32.totalorder %s158, %s160
      %p164 = scmp.eq.s32.totalorder %s28, 0
      %p165 = por %p163, %p164
      %p166 = scmp.ne.s32.totalorder %s158, %s160
      %p167 = scmp.eq.s32.totalorder %s33, 1
      %p168 = por %p166, %p167
      %p169 = scmp.ne.s32.totalorder %s160, %s161
      %p170 = scmp.eq.s32.totalorder %s33, 0
      %p171 = por %p169, %p170
      %p172 = scmp.ne.s32.totalorder %s160, %s161
      %p173 = scmp.eq.s32.totalorder %s34, 1
      %p174 = por %p172, %p173
      %p176 = scmp.ne.s32.totalorder %s161, %s175
      %p177 = scmp.eq.s32.totalorder %s34, 0
      %p178 = por %p176, %p177
      %s180 = sadd.s32 %s179, 1
      %p183 = scmp.eq.s32.totalorder %s28, 1
      %p184 = scmp.ne.s32.totalorder %s179, %s181
      %p185 = scmp.eq.s32.totalorder %s28, 0
      %p186 = por %p184, %p185
      %p187 = scmp.ne.s32.totalorder %s179, %s181
      %p188 = scmp.eq.s32.totalorder %s33, 1
      %p189 = por %p187, %p188
      %p190 = scmp.ne.s32.totalorder %s181, %s182
      %p191 = scmp.eq.s32.totalorder %s33, 0
      %p192 = por %p190, %p191
      %p193 = scmp.ne.s32.totalorder %s181, %s182
      %p194 = scmp.eq.s32.totalorder %s34, 1
      %p195 = por %p193, %p194
      %p197 = scmp.ne.s32.totalorder %s182, %s196
      %p198 = scmp.eq.s32.totalorder %s34, 0
      %p199 = por %p197, %p198
      %p200 = scmp.lt.s32.totalorder %s36, 0
      %s201 = ssub.s32 0, %s36
      %s202 = scalar_select %p200, %s201, %s36
      %s203 = sand.u32 %s202, 1
      %s204 = ssub.s32 0, %s203
      %s205 = scalar_select %p200, %s204, %s203
      %p206 = scmp.ne.s32.totalorder %s205, 0
      %p207 = scmp.lt.s32.totalorder %s205, 0
      %p208 = pnand %p207, %p206
      %p209 = pneg %p208
      %s210 = sadd.s32 %s205, 2
      %s211 = scalar_select %p209, %s210, %s205
      %p212 = scmp.lt.s32.totalorder %s43, 0
      %s213 = ssub.s32 0, %s43
      %s214 = scalar_select %p212, %s213, %s43
      %s215 = sand.u32 %s214, 1
      %s216 = ssub.s32 0, %s215
      %s217 = scalar_select %p212, %s216, %s215
      %p218 = scmp.ne.s32.totalorder %s217, 0
      %p219 = scmp.lt.s32.totalorder %s217, 0
      %p220 = pnand %p219, %p218
      %p221 = pneg %p220
      %s222 = sadd.s32 %s217, 2
      %s223 = scalar_select %p221, %s222, %s217
      %s224 = ssub.s32 %s211, %s223
      %p225 = scmp.eq.s32.totalorder %s224, 0
      %s227 = sadd.s32 %s226, 1
      %s228 = scalar_select %p225, %s226, %s227
      %p231 = pneg %p225
      %p232 = scmp.eq.s32.totalorder %s28, 1
      %p233 = por %p231, %p232
      %p234 = scmp.ne.s32.totalorder %s226, %s229
      %p235 = scmp.eq.s32.totalorder %s28, 0
      %p236 = por %p234, %p235
      %p237 = scmp.ne.s32.totalorder %s226, %s229
      %p238 = scmp.eq.s32.totalorder %s33, 1
      %p239 = por %p237, %p238
      %p240 = scmp.ne.s32.totalorder %s229, %s230
      %p241 = scmp.eq.s32.totalorder %s33, 0
      %p242 = por %p240, %p241
      %p243 = scmp.ne.s32.totalorder %s229, %s230
      %p244 = scmp.eq.s32.totalorder %s34, 1
      %p245 = por %p243, %p244
      %p247 = scmp.ne.s32.totalorder %s230, %s246
      %p248 = scmp.eq.s32.totalorder %s34, 0
      %p249 = por %p247, %p248
      %p250 = scmp.lt.s32.totalorder %s36, 0
      %s251 = ssub.s32 0, %s36
      %s252 = scalar_select %p250, %s251, %s36
      %s253 = sand.u32 %s252, 1
      %s254 = ssub.s32 0, %s253
      %s255 = scalar_select %p250, %s254, %s253
      %p256 = scmp.ne.s32.totalorder %s255, 0
      %p257 = scmp.lt.s32.totalorder %s255, 0
      %p258 = pnand %p257, %p256
      %p259 = pneg %p258
      %s260 = sadd.s32 %s255, 2
      %s261 = scalar_select %p259, %s260, %s255
      %p262 = scmp.lt.s32.totalorder %s43, 0
      %s263 = ssub.s32 0, %s43
      %s264 = scalar_select %p262, %s263, %s43
      %s265 = sand.u32 %s264, 1
      %s266 = ssub.s32 0, %s265
      %s267 = scalar_select %p262, %s266, %s265
      %p268 = scmp.ne.s32.totalorder %s267, 0
      %p269 = scmp.lt.s32.totalorder %s267, 0
      %p270 = pnand %p269, %p268
      %p271 = pneg %p270
      %s272 = sadd.s32 %s267, 2
      %s273 = scalar_select %p271, %s272, %s267
      %s274 = ssub.s32 %s261, %s273
      %p275 = scmp.eq.s32.totalorder %s274, 0
      %s277 = sadd.s32 %s276, 1
      %s278 = scalar_select %p275, %s276, %s277
      %p281 = pneg %p275
      %p282 = scmp.eq.s32.totalorder %s28, 1
      %p283 = por %p281, %p282
      %p284 = scmp.ne.s32.totalorder %s276, %s279
      %p285 = scmp.eq.s32.totalorder %s28, 0
      %p286 = por %p284, %p285
      %p287 = scmp.ne.s32.totalorder %s276, %s279
      %p288 = scmp.eq.s32.totalorder %s33, 1
      %p289 = por %p287, %p288
      %p290 = scmp.ne.s32.totalorder %s279, %s280
      %p291 = scmp.eq.s32.totalorder %s33, 0
      %p292 = por %p290, %p291
      %p293 = scmp.ne.s32.totalorder %s279, %s280
      %p294 = scmp.eq.s32.totalorder %s34, 1
      %p295 = por %p293, %p294
      %p297 = scmp.ne.s32.totalorder %s280, %s296
      %p298 = scmp.eq.s32.totalorder %s34, 0
      %p299 = por %p297, %p298
      %p300 = scmp.lt.s32.totalorder %s36, 0
      %s301 = ssub.s32 0, %s36
      %s302 = scalar_select %p300, %s301, %s36
      %s303 = sand.u32 %s302, 1
      %s304 = ssub.s32 0, %s303
      %s305 = scalar_select %p300, %s304, %s303
      %p306 = scmp.ne.s32.totalorder %s305, 0
      %p307 = scmp.lt.s32.totalorder %s305, 0
      %p308 = pnand %p307, %p306
      %p309 = pneg %p308
      %s310 = sadd.s32 %s305, 2
      %s311 = scalar_select %p309, %s310, %s305
      %p312 = scmp.lt.s32.totalorder %s43, 0
      %s313 = ssub.s32 0, %s43
      %s314 = scalar_select %p312, %s313, %s43
      %s315 = sand.u32 %s314, 1
      %s316 = ssub.s32 0, %s315
      %s317 = scalar_select %p312, %s316, %s315
      %p318 = scmp.ne.s32.totalorder %s317, 0
      %p319 = scmp.lt.s32.totalorder %s317, 0
      %p320 = pnand %p319, %p318
      %p321 = pneg %p320
      %s322 = sadd.s32 %s317, 2
      %s323 = scalar_select %p321, %s322, %s317
      %s324 = ssub.s32 %s311, %s323
      %p325 = scmp.eq.s32.totalorder %s324, 0
      %s327 = sadd.s32 %s326, 1
      %s328 = scalar_select %p325, %s326, %s327
      %p331 = pneg %p325
      %p332 = scmp.eq.s32.totalorder %s28, 1
      %p333 = por %p331, %p332
      %p334 = scmp.ne.s32.totalorder %s326, %s329
      %p335 = scmp.eq.s32.totalorder %s28, 0
      %p336 = por %p334, %p335
      %p337 = scmp.ne.s32.totalorder %s326, %s329
      %p338 = scmp.eq.s32.totalorder %s33, 1
      %p339 = por %p337, %p338
      %p340 = scmp.ne.s32.totalorder %s329, %s330
      %p341 = scmp.eq.s32.totalorder %s33, 0
      %p342 = por %p340, %p341
      %p343 = scmp.ne.s32.totalorder %s329, %s330
      %p344 = scmp.eq.s32.totalorder %s34, 1
      %p345 = por %p343, %p344
      %p347 = scmp.ne.s32.totalorder %s330, %s346
      %p348 = scmp.eq.s32.totalorder %s34, 0
      %p349 = por %p347, %p348
      %p350 = scmp.lt.s32.totalorder %s36, 0
      %s351 = ssub.s32 0, %s36
      %s352 = scalar_select %p350, %s351, %s36
      %s353 = sand.u32 %s352, 1
      %s354 = ssub.s32 0, %s353
      %s355 = scalar_select %p350, %s354, %s353
      %p356 = scmp.ne.s32.totalorder %s355, 0
      %p357 = scmp.lt.s32.totalorder %s355, 0
      %p358 = pnand %p357, %p356
      %p359 = pneg %p358
      %s360 = sadd.s32 %s355, 2
      %s361 = scalar_select %p359, %s360, %s355
      %p362 = scmp.lt.s32.totalorder %s43, 0
      %s363 = ssub.s32 0, %s43
      %s364 = scalar_select %p362, %s363, %s43
      %s365 = sand.u32 %s364, 1
      %s366 = ssub.s32 0, %s365
      %s367 = scalar_select %p362, %s366, %s365
      %p368 = scmp.ne.s32.totalorder %s367, 0
      %p369 = scmp.lt.s32.totalorder %s367, 0
      %p370 = pnand %p369, %p368
      %p371 = pneg %p370
      %s372 = sadd.s32 %s367, 2
      %s373 = scalar_select %p371, %s372, %s367
      %s374 = ssub.s32 %s361, %s373
      %p375 = scmp.eq.s32.totalorder %s374, 0
      %s377 = sadd.s32 %s376, 1
      %s378 = scalar_select %p375, %s376, %s377
      %p381 = pneg %p375
      %p382 = scmp.eq.s32.totalorder %s28, 1
      %p383 = por %p381, %p382
      %p384 = scmp.ne.s32.totalorder %s376, %s379
      %p385 = scmp.eq.s32.totalorder %s28, 0
      %p386 = por %p384, %p385
      %p387 = scmp.ne.s32.totalorder %s376, %s379
      %p388 = scmp.eq.s32.totalorder %s33, 1
      %p389 = por %p387, %p388
      %p390 = scmp.ne.s32.totalorder %s379, %s380
      %p391 = scmp.eq.s32.totalorder %s33, 0
      %p392 = por %p390, %p391
      %p393 = scmp.ne.s32.totalorder %s379, %s380
      %p394 = scmp.eq.s32.totalorder %s34, 1
      %p395 = por %p393, %p394
      %p397 = scmp.ne.s32.totalorder %s380, %s396
      %p398 = scmp.eq.s32.totalorder %s34, 0
      %p399 = por %p397, %p398
      %p400 = scmp.lt.s32.totalorder %s36, 0
      %s401 = ssub.s32 0, %s36
      %s402 = scalar_select %p400, %s401, %s36
      %s403 = sand.u32 %s402, 1
      %s404 = ssub.s32 0, %s403
      %s405 = scalar_select %p400, %s404, %s403
      %p406 = scmp.ne.s32.totalorder %s405, 0
      %p407 = scmp.lt.s32.totalorder %s405, 0
      %p408 = pnand %p407, %p406
      %p409 = pneg %p408
      %s410 = sadd.s32 %s405, 2
      %s411 = scalar_select %p409, %s410, %s405
      %p412 = scmp.lt.s32.totalorder %s43, 0
      %s413 = ssub.s32 0, %s43
      %s414 = scalar_select %p412, %s413, %s43
      %s415 = sand.u32 %s414, 1
      %s416 = ssub.s32 0, %s415
      %s417 = scalar_select %p412, %s416, %s415
      %p418 = scmp.ne.s32.totalorder %s417, 0
      %p419 = scmp.lt.s32.totalorder %s417, 0
      %p420 = pnand %p419, %p418
      %p421 = pneg %p420
      %s422 = sadd.s32 %s417, 2
      %s423 = scalar_select %p421, %s422, %s417
      %s424 = ssub.s32 %s411, %s423
      %p425 = scmp.eq.s32.totalorder %s424, 0
      %s427 = sadd.s32 %s426, 1
      %s428 = scalar_select %p425, %s426, %s427
      %p431 = pneg %p425
      %p432 = scmp.eq.s32.totalorder %s28, 1
      %p433 = por %p431, %p432
      %p434 = scmp.ne.s32.totalorder %s426, %s429
      %p435 = scmp.eq.s32.totalorder %s28, 0
      %p436 = por %p434, %p435
      %p437 = scmp.ne.s32.totalorder %s426, %s429
      %p438 = scmp.eq.s32.totalorder %s33, 1
      %p439 = por %p437, %p438
      %p440 = scmp.ne.s32.totalorder %s429, %s430
      %p441 = scmp.eq.s32.totalorder %s33, 0
      %p442 = por %p440, %p441
      %p443 = scmp.ne.s32.totalorder %s429, %s430
      %p444 = scmp.eq.s32.totalorder %s34, 1
      %p445 = por %p443, %p444
      %p447 = scmp.ne.s32.totalorder %s430, %s446
      %p448 = scmp.eq.s32.totalorder %s34, 0
      %p449 = por %p447, %p448
      %p450 = scmp.lt.s32.totalorder %s36, 0
      %s451 = ssub.s32 0, %s36
      %s452 = scalar_select %p450, %s451, %s36
      %s453 = sand.u32 %s452, 1
      %s454 = ssub.s32 0, %s453
      %s455 = scalar_select %p450, %s454, %s453
      %p456 = scmp.ne.s32.totalorder %s455, 0
      %p457 = scmp.lt.s32.totalorder %s455, 0
      %p458 = pnand %p457, %p456
      %p459 = pneg %p458
      %s460 = sadd.s32 %s455, 2
      %s461 = scalar_select %p459, %s460, %s455
      %p462 = scmp.lt.s32.totalorder %s43, 0
      %s463 = ssub.s32 0, %s43
      %s464 = scalar_select %p462, %s463, %s43
      %s465 = sand.u32 %s464, 1
      %s466 = ssub.s32 0, %s465
      %s467 = scalar_select %p462, %s466, %s465
      %p468 = scmp.ne.s32.totalorder %s467, 0
      %p469 = scmp.lt.s32.totalorder %s467, 0
      %p470 = pnand %p469, %p468
      %p471 = pneg %p470
      %s472 = sadd.s32 %s467, 2
      %s473 = scalar_select %p471, %s472, %s467
      %s474 = ssub.s32 %s461, %s473
      %p475 = scmp.eq.s32.totalorder %s474, 0
      %s477 = sadd.s32 %s476, 1
      %s478 = scalar_select %p475, %s476, %s477
      %p481 = pneg %p475
      %p482 = scmp.eq.s32.totalorder %s28, 1
      %p483 = por %p481, %p482
      %p484 = scmp.ne.s32.totalorder %s476, %s479
      %p485 = scmp.eq.s32.totalorder %s28, 0
      %p486 = por %p484, %p485
      %p487 = scmp.ne.s32.totalorder %s476, %s479
      %p488 = scmp.eq.s32.totalorder %s33, 1
      %p489 = por %p487, %p488
      %p490 = scmp.ne.s32.totalorder %s479, %s480
      %p491 = scmp.eq.s32.totalorder %s33, 0
      %p492 = por %p490, %p491
      %p493 = scmp.ne.s32.totalorder %s479, %s480
      %p494 = scmp.eq.s32.totalorder %s34, 1
      %p495 = por %p493, %p494
      %p497 = scmp.ne.s32.totalorder %s480, %s496
      %p498 = scmp.eq.s32.totalorder %s34, 0
      %p499 = por %p497, %p498
      %p500 = scmp.lt.s32.totalorder %s36, 0
      %s501 = ssub.s32 0, %s36
      %s502 = scalar_select %p500, %s501, %s36
      %s503 = sand.u32 %s502, 1
      %s504 = ssub.s32 0, %s503
      %s505 = scalar_select %p500, %s504, %s503
      %p506 = scmp.ne.s32.totalorder %s505, 0
      %p507 = scmp.lt.s32.totalorder %s505, 0
      %p508 = pnand %p507, %p506
      %p509 = pneg %p508
      %s510 = sadd.s32 %s505, 2
      %s511 = scalar_select %p509, %s510, %s505
      %p512 = scmp.lt.s32.totalorder %s43, 0
      %s513 = ssub.s32 0, %s43
      %s514 = scalar_select %p512, %s513, %s43
      %s515 = sand.u32 %s514, 1
      %s516 = ssub.s32 0, %s515
      %s517 = scalar_select %p512, %s516, %s515
      %p518 = scmp.ne.s32.totalorder %s517, 0
      %p519 = scmp.lt.s32.totalorder %s517, 0
      %p520 = pnand %p519, %p518
      %p521 = pneg %p520
      %s522 = sadd.s32 %s517, 2
      %s523 = scalar_select %p521, %s522, %s517
      %s524 = ssub.s32 %s511, %s523
      %p525 = scmp.eq.s32.totalorder %s524, 0
      %s527 = sadd.s32 %s526, 1
      %s528 = scalar_select %p525, %s526, %s527
      %p531 = pneg %p525
      %p532 = scmp.eq.s32.totalorder %s28, 1
      %p533 = por %p531, %p532
      %p534 = scmp.ne.s32.totalorder %s526, %s529
      %p535 = scmp.eq.s32.totalorder %s28, 0
      %p536 = por %p534, %p535
      %p537 = scmp.ne.s32.totalorder %s526, %s529
      %p538 = scmp.eq.s32.totalorder %s33, 1
      %p539 = por %p537, %p538
      %p540 = scmp.ne.s32.totalorder %s529, %s530
      %p541 = scmp.eq.s32.totalorder %s33, 0
      %p542 = por %p540, %p541
      %p543 = scmp.ne.s32.totalorder %s529, %s530
      %p544 = scmp.eq.s32.totalorder %s34, 1
      %p545 = por %p543, %p544
      %p547 = scmp.ne.s32.totalorder %s530, %s546
      %p548 = scmp.eq.s32.totalorder %s34, 0
      %p549 = por %p547, %p548
      %s550 = ssub.s32 %s35, %s47
      %p551 = scmp.eq.s32.totalorder %s550, 0
      %s553 = sadd.s32 %s552, 1
      %s554 = scalar_select %p551, %s552, %s553
      %p557 = pneg %p551
      %p558 = scmp.eq.s32.totalorder %s28, 1
      %p559 = por %p557, %p558
      %p560 = scmp.ne.s32.totalorder %s552, %s555
      %p561 = scmp.eq.s32.totalorder %s28, 0
      %p562 = por %p560, %p561
      %p563 = scmp.ne.s32.totalorder %s552, %s555
      %p564 = scmp.eq.s32.totalorder %s33, 1
      %p565 = por %p563, %p564
      %p566 = scmp.ne.s32.totalorder %s555, %s556
      %p567 = scmp.eq.s32.totalorder %s33, 0
      %p568 = por %p566, %p567
      %p569 = scmp.ne.s32.totalorder %s555, %s556
      %p570 = scmp.eq.s32.totalorder %s34, 1
      %p571 = por %p569, %p570
      %p573 = scmp.ne.s32.totalorder %s556, %s572
      %p574 = scmp.eq.s32.totalorder %s34, 0
      %p575 = por %p573, %p574
      %s576 = ssub.s32 %s35, %s47
      %p577 = scmp.eq.s32.totalorder %s576, 0
      %s579 = sadd.s32 %s578, 1
      %s580 = scalar_select %p577, %s578, %s579
      %p583 = pneg %p577
      %p584 = scmp.eq.s32.totalorder %s28, 1
      %p585 = por %p583, %p584
      %p586 = scmp.ne.s32.totalorder %s578, %s581
      %p587 = scmp.eq.s32.totalorder %s28, 0
      %p588 = por %p586, %p587
      %p589 = scmp.ne.s32.totalorder %s578, %s581
      %p590 = scmp.eq.s32.totalorder %s33, 1
      %p591 = por %p589, %p590
      %p592 = scmp.ne.s32.totalorder %s581, %s582
      %p593 = scmp.eq.s32.totalorder %s33, 0
      %p594 = por %p592, %p593
      %p595 = scmp.ne.s32.totalorder %s581, %s582
      %p596 = scmp.eq.s32.totalorder %s34, 1
      %p597 = por %p595, %p596
      %p599 = scmp.ne.s32.totalorder %s582, %s598
      %p600 = scmp.eq.s32.totalorder %s34, 0
      %p601 = por %p599, %p600
      %p602 = scmp.le.s32.totalorder 1, %s28
      %p603 = scmp.lt.s32.totalorder %s28, 3
      %p604 = pnand %p602, %p603
      %p605 = pneg %p604
      // Predicated region
      $region9: #{tpu_custom_call.1} parent=5 // pred_check
        _
      $region10: #{tpu_custom_call.1} parent=5 // pred_check_branch
        %607 = sbr.rel (%p604) target = $region12
      $region11: #{tpu_custom_call.1} parent=5 // pred_region
        %s608 = ssub.s32 %s28, 1
        // Predicated region
        $region13: #{tpu_custom_call.1} parent=11 // pred_check
          %p609 = pneg %p66
        $region14: #{tpu_custom_call.1} parent=11 // pred_check_branch
          %611 = sbr.rel (%p609) target = $region16
        $region15: #{tpu_custom_call.1} parent=11 // pred_region
          %s612 = smul.u32 2, %s37
          %p613 = scmp.lt.s32.totalorder %s612, 1
          %s614 = scalar_select %p613, %s612, 1
          %s615 = smul.addr %s614, 2
          %s616 = smul.addr %s615, 8
          %s617 = scalar_lea.vmem %s0, %s616
          %s618 = smul.u32 2, %s37
        $region16: #{tpu_custom_call.1} parent=11 // pred_fallthru
          _
        // Predicated region
        $region17: #{tpu_custom_call.1} parent=11 // pred_check
          %p619 = pneg %p87
        $region18: #{tpu_custom_call.1} parent=11 // pred_check_branch
          %621 = sbr.rel (%p619) target = $region20
        $region19: #{tpu_custom_call.1} parent=11 // pred_region
          %s623 = ssub.s32 128, 128
          %624 = vsyncadd [#allocation4], %s623
          %s626 = sshll.u32 [#allocation3], 4
          %s627 = int_to_ptr.vmem [resolvable:$true] %s626
          %629 = dma.hbm_to_vmem [thread:$0]  %s1, 128, %s627, [#allocation4]
        $region20: #{tpu_custom_call.1} parent=11 // pred_fallthru
          _
        // Predicated region
        $region21: #{tpu_custom_call.1} parent=11 // pred_check
          %p630 = pneg %p108
        $region22: #{tpu_custom_call.1} parent=11 // pred_check_branch
          %632 = sbr.rel (%p630) target = $region24
        $region23: #{tpu_custom_call.1} parent=11 // pred_region
          %s634 = ssub.s32 256, 256
          %635 = vsyncadd [#allocation7], %s634
          %s636 = sshll.u32 [#allocation6], 4
          %s637 = int_to_ptr.vmem [resolvable:$true] %s636
          %642 = dma.hbm_to_vmem [thread:$0]  %s2, 256, %s637, [#allocation7], 64, 64, 4
        $region24: #{tpu_custom_call.1} parent=11 // pred_fallthru
          _
        // Predicated region
        $region25: #{tpu_custom_call.1} parent=11 // pred_check
          %p643 = pneg %p129
        $region26: #{tpu_custom_call.1} parent=11 // pred_check_branch
          %645 = sbr.rel (%p643) target = $region28
        $region27: #{tpu_custom_call.1} parent=11 // pred_region
          %s647 = ssub.s32 128, 128
          %648 = vsyncadd [#allocation7], %s647
          %s650 = sshll.u32 [#allocation8], 4
          %s651 = int_to_ptr.vmem [resolvable:$true] %s650
          %653 = dma.hbm_to_vmem [thread:$0]  %s3, 128, %s651, [#allocation7]
        $region28: #{tpu_custom_call.1} parent=11 // pred_fallthru
          _
        // Predicated region
        $region29: #{tpu_custom_call.1} parent=11 // pred_check
          %p654 = pneg %p150
        $region30: #{tpu_custom_call.1} parent=11 // pred_check_branch
          %656 = sbr.rel (%p654) target = $region32
        $region31: #{tpu_custom_call.1} parent=11 // pred_region
          %s658 = ssub.s32 128, 128
          %659 = vsyncadd [#allocation10], %s658
          %s661 = sshll.u32 [#allocation9], 4
          %s662 = int_to_ptr.vmem [resolvable:$true] %s661
          %664 = dma.hbm_to_vmem [thread:$0]  %s4, 128, %s662, [#allocation10]
        $region32: #{tpu_custom_call.1} parent=11 // pred_fallthru
          _
        // Predicated region
        $region33: #{tpu_custom_call.1} parent=11 // pred_check
          %p665 = pneg %p171
        $region34: #{tpu_custom_call.1} parent=11 // pred_check_branch
          %667 = sbr.rel (%p665) target = $region36
        $region35: #{tpu_custom_call.1} parent=11 // pred_region
          %s669 = ssub.s32 256, 256
          %670 = vsyncadd [#allocation10], %s669
          %s671 = sshll.u32 [#allocation11], 4
          %s672 = int_to_ptr.vmem [resolvable:$true] %s671
          %677 = dma.hbm_to_vmem [thread:$0]  %s5, 256, %s672, [#allocation10], 64, 64, 4
        $region36: #{tpu_custom_call.1} parent=11 // pred_fallthru
          _
        // Predicated region
        $region37: #{tpu_custom_call.1} parent=11 // pred_check
          %p678 = pneg %p192
        $region38: #{tpu_custom_call.1} parent=11 // pred_check_branch
          %680 = sbr.rel (%p678) target = $region40
        $region39: #{tpu_custom_call.1} parent=11 // pred_region
          %s682 = ssub.s32 256, 256
          %683 = vsyncadd [#allocation13], %s682
          %s684 = sshll.u32 [#allocation12], 4
          %s685 = int_to_ptr.vmem [resolvable:$true] %s684
          %690 = dma.hbm_to_vmem [thread:$0]  %s6, 256, %s685, [#allocation13], 64, 64, 4
        $region40: #{tpu_custom_call.1} parent=11 // pred_fallthru
          _
      $region12: #{tpu_custom_call.1} parent=5 // pred_fallthru
        _
      %p691 = scmp.lt.s32.totalorder %s28, 2
      // Predicated region
      $region41: #{tpu_custom_call.1} parent=5 // pred_check
        %p692 = pneg %p691
      $region42: #{tpu_custom_call.1} parent=5 // pred_check_branch
        %694 = sbr.rel (%p692) target = $region44
      $region43: #{tpu_custom_call.1} parent=5 // pred_region
        // Predicated region
        $region45: #{tpu_custom_call.1} parent=43 // pred_check
          %p695 = pneg %p236
        $region46: #{tpu_custom_call.1} parent=43 // pred_check_branch
          %697 = sbr.rel (%p695) target = $region48
        $region47: #{tpu_custom_call.1} parent=43 // pred_region
          %s698 = sand.u32 %s28, 1
          %s699 = scalar_lea.sflag [#allocation4], %s698
          %s700 = sand.u32 %s226, 1
          %s701 = smul.addr %s700, 8
          %s702 = scalar_lea.vmem [#allocation14], %s701
          %p703 = scmp.lt.s32.totalorder %s36, 0
          %s704 = ssub.s32 0, %s36
          %s705 = scalar_select %p703, %s704, %s36
          %s706 = sand.u32 %s705, 1
          %s707 = ssub.s32 0, %s706
          %s708 = scalar_select %p703, %s707, %s706
          %p709 = scmp.ne.s32.totalorder %s708, 0
          %p710 = scmp.lt.s32.totalorder %s708, 0
          %p711 = pnand %p710, %p709
          %p712 = pneg %p711
          %s713 = sadd.s32 %s708, 2
          %s714 = scalar_select %p712, %s713, %s708
          %s716 = ssub.s32 128, 128
          %717 = vsyncadd %s699, %s716
          %s718 = smul.addr %s714, 128
          %s719 = scalar_lea.hbm %s7, %s718
          %s721 = sshll.u32 %s702, 4
          %s722 = int_to_ptr.vmem [resolvable:$true] %s721
          %724 = dma.hbm_to_vmem [thread:$0]  %s719, 128, %s722, %s699
        $region48: #{tpu_custom_call.1} parent=43 // pred_fallthru
          _
        // Predicated region
        $region49: #{tpu_custom_call.1} parent=43 // pred_check
          %p725 = pneg %p286
        $region50: #{tpu_custom_call.1} parent=43 // pred_check_branch
          %727 = sbr.rel (%p725) target = $region52
        $region51: #{tpu_custom_call.1} parent=43 // pred_region
          %p728 = scmp.lt.s32.totalorder %s36, 0
          %s729 = ssub.s32 0, %s36
          %s730 = scalar_select %p728, %s729, %s36
          %s731 = sand.u32 %s730, 1
          %s732 = ssub.s32 0, %s731
          %s733 = scalar_select %p728, %s732, %s731
          %p734 = scmp.ne.s32.totalorder %s733, 0
          %p735 = scmp.lt.s32.totalorder %s733, 0
          %p736 = pnand %p735, %p734
          %p737 = pneg %p736
          %s738 = sadd.s32 %s733, 2
          %s739 = scalar_select %p737, %s738, %s733
          %p740 = scmp.lt.s32.totalorder %s739, 1
          %s741 = scalar_select %p740, %s739, 1
          %s742 = smul.addr %s741, 4
          %s743 = smul.addr %s742, 4
          %s744 = scalar_lea.vmem %s8, %s743
          %p745 = scmp.lt.s32.totalorder %s36, 0
          %s746 = ssub.s32 0, %s36
          %s747 = scalar_select %p745, %s746, %s36
          %s748 = sand.u32 %s747, 1
          %s749 = ssub.s32 0, %s748
          %s750 = scalar_select %p745, %s749, %s748
          %p751 = scmp.ne.s32.totalorder %s750, 0
          %p752 = scmp.lt.s32.totalorder %s750, 0
          %p753 = pnand %p752, %p751
          %p754 = pneg %p753
          %s755 = sadd.s32 %s750, 2
          %s756 = scalar_select %p754, %s755, %s750
        $region52: #{tpu_custom_call.1} parent=43 // pred_fallthru
          _
        // Predicated region
        $region53: #{tpu_custom_call.1} parent=43 // pred_check
          %p757 = pneg %p336
        $region54: #{tpu_custom_call.1} parent=43 // pred_check_branch
          %759 = sbr.rel (%p757) target = $region56
        $region55: #{tpu_custom_call.1} parent=43 // pred_region
          %p760 = scmp.lt.s32.totalorder %s36, 0
          %s761 = ssub.s32 0, %s36
          %s762 = scalar_select %p760, %s761, %s36
          %s763 = sand.u32 %s762, 1
          %s764 = ssub.s32 0, %s763
          %s765 = scalar_select %p760, %s764, %s763
          %p766 = scmp.ne.s32.totalorder %s765, 0
          %p767 = scmp.lt.s32.totalorder %s765, 0
          %p768 = pnand %p767, %p766
          %p769 = pneg %p768
          %s770 = sadd.s32 %s765, 2
          %s771 = scalar_select %p769, %s770, %s765
          %p772 = scmp.lt.s32.totalorder %s771, 1
          %s773 = scalar_select %p772, %s771, 1
          %s774 = scalar_lea.vmem %s9, %s773
          %p775 = scmp.lt.s32.totalorder %s36, 0
          %s776 = ssub.s32 0, %s36
          %s777 = scalar_select %p775, %s776, %s36
          %s778 = sand.u32 %s777, 1
          %s779 = ssub.s32 0, %s778
          %s780 = scalar_select %p775, %s779, %s778
          %p781 = scmp.ne.s32.totalorder %s780, 0
          %p782 = scmp.lt.s32.totalorder %s780, 0
          %p783 = pnand %p782, %p781
          %p784 = pneg %p783
          %s785 = sadd.s32 %s780, 2
          %s786 = scalar_select %p784, %s785, %s780
        $region56: #{tpu_custom_call.1} parent=43 // pred_fallthru
          _
        // Predicated region
        $region57: #{tpu_custom_call.1} parent=43 // pred_check
          %p787 = pneg %p386
        $region58: #{tpu_custom_call.1} parent=43 // pred_check_branch
          %789 = sbr.rel (%p787) target = $region60
        $region59: #{tpu_custom_call.1} parent=43 // pred_region
          %p790 = scmp.lt.s32.totalorder %s36, 0
          %s791 = ssub.s32 0, %s36
          %s792 = scalar_select %p790, %s791, %s36
          %s793 = sand.u32 %s792, 1
          %s794 = ssub.s32 0, %s793
          %s795 = scalar_select %p790, %s794, %s793
          %p796 = scmp.ne.s32.totalorder %s795, 0
          %p797 = scmp.lt.s32.totalorder %s795, 0
          %p798 = pnand %p797, %p796
          %p799 = pneg %p798
          %s800 = sadd.s32 %s795, 2
          %s801 = scalar_select %p799, %s800, %s795
          %p802 = scmp.lt.s32.totalorder %s801, 1
          %s803 = scalar_select %p802, %s801, 1
          %s804 = smul.addr %s803, 4
          %s805 = smul.addr %s804, 4
          %s806 = scalar_lea.vmem %s10, %s805
          %p807 = scmp.lt.s32.totalorder %s36, 0
          %s808 = ssub.s32 0, %s36
          %s809 = scalar_select %p807, %s808, %s36
          %s810 = sand.u32 %s809, 1
          %s811 = ssub.s32 0, %s810
          %s812 = scalar_select %p807, %s811, %s810
          %p813 = scmp.ne.s32.totalorder %s812, 0
          %p814 = scmp.lt.s32.totalorder %s812, 0
          %p815 = pnand %p814, %p813
          %p816 = pneg %p815
          %s817 = sadd.s32 %s812, 2
          %s818 = scalar_select %p816, %s817, %s812
        $region60: #{tpu_custom_call.1} parent=43 // pred_fallthru
          _
        // Predicated region
        $region61: #{tpu_custom_call.1} parent=43 // pred_check
          %p819 = pneg %p436
        $region62: #{tpu_custom_call.1} parent=43 // pred_check_branch
          %821 = sbr.rel (%p819) target = $region64
        $region63: #{tpu_custom_call.1} parent=43 // pred_region
          %s822 = sand.u32 %s28, 1
          %s823 = scalar_lea.sflag [#allocation4], %s822
          %s824 = sand.u32 %s426, 1
          %s825 = smul.addr %s824, 16
          %s826 = scalar_lea.vmem [#allocation15], %s825
          %p827 = scmp.lt.s32.totalorder %s36, 0
          %s828 = ssub.s32 0, %s36
          %s829 = scalar_select %p827, %s828, %s36
          %s830 = sand.u32 %s829, 1
          %s831 = ssub.s32 0, %s830
          %s832 = scalar_select %p827, %s831, %s830
          %p833 = scmp.ne.s32.totalorder %s832, 0
          %p834 = scmp.lt.s32.totalorder %s832, 0
          %p835 = pnand %p834, %p833
          %p836 = pneg %p835
          %s837 = sadd.s32 %s832, 2
          %s838 = scalar_select %p836, %s837, %s832
          %s840 = ssub.s32 256, 256
          %841 = vsyncadd %s823, %s840
          %s842 = smul.addr %s838, 4
          %s843 = smul.addr %s842, 64
          %s844 = scalar_lea.hbm %s11, %s843
          %s845 = sshll.u32 %s826, 4
          %s846 = int_to_ptr.vmem [resolvable:$true] %s845
          %851 = dma.hbm_to_vmem [thread:$0]  %s844, 256, %s846, %s823, 64, 64, 4
        $region64: #{tpu_custom_call.1} parent=43 // pred_fallthru
          _
        // Predicated region
        $region65: #{tpu_custom_call.1} parent=43 // pred_check
          %p852 = pneg %p486
        $region66: #{tpu_custom_call.1} parent=43 // pred_check_branch
          %854 = sbr.rel (%p852) target = $region68
        $region67: #{tpu_custom_call.1} parent=43 // pred_region
          %p855 = scmp.lt.s32.totalorder %s36, 0
          %s856 = ssub.s32 0, %s36
          %s857 = scalar_select %p855, %s856, %s36
          %s858 = sand.u32 %s857, 1
          %s859 = ssub.s32 0, %s858
          %s860 = scalar_select %p855, %s859, %s858
          %p861 = scmp.ne.s32.totalorder %s860, 0
          %p862 = scmp.lt.s32.totalorder %s860, 0
          %p863 = pnand %p862, %p861
          %p864 = pneg %p863
          %s865 = sadd.s32 %s860, 2
          %s866 = scalar_select %p864, %s865, %s860
          %p867 = scmp.lt.s32.totalorder %s866, 1
          %s868 = scalar_select %p867, %s866, 1
          %s869 = scalar_lea.vmem %s12, %s868
          %p870 = scmp.lt.s32.totalorder %s36, 0
          %s871 = ssub.s32 0, %s36
          %s872 = scalar_select %p870, %s871, %s36
          %s873 = sand.u32 %s872, 1
          %s874 = ssub.s32 0, %s873
          %s875 = scalar_select %p870, %s874, %s873
          %p876 = scmp.ne.s32.totalorder %s875, 0
          %p877 = scmp.lt.s32.totalorder %s875, 0
          %p878 = pnand %p877, %p876
          %p879 = pneg %p878
          %s880 = sadd.s32 %s875, 2
          %s881 = scalar_select %p879, %s880, %s875
        $region68: #{tpu_custom_call.1} parent=43 // pred_fallthru
          _
        // Predicated region
        $region69: #{tpu_custom_call.1} parent=43 // pred_check
          %p882 = pneg %p536
        $region70: #{tpu_custom_call.1} parent=43 // pred_check_branch
          %884 = sbr.rel (%p882) target = $region72
        $region71: #{tpu_custom_call.1} parent=43 // pred_region
          %p885 = scmp.lt.s32.totalorder %s36, 0
          %s886 = ssub.s32 0, %s36
          %s887 = scalar_select %p885, %s886, %s36
          %s888 = sand.u32 %s887, 1
          %s889 = ssub.s32 0, %s888
          %s890 = scalar_select %p885, %s889, %s888
          %p891 = scmp.ne.s32.totalorder %s890, 0
          %p892 = scmp.lt.s32.totalorder %s890, 0
          %p893 = pnand %p892, %p891
          %p894 = pneg %p893
          %s895 = sadd.s32 %s890, 2
          %s896 = scalar_select %p894, %s895, %s890
          %p897 = scmp.lt.s32.totalorder %s896, 1
          %s898 = scalar_select %p897, %s896, 1
          %s899 = smul.addr %s898, 8
          %s900 = smul.addr %s899, 4
          %s901 = scalar_lea.vmem %s13, %s900
          %p902 = scmp.lt.s32.totalorder %s36, 0
          %s903 = ssub.s32 0, %s36
          %s904 = scalar_select %p902, %s903, %s36
          %s905 = sand.u32 %s904, 1
          %s906 = ssub.s32 0, %s905
          %s907 = scalar_select %p902, %s906, %s905
          %p908 = scmp.ne.s32.totalorder %s907, 0
          %p909 = scmp.lt.s32.totalorder %s907, 0
          %p910 = pnand %p909, %p908
          %p911 = pneg %p910
          %s912 = sadd.s32 %s907, 2
          %s913 = scalar_select %p911, %s912, %s907
        $region72: #{tpu_custom_call.1} parent=43 // pred_fallthru
          _
      $region44: #{tpu_custom_call.1} parent=5 // pred_fallthru
        _
      %p914 = scmp.le.s32.totalorder 1, %s28
      %p915 = scmp.lt.s32.totalorder %s28, 3
      %p916 = pnand %p914, %p915
      %p917 = pneg %p916
      // Predicated region
      $region73: #{tpu_custom_call.1} parent=5 // pred_check
        _
      $region74: #{tpu_custom_call.1} parent=5 // pred_check_branch
        %919 = sbr.rel (%p916) target = $region76
      $region75: #{tpu_custom_call.1} parent=5 // pred_region
        %s920 = ssub.s32 %s28, 1
        // Predicated region
        $region77: #{tpu_custom_call.1} parent=75 // pred_check
          %p921 = pneg %p87
        $region78: #{tpu_custom_call.1} parent=75 // pred_check_branch
          %923 = sbr.rel (%p921) target = $region80
        $region79: #{tpu_custom_call.1} parent=75 // pred_region
          %924 = dma.done [#allocation4], 128
        $region80: #{tpu_custom_call.1} parent=75 // pred_fallthru
          _
        // Predicated region
        $region81: #{tpu_custom_call.1} parent=75 // pred_check
          %p925 = pneg %p108
        $region82: #{tpu_custom_call.1} parent=75 // pred_check_branch
          %927 = sbr.rel (%p925) target = $region84
        $region83: #{tpu_custom_call.1} parent=75 // pred_region
          %928 = dma.done [#allocation7], 256
        $region84: #{tpu_custom_call.1} parent=75 // pred_fallthru
          _
        // Predicated region
        $region85: #{tpu_custom_call.1} parent=75 // pred_check
          %p929 = pneg %p129
        $region86: #{tpu_custom_call.1} parent=75 // pred_check_branch
          %931 = sbr.rel (%p929) target = $region88
        $region87: #{tpu_custom_call.1} parent=75 // pred_region
          %932 = dma.done [#allocation7], 128
        $region88: #{tpu_custom_call.1} parent=75 // pred_fallthru
          _
        // Predicated region
        $region89: #{tpu_custom_call.1} parent=75 // pred_check
          %p933 = pneg %p150
        $region90: #{tpu_custom_call.1} parent=75 // pred_check_branch
          %935 = sbr.rel (%p933) target = $region92
        $region91: #{tpu_custom_call.1} parent=75 // pred_region
          %936 = dma.done [#allocation10], 128
        $region92: #{tpu_custom_call.1} parent=75 // pred_fallthru
          _
        // Predicated region
        $region93: #{tpu_custom_call.1} parent=75 // pred_check
          %p937 = pneg %p171
        $region94: #{tpu_custom_call.1} parent=75 // pred_check_branch
          %939 = sbr.rel (%p937) target = $region96
        $region95: #{tpu_custom_call.1} parent=75 // pred_region
          %940 = dma.done [#allocation10], 256
        $region96: #{tpu_custom_call.1} parent=75 // pred_fallthru
          _
        // Predicated region
        $region97: #{tpu_custom_call.1} parent=75 // pred_check
          %p941 = pneg %p192
        $region98: #{tpu_custom_call.1} parent=75 // pred_check_branch
          %943 = sbr.rel (%p941) target = $region100
        $region99: #{tpu_custom_call.1} parent=75 // pred_region
          %944 = dma.done [#allocation13], 256
        $region100: #{tpu_custom_call.1} parent=75 // pred_fallthru
          _
        %s945 = sand.u32 %s33, 1
        %s946 = scalar_lea.sflag [#allocation4], %s945
        %s947 = sand.u32 %s229, 1
        %s948 = smul.addr %s947, 8
        %s949 = scalar_lea.vmem [#allocation14], %s948
        // Predicated region
        $region101: #{tpu_custom_call.1} parent=75 // pred_check
          %p950 = pneg %p242
        $region102: #{tpu_custom_call.1} parent=75 // pred_check_branch
          %952 = sbr.rel (%p950) target = $region104
        $region103: #{tpu_custom_call.1} parent=75 // pred_region
          %953 = dma.done %s946, 128
        $region104: #{tpu_custom_call.1} parent=75 // pred_fallthru
          _
        %s954 = sand.u32 %s33, 1
        %s955 = scalar_lea.sflag [#allocation4], %s954
        %s956 = sand.u32 %s429, 1
        %s957 = smul.addr %s956, 16
        %s958 = scalar_lea.vmem [#allocation15], %s957
        // Predicated region
        $region105: #{tpu_custom_call.1} parent=75 // pred_check
          %p959 = pneg %p442
        $region106: #{tpu_custom_call.1} parent=75 // pred_check_branch
          %961 = sbr.rel (%p959) target = $region108
        $region107: #{tpu_custom_call.1} parent=75 // pred_region
          %962 = dma.done %s955, 256
        $region108: #{tpu_custom_call.1} parent=75 // pred_fallthru
          _
        %s963 = smul.u32 2, %s37
        %p964 = scmp.lt.s32.totalorder %s963, 1
        %s965 = scalar_select %p964, %s963, 1
        %s966 = smul.addr %s965, 2
        %s967 = smul.addr %s966, 8
        %s968 = scalar_lea.vmem %s0, %s967
        %p969 = pneg %p66
        %p970 = pneg %p63
        %p971 = pneg %p87
        %p972 = pneg %p84
        %p973 = pneg %p108
        %p974 = pneg %p105
        %p975 = pneg %p129
        %p976 = pneg %p126
        %p977 = pneg %p150
        %p978 = pneg %p147
        %p979 = pneg %p171
        %p980 = pneg %p168
        %p981 = pneg %p192
        %p982 = pneg %p189
        %s983 = sand.u32 %s33, 1
        %s984 = scalar_lea.sflag [#allocation4], %s983
        %s985 = sand.u32 %s229, 1
        %s986 = smul.addr %s985, 8
        %s987 = scalar_lea.vmem [#allocation14], %s986
        %p988 = pneg %p242
        %p989 = pneg %p239
        %p990 = scmp.lt.s32.totalorder %s38, 0
        %s991 = ssub.s32 0, %s38
        %s992 = scalar_select %p990, %s991, %s38
        %s993 = sand.u32 %s992, 1
        %s994 = ssub.s32 0, %s993
        %s995 = scalar_select %p990, %s994, %s993
        %p996 = scmp.ne.s32.totalorder %s995, 0
        %p997 = scmp.lt.s32.totalorder %s995, 0
        %p998 = pnand %p997, %p996
        %p999 = pneg %p998
        %s1000 = sadd.s32 %s995, 2
        %s1001 = scalar_select %p999, %s1000, %s995
        %p1002 = scmp.lt.s32.totalorder %s1001, 1
        %s1003 = scalar_select %p1002, %s1001, 1
        %s1004 = smul.addr %s1003, 4
        %s1005 = smul.addr %s1004, 4
        %s1006 = scalar_lea.vmem %s8, %s1005
        %p1007 = pneg %p292
        %p1008 = pneg %p289
        %p1009 = scmp.lt.s32.totalorder %s38, 0
        %s1010 = ssub.s32 0, %s38
        %s1011 = scalar_select %p1009, %s1010, %s38
        %s1012 = sand.u32 %s1011, 1
        %s1013 = ssub.s32 0, %s1012
        %s1014 = scalar_select %p1009, %s1013, %s1012
        %p1015 = scmp.ne.s32.totalorder %s1014, 0
        %p1016 = scmp.lt.s32.totalorder %s1014, 0
        %p1017 = pnand %p1016, %p1015
        %p1018 = pneg %p1017
        %s1019 = sadd.s32 %s1014, 2
        %s1020 = scalar_select %p1018, %s1019, %s1014
        %p1021 = scmp.lt.s32.totalorder %s1020, 1
        %s1022 = scalar_select %p1021, %s1020, 1
        %s1023 = scalar_lea.vmem %s9, %s1022
        %p1024 = pneg %p342
        %p1025 = pneg %p339
        %p1026 = scmp.lt.s32.totalorder %s38, 0
        %s1027 = ssub.s32 0, %s38
        %s1028 = scalar_select %p1026, %s1027, %s38
        %s1029 = sand.u32 %s1028, 1
        %s1030 = ssub.s32 0, %s1029
        %s1031 = scalar_select %p1026, %s1030, %s1029
        %p1032 = scmp.ne.s32.totalorder %s1031, 0
        %p1033 = scmp.lt.s32.totalorder %s1031, 0
        %p1034 = pnand %p1033, %p1032
        %p1035 = pneg %p1034
        %s1036 = sadd.s32 %s1031, 2
        %s1037 = scalar_select %p1035, %s1036, %s1031
        %p1038 = scmp.lt.s32.totalorder %s1037, 1
        %s1039 = scalar_select %p1038, %s1037, 1
        %s1040 = smul.addr %s1039, 4
        %s1041 = smul.addr %s1040, 4
        %s1042 = scalar_lea.vmem %s10, %s1041
        %p1043 = pneg %p392
        %p1044 = pneg %p389
        %s1045 = sand.u32 %s33, 1
        %s1046 = scalar_lea.sflag [#allocation4], %s1045
        %s1047 = sand.u32 %s429, 1
        %s1048 = smul.addr %s1047, 16
        %s1049 = scalar_lea.vmem [#allocation15], %s1048
        %p1050 = pneg %p442
        %p1051 = pneg %p439
        %p1052 = scmp.lt.s32.totalorder %s38, 0
        %s1053 = ssub.s32 0, %s38
        %s1054 = scalar_select %p1052, %s1053, %s38
        %s1055 = sand.u32 %s1054, 1
        %s1056 = ssub.s32 0, %s1055
        %s1057 = scalar_select %p1052, %s1056, %s1055
        %p1058 = scmp.ne.s32.totalorder %s1057, 0
        %p1059 = scmp.lt.s32.totalorder %s1057, 0
        %p1060 = pnand %p1059, %p1058
        %p1061 = pneg %p1060
        %s1062 = sadd.s32 %s1057, 2
        %s1063 = scalar_select %p1061, %s1062, %s1057
        %p1064 = scmp.lt.s32.totalorder %s1063, 1
        %s1065 = scalar_select %p1064, %s1063, 1
        %s1066 = scalar_lea.vmem %s12, %s1065
        %p1067 = pneg %p492
        %p1068 = pneg %p489
        %p1069 = scmp.lt.s32.totalorder %s38, 0
        %s1070 = ssub.s32 0, %s38
        %s1071 = scalar_select %p1069, %s1070, %s38
        %s1072 = sand.u32 %s1071, 1
        %s1073 = ssub.s32 0, %s1072
        %s1074 = scalar_select %p1069, %s1073, %s1072
        %p1075 = scmp.ne.s32.totalorder %s1074, 0
        %p1076 = scmp.lt.s32.totalorder %s1074, 0
        %p1077 = pnand %p1076, %p1075
        %p1078 = pneg %p1077
        %s1079 = sadd.s32 %s1074, 2
        %s1080 = scalar_select %p1078, %s1079, %s1074
        %p1081 = scmp.lt.s32.totalorder %s1080, 1
        %s1082 = scalar_select %p1081, %s1080, 1
        %s1083 = smul.addr %s1082, 8
        %s1084 = smul.addr %s1083, 4
        %s1085 = scalar_lea.vmem %s13, %s1084
        %p1086 = pneg %p542
        %p1087 = pneg %p539
        %p1088 = pneg %p568
        %p1089 = pneg %p565
        %p1090 = pneg %p594
        %p1091 = pneg %p591
        %s1092 = smul.u32 2, %s37
        %p1093 = scmp.lt.s32.totalorder %s1092, 1
        %s1094 = scalar_select %p1093, %s1092, 1
        %s1095 = smul.addr %s1094, 2
        %s1096 = smul.addr %s1095, 8
        %s1097 = scalar_lea.vmem %s0, %s1096
        %s1098 = smul.u32 2, %s37
        %p1099 = scmp.lt.s32.totalorder %s38, 0
        %s1100 = ssub.s32 0, %s38
        %s1101 = scalar_select %p1099, %s1100, %s38
        %s1102 = sand.u32 %s1101, 1
        %s1103 = ssub.s32 0, %s1102
        %s1104 = scalar_select %p1099, %s1103, %s1102
        %p1105 = scmp.ne.s32.totalorder %s1104, 0
        %p1106 = scmp.lt.s32.totalorder %s1104, 0
        %p1107 = pnand %p1106, %p1105
        %p1108 = pneg %p1107
        %s1109 = sadd.s32 %s1104, 2
        %s1110 = scalar_select %p1108, %s1109, %s1104
        %p1111 = scmp.lt.s32.totalorder %s38, 0
        %s1112 = ssub.s32 0, %s38
        %s1113 = scalar_select %p1111, %s1112, %s38
        %s1114 = sand.u32 %s1113, 1
        %s1115 = ssub.s32 0, %s1114
        %s1116 = scalar_select %p1111, %s1115, %s1114
        %p1117 = scmp.ne.s32.totalorder %s1116, 0
        %p1118 = scmp.lt.s32.totalorder %s1116, 0
        %p1119 = pnand %p1118, %p1117
        %p1120 = pneg %p1119
        %s1121 = sadd.s32 %s1116, 2
        %s1122 = scalar_select %p1120, %s1121, %s1116
        %p1123 = scmp.lt.s32.totalorder %s1122, 1
        %s1124 = scalar_select %p1123, %s1122, 1
        %s1125 = smul.addr %s1124, 4
        %s1126 = smul.addr %s1125, 4
        %s1127 = scalar_lea.vmem %s8, %s1126
        %p1128 = scmp.lt.s32.totalorder %s38, 0
        %s1129 = ssub.s32 0, %s38
        %s1130 = scalar_select %p1128, %s1129, %s38
        %s1131 = sand.u32 %s1130, 1
        %s1132 = ssub.s32 0, %s1131
        %s1133 = scalar_select %p1128, %s1132, %s1131
        %p1134 = scmp.ne.s32.totalorder %s1133, 0
        %p1135 = scmp.lt.s32.totalorder %s1133, 0
        %p1136 = pnand %p1135, %p1134
        %p1137 = pneg %p1136
        %s1138 = sadd.s32 %s1133, 2
        %s1139 = scalar_select %p1137, %s1138, %s1133
        %p1140 = scmp.lt.s32.totalorder %s38, 0
        %s1141 = ssub.s32 0, %s38
        %s1142 = scalar_select %p1140, %s1141, %s38
        %s1143 = sand.u32 %s1142, 1
        %s1144 = ssub.s32 0, %s1143
        %s1145 = scalar_select %p1140, %s1144, %s1143
        %p1146 = scmp.ne.s32.totalorder %s1145, 0
        %p1147 = scmp.lt.s32.totalorder %s1145, 0
        %p1148 = pnand %p1147, %p1146
        %p1149 = pneg %p1148
        %s1150 = sadd.s32 %s1145, 2
        %s1151 = scalar_select %p1149, %s1150, %s1145
        %p1152 = scmp.lt.s32.totalorder %s1151, 1
        %s1153 = scalar_select %p1152, %s1151, 1
        %s1154 = scalar_lea.vmem %s9, %s1153
        %p1155 = scmp.lt.s32.totalorder %s38, 0
        %s1156 = ssub.s32 0, %s38
        %s1157 = scalar_select %p1155, %s1156, %s38
        %s1158 = sand.u32 %s1157, 1
        %s1159 = ssub.s32 0, %s1158
        %s1160 = scalar_select %p1155, %s1159, %s1158
        %p1161 = scmp.ne.s32.totalorder %s1160, 0
        %p1162 = scmp.lt.s32.totalorder %s1160, 0
        %p1163 = pnand %p1162, %p1161
        %p1164 = pneg %p1163
        %s1165 = sadd.s32 %s1160, 2
        %s1166 = scalar_select %p1164, %s1165, %s1160
        %p1167 = scmp.lt.s32.totalorder %s38, 0
        %s1168 = ssub.s32 0, %s38
        %s1169 = scalar_select %p1167, %s1168, %s38
        %s1170 = sand.u32 %s1169, 1
        %s1171 = ssub.s32 0, %s1170
        %s1172 = scalar_select %p1167, %s1171, %s1170
        %p1173 = scmp.ne.s32.totalorder %s1172, 0
        %p1174 = scmp.lt.s32.totalorder %s1172, 0
        %p1175 = pnand %p1174, %p1173
        %p1176 = pneg %p1175
        %s1177 = sadd.s32 %s1172, 2
        %s1178 = scalar_select %p1176, %s1177, %s1172
        %p1179 = scmp.lt.s32.totalorder %s1178, 1
        %s1180 = scalar_select %p1179, %s1178, 1
        %s1181 = smul.addr %s1180, 4
        %s1182 = smul.addr %s1181, 4
        %s1183 = scalar_lea.vmem %s10, %s1182
        %p1184 = scmp.lt.s32.totalorder %s38, 0
        %s1185 = ssub.s32 0, %s38
        %s1186 = scalar_select %p1184, %s1185, %s38
        %s1187 = sand.u32 %s1186, 1
        %s1188 = ssub.s32 0, %s1187
        %s1189 = scalar_select %p1184, %s1188, %s1187
        %p1190 = scmp.ne.s32.totalorder %s1189, 0
        %p1191 = scmp.lt.s32.totalorder %s1189, 0
        %p1192 = pnand %p1191, %p1190
        %p1193 = pneg %p1192
        %s1194 = sadd.s32 %s1189, 2
        %s1195 = scalar_select %p1193, %s1194, %s1189
        %p1196 = scmp.lt.s32.totalorder %s38, 0
        %s1197 = ssub.s32 0, %s38
        %s1198 = scalar_select %p1196, %s1197, %s38
        %s1199 = sand.u32 %s1198, 1
        %s1200 = ssub.s32 0, %s1199
        %s1201 = scalar_select %p1196, %s1200, %s1199
        %p1202 = scmp.ne.s32.totalorder %s1201, 0
        %p1203 = scmp.lt.s32.totalorder %s1201, 0
        %p1204 = pnand %p1203, %p1202
        %p1205 = pneg %p1204
        %s1206 = sadd.s32 %s1201, 2
        %s1207 = scalar_select %p1205, %s1206, %s1201
        %p1208 = scmp.lt.s32.totalorder %s38, 0
        %s1209 = ssub.s32 0, %s38
        %s1210 = scalar_select %p1208, %s1209, %s38
        %s1211 = sand.u32 %s1210, 1
        %s1212 = ssub.s32 0, %s1211
        %s1213 = scalar_select %p1208, %s1212, %s1211
        %p1214 = scmp.ne.s32.totalorder %s1213, 0
        %p1215 = scmp.lt.s32.totalorder %s1213, 0
        %p1216 = pnand %p1215, %p1214
        %p1217 = pneg %p1216
        %s1218 = sadd.s32 %s1213, 2
        %s1219 = scalar_select %p1217, %s1218, %s1213
        %p1220 = scmp.lt.s32.totalorder %s1219, 1
        %s1221 = scalar_select %p1220, %s1219, 1
        %s1222 = scalar_lea.vmem %s12, %s1221
        %p1223 = scmp.lt.s32.totalorder %s38, 0
        %s1224 = ssub.s32 0, %s38
        %s1225 = scalar_select %p1223, %s1224, %s38
        %s1226 = sand.u32 %s1225, 1
        %s1227 = ssub.s32 0, %s1226
        %s1228 = scalar_select %p1223, %s1227, %s1226
        %p1229 = scmp.ne.s32.totalorder %s1228, 0
        %p1230 = scmp.lt.s32.totalorder %s1228, 0
        %p1231 = pnand %p1230, %p1229
        %p1232 = pneg %p1231
        %s1233 = sadd.s32 %s1228, 2
        %s1234 = scalar_select %p1232, %s1233, %s1228
        %p1235 = scmp.lt.s32.totalorder %s38, 0
        %s1236 = ssub.s32 0, %s38
        %s1237 = scalar_select %p1235, %s1236, %s38
        %s1238 = sand.u32 %s1237, 1
        %s1239 = ssub.s32 0, %s1238
        %s1240 = scalar_select %p1235, %s1239, %s1238
        %p1241 = scmp.ne.s32.totalorder %s1240, 0
        %p1242 = scmp.lt.s32.totalorder %s1240, 0
        %p1243 = pnand %p1242, %p1241
        %p1244 = pneg %p1243
        %s1245 = sadd.s32 %s1240, 2
        %s1246 = scalar_select %p1244, %s1245, %s1240
        %p1247 = scmp.lt.s32.totalorder %s1246, 1
        %s1248 = scalar_select %p1247, %s1246, 1
        %s1249 = smul.addr %s1248, 8
        %s1250 = smul.addr %s1249, 4
        %s1251 = scalar_lea.vmem %s13, %s1250
        %p1252 = scmp.lt.s32.totalorder %s38, 0
        %s1253 = ssub.s32 0, %s38
        %s1254 = scalar_select %p1252, %s1253, %s38
        %s1255 = sand.u32 %s1254, 1
        %s1256 = ssub.s32 0, %s1255
        %s1257 = scalar_select %p1252, %s1256, %s1255
        %p1258 = scmp.ne.s32.totalorder %s1257, 0
        %p1259 = scmp.lt.s32.totalorder %s1257, 0
        %p1260 = pnand %p1259, %p1258
        %p1261 = pneg %p1260
        %s1262 = sadd.s32 %s1257, 2
        %s1263 = scalar_select %p1261, %s1262, %s1257
        %s1264 = smul.u32 2, %s37
        %s1265 = smul.u32 2, %s37
        %p1267 = scmp.eq.s32.totalorder %s38, 0
        // Predicated region
        $region109: #{tpu_custom_call.1} parent=75 // pred_check
          %p1268 = pneg %p1267
        $region110: #{tpu_custom_call.1} parent=75 // pred_check_branch
          %1270 = sbr.rel (%p1268) target = $region112
        $region111: #{tpu_custom_call.1} parent=75 // pred_region
          %v1271 = vld [vmem:[%s1097] sm:$0xff]
          %v1272 = vld [vmem:[%s1097 + $0x8] sm:$0xff]
          %v1273 = vld [vmem:[%s1097 + $0x10] sm:$0xff]
          %v1274 = vld [vmem:[%s1097 + $0x18] sm:$0xff]
          %v1275 = vpack.c.bf16 %v1272, %v1271
          %v1276 = vpack.c.bf16 %v1274, %v1273
          %v1277 = vld [vmem:[#allocation6] sm:$0xf]
          %v1278 = vld [vmem:[#allocation6 + $0x4] sm:$0xf]
          %v1279 = vld [vmem:[#allocation6 + $0x8] sm:$0xf]
          %v1280 = vld [vmem:[#allocation6 + $0xc] sm:$0xf]
          %v1281 = vld [vmem:[#allocation8] sm:$0x1]
          %v1282 = vlaneseq
          %v1283 = vshrl.u32 %v1282, 7
          %v1284 = vsub.s32 0, %v1283
          %v1285 = vrot.slane %v1281, %v1284
          %v1290 = vunpack.c.l.b16 %v1277
          %v1291 = vunpack.c.l.b16 %v1278
          %v1292 = vunpack.c.l.b16 %v1279
          %v1293 = vunpack.c.l.b16 %v1280
          %v1294 = vpack.c.b16 %v1291, %v1290
          %v1295 = vpack.c.b16 %v1293, %v1292
          %vm1298 = vcmask 261120
          %v1300 = vsel %vm1298, %v1275, 0
          %v1303 = vsel %vm1298, %v1276, 0
          %1305 = vmatprep.subr.bf16.mxu0 0
          %1306 = vmatpush1.bf16.msra.mxu0 0
          %1307 = vmatprep.subr.bf16.mxu0 0
          %1308 = vmatpush1.bf16.msra.mxu0 0
          %1309 = vmatprep.subr.bf16.mxu0 0
          %1310 = vmatpush1.bf16.msra.mxu0 0
          %1311 = vmatprep.subr.bf16.mxu0 0
          %1312 = vmatpush1.bf16.msra.mxu0 0
          %1313 = vmatprep.subr.bf16.mxu0 0
          %1314 = vmatpush1.bf16.msra.mxu0 0
          %1315 = vmatprep.subr.bf16.mxu0 0
          %1316 = vmatpush1.bf16.msra.mxu0 0
          %1317 = vmatprep.subr.bf16.mxu0 0
          %1318 = vmatpush1.bf16.msra.mxu0 %v1295
          %1319 = vmatprep.subr.bf16.mxu0 0
          %1320 = vmatpush1.bf16.msra.mxu0 %v1294
          %1321 = vmatprep.subr.bf16.mxu0 0
          %1322 = vmatpush2.bf16.msra.mxu0 0
          %1323 = vmatprep.subr.bf16.mxu0 0
          %1324 = vmatpush2.bf16.msra.mxu0 0
          %1325 = vmatprep.subr.bf16.mxu0 0
          %1326 = vmatpush2.bf16.msra.mxu0 0
          %1327 = vmatprep.subr.bf16.mxu0 0
          %1328 = vmatpush2.bf16.msra.mxu0 0
          %1329 = vmatprep.subr.bf16.mxu0 0
          %1330 = vmatpush2.bf16.msra.mxu0 0
          %1331 = vmatprep.subr.bf16.mxu0 0
          %1332 = vmatpush2.bf16.msra.mxu0 0
          %1333 = vmatprep.subr.bf16.mxu0 0
          %1334 = vmatpush2.bf16.msra.mxu0 0
          %1335 = vmatprep.subr.bf16.mxu0 0
          %1336 = vmatpush2.bf16.msra.mxu0 0
          %1337 = vmatprep.mubr.bf16.mxu0 0
          %1338 = vmatmul.mubr.bf16.gmra.mxu0 %v1300
          %v1339 = vpop.f32.mrf.mxu0
          %v1340 = vadd.f32 %v1285, %v1339
          %v1341 = vpop.f32.mrf.mxu0
          %v1342 = vpop.f32.mrf.mxu0
          %v1343 = vadd.f32 %v1285, %v1342
          %v1344 = vpop.f32.mrf.mxu0
          %1345 = vmatprep.mubr.bf16.mxu0 0
          %1346 = vmatmul.mubr.bf16.gmra.mxu0 %v1303
          %v1347 = vpop.f32.mrf.mxu0
          %v1348 = vadd.f32 %v1285, %v1347
          %v1349 = vpop.f32.mrf.mxu0
          %v1350 = vpop.f32.mrf.mxu0
          %v1351 = vadd.f32 %v1285, %v1350
          %v1352 = vpop.f32.mrf.mxu0
          %1353 = vdwg.mxu0
          %v1354 = vld [vmem:[#allocation3] sm:$0xff]
          %1355 = vst.msk [vmem:[#allocation2] sm:$0xff] %vm1298, %v1340
          %1356 = vst.msk [vmem:[#allocation2 + $0x8] sm:$0xff] %vm1298, %v1343
          %1357 = vst.msk [vmem:[#allocation2 + $0x10] sm:$0xff] %vm1298, %v1354
          %1358 = vst.msk [vmem:[#allocation2 + $0x18] sm:$0xff] %vm1298, %v1348
          %1359 = vst.msk [vmem:[#allocation2 + $0x20] sm:$0xff] %vm1298, %v1351
          %1360 = vst.msk [vmem:[#allocation2 + $0x28] sm:$0xff] %vm1298, %v1354
        $region112: #{tpu_custom_call.1} parent=75 // pred_fallthru
          _
        %v1361 = vld [vmem:[%s949] sm:$0xff]
        %v1362 = vld [vmem:[%s1127] sm:$0xf]
        %v1363 = vld [vmem:[%s1127 + $0x4] sm:$0xf]
        %v1364 = vld [vmem:[%s1127 + $0x8] sm:$0xf]
        %v1365 = vld [vmem:[%s1127 + $0xc] sm:$0xf]
        %v1366 = vld [vmem:[%s1154] sm:$0x1]
        %v1367 = vld [vmem:[%s1183] sm:$0xf]
        %v1368 = vld [vmem:[%s1183 + $0x4] sm:$0xf]
        %v1369 = vld [vmem:[%s1183 + $0x8] sm:$0xf]
        %v1370 = vld [vmem:[%s1183 + $0xc] sm:$0xf]
        %v1371 = vld [vmem:[%s958] sm:$0xf]
        %v1372 = vld [vmem:[%s958 + $0x4] sm:$0xf]
        %v1373 = vld [vmem:[%s958 + $0x8] sm:$0xf]
        %v1374 = vld [vmem:[%s958 + $0xc] sm:$0xf]
        %v1375 = vld [vmem:[%s1222] sm:$0x1]
        %v1376 = vld [vmem:[%s1251] sm:$0xf]
        %v1377 = vld [vmem:[%s1251 + $0x4] sm:$0xf]
        %v1378 = vld [vmem:[%s1251 + $0x8] sm:$0xf]
        %v1379 = vld [vmem:[%s1251 + $0xc] sm:$0xf]
        %v1380 = vld [vmem:[%s1251 + $0x10] sm:$0xf]
        %v1381 = vld [vmem:[%s1251 + $0x14] sm:$0xf]
        %v1382 = vld [vmem:[%s1251 + $0x18] sm:$0xf]
        %v1383 = vld [vmem:[%s1251 + $0x1c] sm:$0xf]
        %v1384 = vld [vmem:[#allocation2] sm:$0xff]
        %v1385 = vld [vmem:[#allocation2 + $0x8] sm:$0xff]
        %v1386 = vld [vmem:[#allocation2 + $0x10] sm:$0xff]
        %v1387 = vld [vmem:[#allocation2 + $0x18] sm:$0xff]
        %v1388 = vld [vmem:[#allocation2 + $0x20] sm:$0xff]
        %v1389 = vld [vmem:[#allocation2 + $0x28] sm:$0xff]
        %vm1390 = vcmask 261120
        %v1391 = vsel %vm1390, %v1384, 0.0
        %1392 = vadd.xlane.f32.xlu0 %v1391
        %v1393 = vpop.xlane.xlu0 %1392
        %v1394 = vsel %vm1390, %v1385, 0.0
        %1395 = vadd.xlane.f32.xlu0 %v1394
        %v1396 = vpop.xlane.xlu0 %1395
        %v1397 = vsel %vm1390, %v1386, 0.0
        %1398 = vadd.xlane.f32.xlu0 %v1397
        %v1399 = vpop.xlane.xlu0 %1398
        %v1400 = vsel %vm1390, %v1387, 0.0
        %1401 = vadd.xlane.f32.xlu0 %v1400
        %v1402 = vpop.xlane.xlu0 %1401
        %v1403 = vsel %vm1390, %v1388, 0.0
        %1404 = vadd.xlane.f32.xlu0 %v1403
        %v1405 = vpop.xlane.xlu0 %1404
        %v1406 = vsel %vm1390, %v1389, 0.0
        %1407 = vadd.xlane.f32.xlu0 %v1406
        %v1408 = vpop.xlane.xlu0 %1407
        %v1409 = vrcp.pop 32.0
        %v1410 = vmul.f32 %v1393, %v1409
        %v1411 = vmul.f32 %v1396, %v1409
        %v1412 = vmul.f32 %v1399, %v1409
        %v1413 = vmul.f32 %v1402, %v1409
        %v1414 = vmul.f32 %v1405, %v1409
        %v1415 = vmul.f32 %v1408, %v1409
        %v1416 = vsub.f32 %v1384, %v1410
        %v1417 = vsub.f32 %v1385, %v1411
        %v1418 = vsub.f32 %v1386, %v1412
        %v1419 = vsub.f32 %v1387, %v1413
        %v1420 = vsub.f32 %v1388, %v1414
        %v1421 = vsub.f32 %v1389, %v1415
        %v1422 = vmul.f32 %v1416, %v1416
        %v1423 = vmul.f32 %v1417, %v1417
        %v1424 = vmul.f32 %v1418, %v1418
        %v1425 = vmul.f32 %v1419, %v1419
        %v1426 = vmul.f32 %v1420, %v1420
        %v1427 = vmul.f32 %v1421, %v1421
        %v1428 = vsel %vm1390, %v1422, 0.0
        %1429 = vadd.xlane.f32.xlu0 %v1428
        %v1430 = vpop.xlane.xlu0 %1429
        %v1431 = vsel %vm1390, %v1423, 0.0
        %1432 = vadd.xlane.f32.xlu0 %v1431
        %v1433 = vpop.xlane.xlu0 %1432
        %v1434 = vsel %vm1390, %v1424, 0.0
        %1435 = vadd.xlane.f32.xlu0 %v1434
        %v1436 = vpop.xlane.xlu0 %1435
        %v1437 = vsel %vm1390, %v1425, 0.0
        %1438 = vadd.xlane.f32.xlu0 %v1437
        %v1439 = vpop.xlane.xlu0 %1438
        %v1440 = vsel %vm1390, %v1426, 0.0
        %1441 = vadd.xlane.f32.xlu0 %v1440
        %v1442 = vpop.xlane.xlu0 %1441
        %v1443 = vsel %vm1390, %v1427, 0.0
        %1444 = vadd.xlane.f32.xlu0 %v1443
        %v1445 = vpop.xlane.xlu0 %1444
        %v1446 = vmul.f32 %v1430, %v1409
        %v1447 = vmul.f32 %v1433, %v1409
        %v1448 = vmul.f32 %v1436, %v1409
        %v1449 = vmul.f32 %v1439, %v1409
        %v1450 = vmul.f32 %v1442, %v1409
        %v1451 = vmul.f32 %v1445, %v1409
        %v1452 = vadd.f32 %v1446, 1e-05
        %v1453 = vadd.f32 %v1447, 1e-05
        %v1454 = vadd.f32 %v1448, 1e-05
        %v1455 = vadd.f32 %v1449, 1e-05
        %v1456 = vadd.f32 %v1450, 1e-05
        %v1457 = vadd.f32 %v1451, 1e-05
        %v1458 = vrsqrt.pop %v1452
        %v1459 = vrsqrt.pop %v1453
        %v1460 = vrsqrt.pop %v1454
        %v1461 = vrsqrt.pop %v1455
        %v1462 = vrsqrt.pop %v1456
        %v1463 = vrsqrt.pop %v1457
        %v1464 = vmul.f32 %v1416, %v1458
        %v1465 = vmul.f32 %v1417, %v1459
        %v1466 = vmul.f32 %v1418, %v1460
        %v1467 = vmul.f32 %v1419, %v1461
        %v1468 = vmul.f32 %v1420, %v1462
        %v1469 = vmul.f32 %v1421, %v1463
        %v1470 = vlaneseq
        %v1471 = vshrl.u32 %v1470, 7
        %v1472 = vsub.s32 0, %v1471
        %v1473 = vrot.slane %v1361, %v1472
        %v1474 = vmul.f32 %v1464, %v1473
        %v1475 = vmul.f32 %v1465, %v1473
        %v1476 = vmul.f32 %v1466, %v1473
        %v1477 = vmul.f32 %v1467, %v1473
        %v1478 = vmul.f32 %v1468, %v1473
        %v1479 = vmul.f32 %v1469, %v1473
        %v1480 = vlaneseq
        %v1481 = vshrl.u32 %v1480, 7
        %v1482 = vsub.s32 1, %v1481
        %v1483 = vrot.slane %v1361, %v1482
        %v1484 = vadd.f32 %v1474, %v1483
        %v1485 = vadd.f32 %v1475, %v1483
        %v1486 = vadd.f32 %v1476, %v1483
        %v1487 = vadd.f32 %v1477, %v1483
        %v1488 = vadd.f32 %v1478, %v1483
        %v1489 = vadd.f32 %v1479, %v1483
        %v1490 = vpack.c.bf16 %v1485, %v1484
        %v1491 = vpack.c.bf16 %v1487, %v1486
        %v1492 = vpack.c.bf16 %v1489, %v1488
        %v1494 = vlaneseq
        %v1495 = vshrl.u32 %v1494, 7
        %v1496 = vsub.s32 0, %v1495
        %v1497 = vrot.slane %v1366, %v1496
        %v1503 = vunpack.c.l.b16 %v1362
        %v1504 = vunpack.c.l.b16 %v1363
        %v1505 = vunpack.c.l.b16 %v1364
        %v1506 = vunpack.c.l.b16 %v1365
        %v1507 = vpack.c.b16 %v1504, %v1503
        %v1508 = vpack.c.b16 %v1506, %v1505
        %v1512 = vsel %vm1390, %v1490, 0
        %v1515 = vsel %vm1390, %v1491, 0
        %v1518 = vsel %vm1390, %v1492, 0
        %1520 = vmatprep.subr.bf16.mxu0 0
        %1521 = vmatpush1.bf16.msra.mxu0 0
        %1522 = vmatprep.subr.bf16.mxu0 0
        %1523 = vmatpush1.bf16.msra.mxu0 0
        %1524 = vmatprep.subr.bf16.mxu0 0
        %1525 = vmatpush1.bf16.msra.mxu0 0
        %1526 = vmatprep.subr.bf16.mxu0 0
        %1527 = vmatpush1.bf16.msra.mxu0 0
        %1528 = vmatprep.subr.bf16.mxu0 0
        %1529 = vmatpush1.bf16.msra.mxu0 0
        %1530 = vmatprep.subr.bf16.mxu0 0
        %1531 = vmatpush1.bf16.msra.mxu0 0
        %1532 = vmatprep.subr.bf16.mxu0 0
        %1533 = vmatpush1.bf16.msra.mxu0 %v1508
        %1534 = vmatprep.subr.bf16.mxu0 0
        %1535 = vmatpush1.bf16.msra.mxu0 %v1507
        %1536 = vmatprep.subr.bf16.mxu0 0
        %1537 = vmatpush2.bf16.msra.mxu0 0
        %1538 = vmatprep.subr.bf16.mxu0 0
        %1539 = vmatpush2.bf16.msra.mxu0 0
        %1540 = vmatprep.subr.bf16.mxu0 0
        %1541 = vmatpush2.bf16.msra.mxu0 0
        %1542 = vmatprep.subr.bf16.mxu0 0
        %1543 = vmatpush2.bf16.msra.mxu0 0
        %1544 = vmatprep.subr.bf16.mxu0 0
        %1545 = vmatpush2.bf16.msra.mxu0 0
        %1546 = vmatprep.subr.bf16.mxu0 0
        %1547 = vmatpush2.bf16.msra.mxu0 0
        %1548 = vmatprep.subr.bf16.mxu0 0
        %1549 = vmatpush2.bf16.msra.mxu0 0
        %1550 = vmatprep.subr.bf16.mxu0 0
        %1551 = vmatpush2.bf16.msra.mxu0 0
        %1552 = vmatprep.mubr.bf16.mxu0 0
        %1553 = vmatmul.mubr.bf16.gmra.mxu0 %v1512
        %v1554 = vpop.f32.mrf.mxu0
        %v1555 = vadd.f32 %v1497, %v1554
        %v1556 = vpop.f32.mrf.mxu0
        %v1557 = vpop.f32.mrf.mxu0
        %v1558 = vadd.f32 %v1497, %v1557
        %v1559 = vpop.f32.mrf.mxu0
        %1560 = vmatprep.mubr.bf16.mxu0 0
        %1561 = vmatmul.mubr.bf16.gmra.mxu0 %v1515
        %v1562 = vpop.f32.mrf.mxu0
        %v1563 = vadd.f32 %v1497, %v1562
        %v1564 = vpop.f32.mrf.mxu0
        %v1565 = vpop.f32.mrf.mxu0
        %v1566 = vadd.f32 %v1497, %v1565
        %v1567 = vpop.f32.mrf.mxu0
        %1568 = vmatprep.mubr.bf16.mxu0 0
        %1569 = vmatmul.mubr.bf16.gmra.mxu0 %v1518
        %v1570 = vpop.f32.mrf.mxu0
        %v1571 = vadd.f32 %v1497, %v1570
        %v1572 = vpop.f32.mrf.mxu0
        %v1573 = vpop.f32.mrf.mxu0
        %v1574 = vadd.f32 %v1497, %v1573
        %v1575 = vpop.f32.mrf.mxu0
        %1576 = vdwg.mxu0
        %v1577 = vpack.c.bf16 %v1558, %v1555
        %v1578 = vpack.c.bf16 %v1566, %v1563
        %v1579 = vpack.c.bf16 %v1574, %v1571
        %v1583 = vunpack.c.l.b16 %v1577
        %v1584 = vunpack.c.h.b16 %v1577
        %v1585 = vunpack.c.l.b16 %v1578
        %v1586 = vunpack.c.h.b16 %v1578
        %v1587 = vunpack.c.l.b16 %v1579
        %v1588 = vunpack.c.h.b16 %v1579
        %v1589 = vpack.c.b16 %v1584, %v1583
        %v1590 = vpack.c.b16 %v1585, %v1585
        %1591 = vrot.lane.b32.xlu0 %v1589, 96
        %v1592 = vpop.permute.xlu0 %1591
        %1593 = vrot.lane.b32.xlu0 %v1590, 96
        %v1594 = vpop.permute.xlu0 %1593
        %vm1595 = vcmask 130048
        %v1597 = vsel %vm1595, %v1589, 0
        %v1600 = vsel %vm1595, %v1590, 0
        %v1603 = vsel %vm1595, %v1592, 0
        %v1606 = vsel %vm1595, %v1594, 0
        %1608 = vmatprep.subr.bf16.mxu0 0
        %1609 = vmatpush1.bf16.xpose.msra.mxu0 0
        %1610 = vmatprep.subr.bf16.mxu0 0
        %1611 = vmatpush1.bf16.xpose.msra.mxu0 0
        %1612 = vmatprep.subr.bf16.mxu0 0
        %1613 = vmatpush1.bf16.xpose.msra.mxu0 0
        %1614 = vmatprep.subr.bf16.mxu0 0
        %1615 = vmatpush1.bf16.xpose.msra.mxu0 0
        %1616 = vmatprep.subr.bf16.mxu0 0
        %1617 = vmatpush1.bf16.xpose.msra.mxu0 0
        %1618 = vmatprep.subr.bf16.mxu0 0
        %1619 = vmatpush1.bf16.xpose.msra.mxu0 0
        %1620 = vmatprep.subr.bf16.mxu0 0
        %1621 = vmatpush1.bf16.xpose.msra.mxu0 %v1606
        %1622 = vmatprep.subr.bf16.mxu0 0
        %1623 = vmatpush1.bf16.xpose.msra.mxu0 %v1603
        %1624 = vmatprep.subr.bf16.mxu0 0
        %1625 = vmatpush2.bf16.xpose.msra.mxu0 0
        %1626 = vmatprep.subr.bf16.mxu0 0
        %1627 = vmatpush2.bf16.xpose.msra.mxu0 0
        %1628 = vmatprep.subr.bf16.mxu0 0
        %1629 = vmatpush2.bf16.xpose.msra.mxu0 0
        %1630 = vmatprep.subr.bf16.mxu0 0
        %1631 = vmatpush2.bf16.xpose.msra.mxu0 0
        %1632 = vmatprep.subr.bf16.mxu0 0
        %1633 = vmatpush2.bf16.xpose.msra.mxu0 0
        %1634 = vmatprep.subr.bf16.mxu0 0
        %1635 = vmatpush2.bf16.xpose.msra.mxu0 0
        %1636 = vmatprep.subr.bf16.mxu0 0
        %1637 = vmatpush2.bf16.xpose.msra.mxu0 0
        %1638 = vmatprep.subr.bf16.mxu0 0
        %1639 = vmatpush2.bf16.xpose.msra.mxu0 0
        %1640 = vmatprep.mubr.bf16.mxu0 0
        %1641 = vmatmul.mubr.bf16.gmra.mxu0 %v1597
        %v1642 = vpop.f32.mrf.mxu0
        %v1643 = vadd.f32 0.0, %v1642
        %v1644 = vpop.f32.mrf.mxu0
        %v1645 = vpop.f32.mrf.mxu0
        %v1646 = vadd.f32 0.0, %v1645
        %v1647 = vpop.f32.mrf.mxu0
        %1648 = vmatprep.mubr.bf16.mxu0 0
        %1649 = vmatmul.mubr.bf16.gmra.mxu0 %v1600
        %v1650 = vpop.f32.mrf.mxu0
        %v1651 = vadd.f32 0.0, %v1650
        %v1652 = vpop.f32.mrf.mxu0
        %v1653 = vpop.f32.mrf.mxu0
        %v1654 = vpop.f32.mrf.mxu0
        %1655 = vdwg.mxu0
        %v1656 = vpack.c.b16 %v1587, %v1586
        %v1657 = vpack.c.b16 %v1588, %v1588
        %1658 = vrot.lane.b32.xlu0 %v1656, 96
        %v1659 = vpop.permute.xlu0 %1658
        %1660 = vrot.lane.b32.xlu0 %v1657, 96
        %v1661 = vpop.permute.xlu0 %1660
        %v1663 = vsel %vm1595, %v1656, 0
        %v1666 = vsel %vm1595, %v1657, 0
        %v1669 = vsel %vm1595, %v1659, 0
        %v1672 = vsel %vm1595, %v1661, 0
        %1674 = vmatprep.subr.bf16.mxu0 0
        %1675 = vmatpush1.bf16.xpose.msra.mxu0 0
        %1676 = vmatprep.subr.bf16.mxu0 0
        %1677 = vmatpush1.bf16.xpose.msra.mxu0 0
        %1678 = vmatprep.subr.bf16.mxu0 0
        %1679 = vmatpush1.bf16.xpose.msra.mxu0 0
        %1680 = vmatprep.subr.bf16.mxu0 0
        %1681 = vmatpush1.bf16.xpose.msra.mxu0 0
        %1682 = vmatprep.subr.bf16.mxu0 0
        %1683 = vmatpush1.bf16.xpose.msra.mxu0 0
        %1684 = vmatprep.subr.bf16.mxu0 0
        %1685 = vmatpush1.bf16.xpose.msra.mxu0 0
        %1686 = vmatprep.subr.bf16.mxu0 0
        %1687 = vmatpush1.bf16.xpose.msra.mxu0 %v1672
        %1688 = vmatprep.subr.bf16.mxu0 0
        %1689 = vmatpush1.bf16.xpose.msra.mxu0 %v1669
        %1690 = vmatprep.subr.bf16.mxu0 0
        %1691 = vmatpush2.bf16.xpose.msra.mxu0 0
        %1692 = vmatprep.subr.bf16.mxu0 0
        %1693 = vmatpush2.bf16.xpose.msra.mxu0 0
        %1694 = vmatprep.subr.bf16.mxu0 0
        %1695 = vmatpush2.bf16.xpose.msra.mxu0 0
        %1696 = vmatprep.subr.bf16.mxu0 0
        %1697 = vmatpush2.bf16.xpose.msra.mxu0 0
        %1698 = vmatprep.subr.bf16.mxu0 0
        %1699 = vmatpush2.bf16.xpose.msra.mxu0 0
        %1700 = vmatprep.subr.bf16.mxu0 0
        %1701 = vmatpush2.bf16.xpose.msra.mxu0 0
        %1702 = vmatprep.subr.bf16.mxu0 0
        %1703 = vmatpush2.bf16.xpose.msra.mxu0 0
        %1704 = vmatprep.subr.bf16.mxu0 0
        %1705 = vmatpush2.bf16.xpose.msra.mxu0 0
        %1706 = vmatprep.mubr.bf16.mxu0 0
        %1707 = vmatmul.mubr.bf16.gmra.mxu0 %v1663
        %v1708 = vpop.f32.mrf.mxu0
        %v1709 = vadd.f32 0.0, %v1708
        %v1710 = vpop.f32.mrf.mxu0
        %v1711 = vpop.f32.mrf.mxu0
        %v1712 = vadd.f32 0.0, %v1711
        %v1713 = vpop.f32.mrf.mxu0
        %1714 = vmatprep.mubr.bf16.mxu0 0
        %1715 = vmatmul.mubr.bf16.gmra.mxu0 %v1666
        %v1716 = vpop.f32.mrf.mxu0
        %v1717 = vadd.f32 0.0, %v1716
        %v1718 = vpop.f32.mrf.mxu0
        %v1719 = vpop.f32.mrf.mxu0
        %v1720 = vpop.f32.mrf.mxu0
        %1721 = vdwg.mxu0
        %vm1722 = vcmask 195584
        %v1723 = vsel %vm1722, %v1643, -inf
        %1724 = vmax.xlane.f32.xlu0 %v1723
        %v1725 = vpop.xlane.xlu0 %1724
        %v1726 = vsel %vm1722, %v1646, -inf
        %1727 = vmax.xlane.f32.xlu0 %v1726
        %v1728 = vpop.xlane.xlu0 %1727
        %v1729 = vsel %vm1722, %v1651, -inf
        %1730 = vmax.xlane.f32.xlu0 %v1729
        %v1731 = vpop.xlane.xlu0 %1730
        %v1732 = vsel %vm1722, %v1709, -inf
        %1733 = vmax.xlane.f32.xlu0 %v1732
        %v1734 = vpop.xlane.xlu0 %1733
        %v1735 = vsel %vm1722, %v1712, -inf
        %1736 = vmax.xlane.f32.xlu0 %v1735
        %v1737 = vpop.xlane.xlu0 %1736
        %v1738 = vsel %vm1722, %v1717, -inf
        %1739 = vmax.xlane.f32.xlu0 %v1738
        %v1740 = vpop.xlane.xlu0 %1739
        %v1741 = vsub.f32 %v1643, %v1725
        %v1742 = vsub.f32 %v1646, %v1728
        %v1743 = vsub.f32 %v1651, %v1731
        %v1744 = vsub.f32 %v1709, %v1734
        %v1745 = vsub.f32 %v1712, %v1737
        %v1746 = vsub.f32 %v1717, %v1740
        %v1747 = vmul.f32 %v1741, 1.442695
        %v1748 = vpow.pop %v1747
        %v1749 = vmul.f32 %v1742, 1.442695
        %v1750 = vpow.pop %v1749
        %v1751 = vmul.f32 %v1743, 1.442695
        %v1752 = vpow.pop %v1751
        %v1753 = vmul.f32 %v1744, 1.442695
        %v1754 = vpow.pop %v1753
        %v1755 = vmul.f32 %v1745, 1.442695
        %v1756 = vpow.pop %v1755
        %v1757 = vmul.f32 %v1746, 1.442695
        %v1758 = vpow.pop %v1757
        %v1759 = vsel %vm1722, %v1748, 0.0
        %1760 = vadd.xlane.f32.xlu0 %v1759
        %v1761 = vpop.xlane.xlu0 %1760
        %v1762 = vsel %vm1722, %v1750, 0.0
        %1763 = vadd.xlane.f32.xlu0 %v1762
        %v1764 = vpop.xlane.xlu0 %1763
        %v1765 = vsel %vm1722, %v1752, 0.0
        %1766 = vadd.xlane.f32.xlu0 %v1765
        %v1767 = vpop.xlane.xlu0 %1766
        %v1768 = vsel %vm1722, %v1754, 0.0
        %1769 = vadd.xlane.f32.xlu0 %v1768
        %v1770 = vpop.xlane.xlu0 %1769
        %v1771 = vsel %vm1722, %v1756, 0.0
        %1772 = vadd.xlane.f32.xlu0 %v1771
        %v1773 = vpop.xlane.xlu0 %1772
        %v1774 = vsel %vm1722, %v1758, 0.0
        %1775 = vadd.xlane.f32.xlu0 %v1774
        %v1776 = vpop.xlane.xlu0 %1775
        %v1777 = vrcp.pop %v1761
        %v1778 = vrcp.pop %v1764
        %v1779 = vrcp.pop %v1767
        %v1780 = vrcp.pop %v1770
        %v1781 = vrcp.pop %v1773
        %v1782 = vrcp.pop %v1776
        %v1783 = vmul.f32 %v1748, %v1777
        %v1784 = vmul.f32 %v1750, %v1778
        %v1785 = vmul.f32 %v1752, %v1779
        %v1786 = vmul.f32 %v1754, %v1780
        %v1787 = vmul.f32 %v1756, %v1781
        %v1788 = vmul.f32 %v1758, %v1782
        %v1789 = vpack.c.bf16 %v1784, %v1783
        %v1790 = vpack.c.bf16 %v1785, %v1785
        %v1791 = vpack.c.bf16 %v1787, %v1786
        %v1792 = vpack.c.bf16 %v1788, %v1788
        %1793 = vrot.lane.b32.xlu0 %v1589, 64
        %v1794 = vpop.permute.xlu0 %1793
        %1795 = vrot.lane.b32.xlu0 %v1590, 64
        %v1796 = vpop.permute.xlu0 %1795
        %v1799 = vsel %vm1722, %v1789, 0
        %v1802 = vsel %vm1722, %v1790, 0
        %vm1804 = vcmask 1043456
        %v1806 = vsel %vm1804, %v1796, 0
        %1808 = vmatprep.subr.bf16.mxu0 0
        %1809 = vmatpush1.bf16.msra.mxu0 0
        %1810 = vmatprep.subr.bf16.mxu0 0
        %1811 = vmatpush1.bf16.msra.mxu0 0
        %1812 = vmatprep.subr.bf16.mxu0 0
        %1813 = vmatpush1.bf16.msra.mxu0 0
        %1814 = vmatprep.subr.bf16.mxu0 0
        %1815 = vmatpush1.bf16.msra.mxu0 0
        %1816 = vmatprep.subr.bf16.mxu0 0
        %1817 = vmatpush1.bf16.msra.mxu0 0
        %1818 = vmatprep.subr.bf16.mxu0 0
        %1819 = vmatpush1.bf16.msra.mxu0 0
        %1820 = vmatprep.subr.bf16.mxu0 0
        %1821 = vmatpush1.bf16.msra.mxu0 %v1806
        %1822 = vmatprep.subr.bf16.mxu0 0
        %1823 = vmatpush1.bf16.msra.mxu0 %v1794
        %1824 = vmatprep.subr.bf16.mxu0 0
        %1825 = vmatpush2.bf16.msra.mxu0 0
        %1826 = vmatprep.subr.bf16.mxu0 0
        %1827 = vmatpush2.bf16.msra.mxu0 0
        %1828 = vmatprep.subr.bf16.mxu0 0
        %1829 = vmatpush2.bf16.msra.mxu0 0
        %1830 = vmatprep.subr.bf16.mxu0 0
        %1831 = vmatpush2.bf16.msra.mxu0 0
        %1832 = vmatprep.subr.bf16.mxu0 0
        %1833 = vmatpush2.bf16.msra.mxu0 0
        %1834 = vmatprep.subr.bf16.mxu0 0
        %1835 = vmatpush2.bf16.msra.mxu0 0
        %1836 = vmatprep.subr.bf16.mxu0 0
        %1837 = vmatpush2.bf16.msra.mxu0 0
        %1838 = vmatprep.subr.bf16.mxu0 0
        %1839 = vmatpush2.bf16.msra.mxu0 0
        %1840 = vmatprep.mubr.bf16.mxu0 0
        %1841 = vmatmul.mubr.bf16.gmra.mxu0 %v1799
        %v1842 = vpop.f32.mrf.mxu0
        %v1843 = vadd.f32 0.0, %v1842
        %v1844 = vpop.f32.mrf.mxu0
        %v1845 = vpop.f32.mrf.mxu0
        %v1846 = vadd.f32 0.0, %v1845
        %v1847 = vpop.f32.mrf.mxu0
        %1848 = vmatprep.mubr.bf16.mxu0 0
        %1849 = vmatmul.mubr.bf16.gmra.mxu0 %v1802
        %v1850 = vpop.f32.mrf.mxu0
        %v1851 = vadd.f32 0.0, %v1850
        %v1852 = vpop.f32.mrf.mxu0
        %v1853 = vpop.f32.mrf.mxu0
        %v1854 = vpop.f32.mrf.mxu0
        %1855 = vdwg.mxu0
        %1856 = vrot.lane.b32.xlu0 %v1656, 64
        %v1857 = vpop.permute.xlu0 %1856
        %1858 = vrot.lane.b32.xlu0 %v1657, 64
        %v1859 = vpop.permute.xlu0 %1858
        %v1862 = vsel %vm1722, %v1791, 0
        %v1865 = vsel %vm1722, %v1792, 0
        %v1868 = vsel %vm1804, %v1859, 0
        %1870 = vmatprep.subr.bf16.mxu0 0
        %1871 = vmatpush1.bf16.msra.mxu0 0
        %1872 = vmatprep.subr.bf16.mxu0 0
        %1873 = vmatpush1.bf16.msra.mxu0 0
        %1874 = vmatprep.subr.bf16.mxu0 0
        %1875 = vmatpush1.bf16.msra.mxu0 0
        %1876 = vmatprep.subr.bf16.mxu0 0
        %1877 = vmatpush1.bf16.msra.mxu0 0
        %1878 = vmatprep.subr.bf16.mxu0 0
        %1879 = vmatpush1.bf16.msra.mxu0 0
        %1880 = vmatprep.subr.bf16.mxu0 0
        %1881 = vmatpush1.bf16.msra.mxu0 0
        %1882 = vmatprep.subr.bf16.mxu0 0
        %1883 = vmatpush1.bf16.msra.mxu0 %v1868
        %1884 = vmatprep.subr.bf16.mxu0 0
        %1885 = vmatpush1.bf16.msra.mxu0 %v1857
        %1886 = vmatprep.subr.bf16.mxu0 0
        %1887 = vmatpush2.bf16.msra.mxu0 0
        %1888 = vmatprep.subr.bf16.mxu0 0
        %1889 = vmatpush2.bf16.msra.mxu0 0
        %1890 = vmatprep.subr.bf16.mxu0 0
        %1891 = vmatpush2.bf16.msra.mxu0 0
        %1892 = vmatprep.subr.bf16.mxu0 0
        %1893 = vmatpush2.bf16.msra.mxu0 0
        %1894 = vmatprep.subr.bf16.mxu0 0
        %1895 = vmatpush2.bf16.msra.mxu0 0
        %1896 = vmatprep.subr.bf16.mxu0 0
        %1897 = vmatpush2.bf16.msra.mxu0 0
        %1898 = vmatprep.subr.bf16.mxu0 0
        %1899 = vmatpush2.bf16.msra.mxu0 0
        %1900 = vmatprep.subr.bf16.mxu0 0
        %1901 = vmatpush2.bf16.msra.mxu0 0
        %1902 = vmatprep.mubr.bf16.mxu0 0
        %1903 = vmatmul.mubr.bf16.gmra.mxu0 %v1862
        %v1904 = vpop.f32.mrf.mxu0
        %v1905 = vadd.f32 0.0, %v1904
        %v1906 = vpop.f32.mrf.mxu0
        %v1907 = vpop.f32.mrf.mxu0
        %v1908 = vadd.f32 0.0, %v1907
        %v1909 = vpop.f32.mrf.mxu0
        %1910 = vmatprep.mubr.bf16.mxu0 0
        %1911 = vmatmul.mubr.bf16.gmra.mxu0 %v1865
        %v1912 = vpop.f32.mrf.mxu0
        %v1913 = vadd.f32 0.0, %v1912
        %v1914 = vpop.f32.mrf.mxu0
        %v1915 = vpop.f32.mrf.mxu0
        %v1916 = vpop.f32.mrf.mxu0
        %1917 = vdwg.mxu0
        %1918 = vrot.lane.b32.xlu0 %v1589, 112
        %v1919 = vpop.permute.xlu0 %1918
        %1920 = vrot.lane.b32.xlu0 %v1590, 112
        %v1921 = vpop.permute.xlu0 %1920
        %1922 = vrot.lane.b32.xlu0 %v1589, 80
        %v1923 = vpop.permute.xlu0 %1922
        %1924 = vrot.lane.b32.xlu0 %v1590, 80
        %v1925 = vpop.permute.xlu0 %1924
        %v1927 = vsel %vm1595, %v1919, 0
        %v1930 = vsel %vm1595, %v1921, 0
        %v1933 = vsel %vm1595, %v1923, 0
        %v1936 = vsel %vm1595, %v1925, 0
        %1938 = vmatprep.subr.bf16.mxu0 0
        %1939 = vmatpush1.bf16.xpose.msra.mxu0 0
        %1940 = vmatprep.subr.bf16.mxu0 0
        %1941 = vmatpush1.bf16.xpose.msra.mxu0 0
        %1942 = vmatprep.subr.bf16.mxu0 0
        %1943 = vmatpush1.bf16.xpose.msra.mxu0 0
        %1944 = vmatprep.subr.bf16.mxu0 0
        %1945 = vmatpush1.bf16.xpose.msra.mxu0 0
        %1946 = vmatprep.subr.bf16.mxu0 0
        %1947 = vmatpush1.bf16.xpose.msra.mxu0 0
        %1948 = vmatprep.subr.bf16.mxu0 0
        %1949 = vmatpush1.bf16.xpose.msra.mxu0 0
        %1950 = vmatprep.subr.bf16.mxu0 0
        %1951 = vmatpush1.bf16.xpose.msra.mxu0 %v1936
        %1952 = vmatprep.subr.bf16.mxu0 0
        %1953 = vmatpush1.bf16.xpose.msra.mxu0 %v1933
        %1954 = vmatprep.subr.bf16.mxu0 0
        %1955 = vmatpush2.bf16.xpose.msra.mxu0 0
        %1956 = vmatprep.subr.bf16.mxu0 0
        %1957 = vmatpush2.bf16.xpose.msra.mxu0 0
        %1958 = vmatprep.subr.bf16.mxu0 0
        %1959 = vmatpush2.bf16.xpose.msra.mxu0 0
        %1960 = vmatprep.subr.bf16.mxu0 0
        %1961 = vmatpush2.bf16.xpose.msra.mxu0 0
        %1962 = vmatprep.subr.bf16.mxu0 0
        %1963 = vmatpush2.bf16.xpose.msra.mxu0 0
        %1964 = vmatprep.subr.bf16.mxu0 0
        %1965 = vmatpush2.bf16.xpose.msra.mxu0 0
        %1966 = vmatprep.subr.bf16.mxu0 0
        %1967 = vmatpush2.bf16.xpose.msra.mxu0 0
        %1968 = vmatprep.subr.bf16.mxu0 0
        %1969 = vmatpush2.bf16.xpose.msra.mxu0 0
        %1970 = vmatprep.mubr.bf16.mxu0 0
        %1971 = vmatmul.mubr.bf16.gmra.mxu0 %v1927
        %v1972 = vpop.f32.mrf.mxu0
        %v1973 = vadd.f32 0.0, %v1972
        %v1974 = vpop.f32.mrf.mxu0
        %v1975 = vpop.f32.mrf.mxu0
        %v1976 = vadd.f32 0.0, %v1975
        %v1977 = vpop.f32.mrf.mxu0
        %1978 = vmatprep.mubr.bf16.mxu0 0
        %1979 = vmatmul.mubr.bf16.gmra.mxu0 %v1930
        %v1980 = vpop.f32.mrf.mxu0
        %v1981 = vadd.f32 0.0, %v1980
        %v1982 = vpop.f32.mrf.mxu0
        %v1983 = vpop.f32.mrf.mxu0
        %v1984 = vpop.f32.mrf.mxu0
        %1985 = vdwg.mxu0
        %1986 = vrot.lane.b32.xlu0 %v1656, 112
        %v1987 = vpop.permute.xlu0 %1986
        %1988 = vrot.lane.b32.xlu0 %v1657, 112
        %v1989 = vpop.permute.xlu0 %1988
        %1990 = vrot.lane.b32.xlu0 %v1656, 80
        %v1991 = vpop.permute.xlu0 %1990
        %1992 = vrot.lane.b32.xlu0 %v1657, 80
        %v1993 = vpop.permute.xlu0 %1992
        %v1995 = vsel %vm1595, %v1987, 0
        %v1998 = vsel %vm1595, %v1989, 0
        %v2001 = vsel %vm1595, %v1991, 0
        %v2004 = vsel %vm1595, %v1993, 0
        %2006 = vmatprep.subr.bf16.mxu0 0
        %2007 = vmatpush1.bf16.xpose.msra.mxu0 0
        %2008 = vmatprep.subr.bf16.mxu0 0
        %2009 = vmatpush1.bf16.xpose.msra.mxu0 0
        %2010 = vmatprep.subr.bf16.mxu0 0
        %2011 = vmatpush1.bf16.xpose.msra.mxu0 0
        %2012 = vmatprep.subr.bf16.mxu0 0
        %2013 = vmatpush1.bf16.xpose.msra.mxu0 0
        %2014 = vmatprep.subr.bf16.mxu0 0
        %2015 = vmatpush1.bf16.xpose.msra.mxu0 0
        %2016 = vmatprep.subr.bf16.mxu0 0
        %2017 = vmatpush1.bf16.xpose.msra.mxu0 0
        %2018 = vmatprep.subr.bf16.mxu0 0
        %2019 = vmatpush1.bf16.xpose.msra.mxu0 %v2004
        %2020 = vmatprep.subr.bf16.mxu0 0
        %2021 = vmatpush1.bf16.xpose.msra.mxu0 %v2001
        %2022 = vmatprep.subr.bf16.mxu0 0
        %2023 = vmatpush2.bf16.xpose.msra.mxu0 0
        %2024 = vmatprep.subr.bf16.mxu0 0
        %2025 = vmatpush2.bf16.xpose.msra.mxu0 0
        %2026 = vmatprep.subr.bf16.mxu0 0
        %2027 = vmatpush2.bf16.xpose.msra.mxu0 0
        %2028 = vmatprep.subr.bf16.mxu0 0
        %2029 = vmatpush2.bf16.xpose.msra.mxu0 0
        %2030 = vmatprep.subr.bf16.mxu0 0
        %2031 = vmatpush2.bf16.xpose.msra.mxu0 0
        %2032 = vmatprep.subr.bf16.mxu0 0
        %2033 = vmatpush2.bf16.xpose.msra.mxu0 0
        %2034 = vmatprep.subr.bf16.mxu0 0
        %2035 = vmatpush2.bf16.xpose.msra.mxu0 0
        %2036 = vmatprep.subr.bf16.mxu0 0
        %2037 = vmatpush2.bf16.xpose.msra.mxu0 0
        %2038 = vmatprep.mubr.bf16.mxu0 0
        %2039 = vmatmul.mubr.bf16.gmra.mxu0 %v1995
        %v2040 = vpop.f32.mrf.mxu0
        %v2041 = vadd.f32 0.0, %v2040
        %v2042 = vpop.f32.mrf.mxu0
        %v2043 = vpop.f32.mrf.mxu0
        %v2044 = vadd.f32 0.0, %v2043
        %v2045 = vpop.f32.mrf.mxu0
        %2046 = vmatprep.mubr.bf16.mxu0 0
        %2047 = vmatmul.mubr.bf16.gmra.mxu0 %v1998
        %v2048 = vpop.f32.mrf.mxu0
        %v2049 = vadd.f32 0.0, %v2048
        %v2050 = vpop.f32.mrf.mxu0
        %v2051 = vpop.f32.mrf.mxu0
        %v2052 = vpop.f32.mrf.mxu0
        %2053 = vdwg.mxu0
        %v2054 = vsel %vm1722, %v1973, -inf
        %2055 = vmax.xlane.f32.xlu0 %v2054
        %v2056 = vpop.xlane.xlu0 %2055
        %v2057 = vsel %vm1722, %v1976, -inf
        %2058 = vmax.xlane.f32.xlu0 %v2057
        %v2059 = vpop.xlane.xlu0 %2058
        %v2060 = vsel %vm1722, %v1981, -inf
        %2061 = vmax.xlane.f32.xlu0 %v2060
        %v2062 = vpop.xlane.xlu0 %2061
        %v2063 = vsel %vm1722, %v2041, -inf
        %2064 = vmax.xlane.f32.xlu0 %v2063
        %v2065 = vpop.xlane.xlu0 %2064
        %v2066 = vsel %vm1722, %v2044, -inf
        %2067 = vmax.xlane.f32.xlu0 %v2066
        %v2068 = vpop.xlane.xlu0 %2067
        %v2069 = vsel %vm1722, %v2049, -inf
        %2070 = vmax.xlane.f32.xlu0 %v2069
        %v2071 = vpop.xlane.xlu0 %2070
        %v2072 = vsub.f32 %v1973, %v2056
        %v2073 = vsub.f32 %v1976, %v2059
        %v2074 = vsub.f32 %v1981, %v2062
        %v2075 = vsub.f32 %v2041, %v2065
        %v2076 = vsub.f32 %v2044, %v2068
        %v2077 = vsub.f32 %v2049, %v2071
        %v2078 = vmul.f32 %v2072, 1.442695
        %v2079 = vpow.pop %v2078
        %v2080 = vmul.f32 %v2073, 1.442695
        %v2081 = vpow.pop %v2080
        %v2082 = vmul.f32 %v2074, 1.442695
        %v2083 = vpow.pop %v2082
        %v2084 = vmul.f32 %v2075, 1.442695
        %v2085 = vpow.pop %v2084
        %v2086 = vmul.f32 %v2076, 1.442695
        %v2087 = vpow.pop %v2086
        %v2088 = vmul.f32 %v2077, 1.442695
        %v2089 = vpow.pop %v2088
        %v2090 = vsel %vm1722, %v2079, 0.0
        %2091 = vadd.xlane.f32.xlu0 %v2090
        %v2092 = vpop.xlane.xlu0 %2091
        %v2093 = vsel %vm1722, %v2081, 0.0
        %2094 = vadd.xlane.f32.xlu0 %v2093
        %v2095 = vpop.xlane.xlu0 %2094
        %v2096 = vsel %vm1722, %v2083, 0.0
        %2097 = vadd.xlane.f32.xlu0 %v2096
        %v2098 = vpop.xlane.xlu0 %2097
        %v2099 = vsel %vm1722, %v2085, 0.0
        %2100 = vadd.xlane.f32.xlu0 %v2099
        %v2101 = vpop.xlane.xlu0 %2100
        %v2102 = vsel %vm1722, %v2087, 0.0
        %2103 = vadd.xlane.f32.xlu0 %v2102
        %v2104 = vpop.xlane.xlu0 %2103
        %v2105 = vsel %vm1722, %v2089, 0.0
        %2106 = vadd.xlane.f32.xlu0 %v2105
        %v2107 = vpop.xlane.xlu0 %2106
        %v2108 = vrcp.pop %v2092
        %v2109 = vrcp.pop %v2095
        %v2110 = vrcp.pop %v2098
        %v2111 = vrcp.pop %v2101
        %v2112 = vrcp.pop %v2104
        %v2113 = vrcp.pop %v2107
        %v2114 = vmul.f32 %v2079, %v2108
        %v2115 = vmul.f32 %v2081, %v2109
        %v2116 = vmul.f32 %v2083, %v2110
        %v2117 = vmul.f32 %v2085, %v2111
        %v2118 = vmul.f32 %v2087, %v2112
        %v2119 = vmul.f32 %v2089, %v2113
        %v2120 = vpack.c.bf16 %v2115, %v2114
        %v2121 = vpack.c.bf16 %v2116, %v2116
        %v2122 = vpack.c.bf16 %v2118, %v2117
        %v2123 = vpack.c.bf16 %v2119, %v2119
        %2124 = vrot.lane.b32.xlu0 %v1589, 48
        %v2125 = vpop.permute.xlu0 %2124
        %2126 = vrot.lane.b32.xlu0 %v1590, 48
        %v2127 = vpop.permute.xlu0 %2126
        %v2130 = vsel %vm1722, %v2120, 0
        %v2133 = vsel %vm1722, %v2121, 0
        %v2136 = vsel %vm1804, %v2127, 0
        %2138 = vmatprep.subr.bf16.mxu0 0
        %2139 = vmatpush1.bf16.msra.mxu0 0
        %2140 = vmatprep.subr.bf16.mxu0 0
        %2141 = vmatpush1.bf16.msra.mxu0 0
        %2142 = vmatprep.subr.bf16.mxu0 0
        %2143 = vmatpush1.bf16.msra.mxu0 0
        %2144 = vmatprep.subr.bf16.mxu0 0
        %2145 = vmatpush1.bf16.msra.mxu0 0
        %2146 = vmatprep.subr.bf16.mxu0 0
        %2147 = vmatpush1.bf16.msra.mxu0 0
        %2148 = vmatprep.subr.bf16.mxu0 0
        %2149 = vmatpush1.bf16.msra.mxu0 0
        %2150 = vmatprep.subr.bf16.mxu0 0
        %2151 = vmatpush1.bf16.msra.mxu0 %v2136
        %2152 = vmatprep.subr.bf16.mxu0 0
        %2153 = vmatpush1.bf16.msra.mxu0 %v2125
        %2154 = vmatprep.subr.bf16.mxu0 0
        %2155 = vmatpush2.bf16.msra.mxu0 0
        %2156 = vmatprep.subr.bf16.mxu0 0
        %2157 = vmatpush2.bf16.msra.mxu0 0
        %2158 = vmatprep.subr.bf16.mxu0 0
        %2159 = vmatpush2.bf16.msra.mxu0 0
        %2160 = vmatprep.subr.bf16.mxu0 0
        %2161 = vmatpush2.bf16.msra.mxu0 0
        %2162 = vmatprep.subr.bf16.mxu0 0
        %2163 = vmatpush2.bf16.msra.mxu0 0
        %2164 = vmatprep.subr.bf16.mxu0 0
        %2165 = vmatpush2.bf16.msra.mxu0 0
        %2166 = vmatprep.subr.bf16.mxu0 0
        %2167 = vmatpush2.bf16.msra.mxu0 0
        %2168 = vmatprep.subr.bf16.mxu0 0
        %2169 = vmatpush2.bf16.msra.mxu0 0
        %2170 = vmatprep.mubr.bf16.mxu0 0
        %2171 = vmatmul.mubr.bf16.gmra.mxu0 %v2130
        %v2172 = vpop.f32.mrf.mxu0
        %v2173 = vadd.f32 0.0, %v2172
        %v2174 = vpop.f32.mrf.mxu0
        %v2175 = vpop.f32.mrf.mxu0
        %v2176 = vadd.f32 0.0, %v2175
        %v2177 = vpop.f32.mrf.mxu0
        %2178 = vmatprep.mubr.bf16.mxu0 0
        %2179 = vmatmul.mubr.bf16.gmra.mxu0 %v2133
        %v2180 = vpop.f32.mrf.mxu0
        %v2181 = vadd.f32 0.0, %v2180
        %v2182 = vpop.f32.mrf.mxu0
        %v2183 = vpop.f32.mrf.mxu0
        %v2184 = vpop.f32.mrf.mxu0
        %2185 = vdwg.mxu0
        %2186 = vrot.lane.b32.xlu0 %v1656, 48
        %v2187 = vpop.permute.xlu0 %2186
        %2188 = vrot.lane.b32.xlu0 %v1657, 48
        %v2189 = vpop.permute.xlu0 %2188
        %v2192 = vsel %vm1722, %v2122, 0
        %v2195 = vsel %vm1722, %v2123, 0
        %v2198 = vsel %vm1804, %v2189, 0
        %2200 = vmatprep.subr.bf16.mxu0 0
        %2201 = vmatpush1.bf16.msra.mxu0 0
        %2202 = vmatprep.subr.bf16.mxu0 0
        %2203 = vmatpush1.bf16.msra.mxu0 0
        %2204 = vmatprep.subr.bf16.mxu0 0
        %2205 = vmatpush1.bf16.msra.mxu0 0
        %2206 = vmatprep.subr.bf16.mxu0 0
        %2207 = vmatpush1.bf16.msra.mxu0 0
        %2208 = vmatprep.subr.bf16.mxu0 0
        %2209 = vmatpush1.bf16.msra.mxu0 0
        %2210 = vmatprep.subr.bf16.mxu0 0
        %2211 = vmatpush1.bf16.msra.mxu0 0
        %2212 = vmatprep.subr.bf16.mxu0 0
        %2213 = vmatpush1.bf16.msra.mxu0 %v2198
        %2214 = vmatprep.subr.bf16.mxu0 0
        %2215 = vmatpush1.bf16.msra.mxu0 %v2187
        %2216 = vmatprep.subr.bf16.mxu0 0
        %2217 = vmatpush2.bf16.msra.mxu0 0
        %2218 = vmatprep.subr.bf16.mxu0 0
        %2219 = vmatpush2.bf16.msra.mxu0 0
        %2220 = vmatprep.subr.bf16.mxu0 0
        %2221 = vmatpush2.bf16.msra.mxu0 0
        %2222 = vmatprep.subr.bf16.mxu0 0
        %2223 = vmatpush2.bf16.msra.mxu0 0
        %2224 = vmatprep.subr.bf16.mxu0 0
        %2225 = vmatpush2.bf16.msra.mxu0 0
        %2226 = vmatprep.subr.bf16.mxu0 0
        %2227 = vmatpush2.bf16.msra.mxu0 0
        %2228 = vmatprep.subr.bf16.mxu0 0
        %2229 = vmatpush2.bf16.msra.mxu0 0
        %2230 = vmatprep.subr.bf16.mxu0 0
        %2231 = vmatpush2.bf16.msra.mxu0 0
        %2232 = vmatprep.mubr.bf16.mxu0 0
        %2233 = vmatmul.mubr.bf16.gmra.mxu0 %v2192
        %v2234 = vpop.f32.mrf.mxu0
        %v2235 = vadd.f32 0.0, %v2234
        %v2236 = vpop.f32.mrf.mxu0
        %v2237 = vpop.f32.mrf.mxu0
        %v2238 = vadd.f32 0.0, %v2237
        %v2239 = vpop.f32.mrf.mxu0
        %2240 = vmatprep.mubr.bf16.mxu0 0
        %2241 = vmatmul.mubr.bf16.gmra.mxu0 %v2195
        %v2242 = vpop.f32.mrf.mxu0
        %v2243 = vadd.f32 0.0, %v2242
        %v2244 = vpop.f32.mrf.mxu0
        %v2245 = vpop.f32.mrf.mxu0
        %v2246 = vpop.f32.mrf.mxu0
        %2247 = vdwg.mxu0
        %2254 = vrot.lane.b32.xlu0 %v2173, 16
        %v2255 = vpop.permute.xlu0 %2254
        %2256 = vrot.lane.b32.xlu0 %v2176, 16
        %v2257 = vpop.permute.xlu0 %2256
        %2258 = vrot.lane.b32.xlu0 %v2181, 16
        %v2259 = vpop.permute.xlu0 %2258
        %2260 = vrot.lane.b32.xlu0 %v2235, 16
        %v2261 = vpop.permute.xlu0 %2260
        %2262 = vrot.lane.b32.xlu0 %v2238, 16
        %v2263 = vpop.permute.xlu0 %2262
        %2264 = vrot.lane.b32.xlu0 %v2243, 16
        %v2265 = vpop.permute.xlu0 %2264
        %v2272 = vsel %vm1595, %v1843, %v2255
        %v2273 = vsel %vm1595, %v1846, %v2257
        %v2274 = vsel %vm1595, %v1851, %v2259
        %v2275 = vsel %vm1595, %v1905, %v2261
        %v2276 = vsel %vm1595, %v1908, %v2263
        %v2277 = vsel %vm1595, %v1913, %v2265
        %v2278 = vpack.c.bf16 %v2273, %v2272
        %v2279 = vpack.c.bf16 %v2275, %v2274
        %v2280 = vpack.c.bf16 %v2277, %v2276
        %v2285 = vunpack.c.l.b16 %v1367
        %v2286 = vunpack.c.l.b16 %v1368
        %v2287 = vunpack.c.l.b16 %v1369
        %v2288 = vunpack.c.l.b16 %v1370
        %v2289 = vpack.c.b16 %v2286, %v2285
        %v2290 = vpack.c.b16 %v2288, %v2287
        %v2294 = vsel %vm1390, %v2278, 0
        %v2297 = vsel %vm1390, %v2279, 0
        %v2300 = vsel %vm1390, %v2280, 0
        %2302 = vmatprep.subr.bf16.mxu0 0
        %2303 = vmatpush1.bf16.msra.mxu0 0
        %2304 = vmatprep.subr.bf16.mxu0 0
        %2305 = vmatpush1.bf16.msra.mxu0 0
        %2306 = vmatprep.subr.bf16.mxu0 0
        %2307 = vmatpush1.bf16.msra.mxu0 0
        %2308 = vmatprep.subr.bf16.mxu0 0
        %2309 = vmatpush1.bf16.msra.mxu0 0
        %2310 = vmatprep.subr.bf16.mxu0 0
        %2311 = vmatpush1.bf16.msra.mxu0 0
        %2312 = vmatprep.subr.bf16.mxu0 0
        %2313 = vmatpush1.bf16.msra.mxu0 0
        %2314 = vmatprep.subr.bf16.mxu0 0
        %2315 = vmatpush1.bf16.msra.mxu0 %v2290
        %2316 = vmatprep.subr.bf16.mxu0 0
        %2317 = vmatpush1.bf16.msra.mxu0 %v2289
        %2318 = vmatprep.subr.bf16.mxu0 0
        %2319 = vmatpush2.bf16.msra.mxu0 0
        %2320 = vmatprep.subr.bf16.mxu0 0
        %2321 = vmatpush2.bf16.msra.mxu0 0
        %2322 = vmatprep.subr.bf16.mxu0 0
        %2323 = vmatpush2.bf16.msra.mxu0 0
        %2324 = vmatprep.subr.bf16.mxu0 0
        %2325 = vmatpush2.bf16.msra.mxu0 0
        %2326 = vmatprep.subr.bf16.mxu0 0
        %2327 = vmatpush2.bf16.msra.mxu0 0
        %2328 = vmatprep.subr.bf16.mxu0 0
        %2329 = vmatpush2.bf16.msra.mxu0 0
        %2330 = vmatprep.subr.bf16.mxu0 0
        %2331 = vmatpush2.bf16.msra.mxu0 0
        %2332 = vmatprep.subr.bf16.mxu0 0
        %2333 = vmatpush2.bf16.msra.mxu0 0
        %2334 = vmatprep.mubr.bf16.mxu0 0
        %2335 = vmatmul.mubr.bf16.gmra.mxu0 %v2294
        %v2336 = vpop.f32.mrf.mxu0
        %v2337 = vadd.f32 0.0, %v2336
        %v2338 = vpop.f32.mrf.mxu0
        %v2339 = vpop.f32.mrf.mxu0
        %v2340 = vadd.f32 0.0, %v2339
        %v2341 = vpop.f32.mrf.mxu0
        %2342 = vmatprep.mubr.bf16.mxu0 0
        %2343 = vmatmul.mubr.bf16.gmra.mxu0 %v2297
        %v2344 = vpop.f32.mrf.mxu0
        %v2345 = vadd.f32 0.0, %v2344
        %v2346 = vpop.f32.mrf.mxu0
        %v2347 = vpop.f32.mrf.mxu0
        %v2348 = vadd.f32 0.0, %v2347
        %v2349 = vpop.f32.mrf.mxu0
        %2350 = vmatprep.mubr.bf16.mxu0 0
        %2351 = vmatmul.mubr.bf16.gmra.mxu0 %v2300
        %v2352 = vpop.f32.mrf.mxu0
        %v2353 = vadd.f32 0.0, %v2352
        %v2354 = vpop.f32.mrf.mxu0
        %v2355 = vpop.f32.mrf.mxu0
        %v2356 = vadd.f32 0.0, %v2355
        %v2357 = vpop.f32.mrf.mxu0
        %2358 = vdwg.mxu0
        %v2359 = vadd.f32 %v1384, %v2337
        %v2360 = vadd.f32 %v1385, %v2340
        %v2361 = vadd.f32 %v1386, %v2345
        %v2362 = vadd.f32 %v1387, %v2348
        %v2363 = vadd.f32 %v1388, %v2353
        %v2364 = vadd.f32 %v1389, %v2356
        %v2365 = vlaneseq
        %v2366 = vshrl.u32 %v2365, 7
        %v2367 = vsub.s32 4, %v2366
        %v2368 = vrot.slane %v1361, %v2367
        %v2369 = vadd.f32 %v2359, %v2368
        %v2370 = vadd.f32 %v2360, %v2368
        %v2371 = vadd.f32 %v2361, %v2368
        %v2372 = vadd.f32 %v2362, %v2368
        %v2373 = vadd.f32 %v2363, %v2368
        %v2374 = vadd.f32 %v2364, %v2368
        %v2375 = vsel %vm1390, %v2369, 0.0
        %2376 = vadd.xlane.f32.xlu0 %v2375
        %v2377 = vpop.xlane.xlu0 %2376
        %v2378 = vsel %vm1390, %v2370, 0.0
        %2379 = vadd.xlane.f32.xlu0 %v2378
        %v2380 = vpop.xlane.xlu0 %2379
        %v2381 = vsel %vm1390, %v2371, 0.0
        %2382 = vadd.xlane.f32.xlu0 %v2381
        %v2383 = vpop.xlane.xlu0 %2382
        %v2384 = vsel %vm1390, %v2372, 0.0
        %2385 = vadd.xlane.f32.xlu0 %v2384
        %v2386 = vpop.xlane.xlu0 %2385
        %v2387 = vsel %vm1390, %v2373, 0.0
        %2388 = vadd.xlane.f32.xlu0 %v2387
        %v2389 = vpop.xlane.xlu0 %2388
        %v2390 = vsel %vm1390, %v2374, 0.0
        %2391 = vadd.xlane.f32.xlu0 %v2390
        %v2392 = vpop.xlane.xlu0 %2391
        %v2393 = vmul.f32 %v2377, %v1409
        %v2394 = vmul.f32 %v2380, %v1409
        %v2395 = vmul.f32 %v2383, %v1409
        %v2396 = vmul.f32 %v2386, %v1409
        %v2397 = vmul.f32 %v2389, %v1409
        %v2398 = vmul.f32 %v2392, %v1409
        %v2399 = vsub.f32 %v2369, %v2393
        %v2400 = vsub.f32 %v2370, %v2394
        %v2401 = vsub.f32 %v2371, %v2395
        %v2402 = vsub.f32 %v2372, %v2396
        %v2403 = vsub.f32 %v2373, %v2397
        %v2404 = vsub.f32 %v2374, %v2398
        %v2405 = vmul.f32 %v2399, %v2399
        %v2406 = vmul.f32 %v2400, %v2400
        %v2407 = vmul.f32 %v2401, %v2401
        %v2408 = vmul.f32 %v2402, %v2402
        %v2409 = vmul.f32 %v2403, %v2403
        %v2410 = vmul.f32 %v2404, %v2404
        %v2411 = vsel %vm1390, %v2405, 0.0
        %2412 = vadd.xlane.f32.xlu0 %v2411
        %v2413 = vpop.xlane.xlu0 %2412
        %v2414 = vsel %vm1390, %v2406, 0.0
        %2415 = vadd.xlane.f32.xlu0 %v2414
        %v2416 = vpop.xlane.xlu0 %2415
        %v2417 = vsel %vm1390, %v2407, 0.0
        %2418 = vadd.xlane.f32.xlu0 %v2417
        %v2419 = vpop.xlane.xlu0 %2418
        %v2420 = vsel %vm1390, %v2408, 0.0
        %2421 = vadd.xlane.f32.xlu0 %v2420
        %v2422 = vpop.xlane.xlu0 %2421
        %v2423 = vsel %vm1390, %v2409, 0.0
        %2424 = vadd.xlane.f32.xlu0 %v2423
        %v2425 = vpop.xlane.xlu0 %2424
        %v2426 = vsel %vm1390, %v2410, 0.0
        %2427 = vadd.xlane.f32.xlu0 %v2426
        %v2428 = vpop.xlane.xlu0 %2427
        %v2429 = vmul.f32 %v2413, %v1409
        %v2430 = vmul.f32 %v2416, %v1409
        %v2431 = vmul.f32 %v2419, %v1409
        %v2432 = vmul.f32 %v2422, %v1409
        %v2433 = vmul.f32 %v2425, %v1409
        %v2434 = vmul.f32 %v2428, %v1409
        %v2435 = vadd.f32 %v2429, 1e-05
        %v2436 = vadd.f32 %v2430, 1e-05
        %v2437 = vadd.f32 %v2431, 1e-05
        %v2438 = vadd.f32 %v2432, 1e-05
        %v2439 = vadd.f32 %v2433, 1e-05
        %v2440 = vadd.f32 %v2434, 1e-05
        %v2441 = vrsqrt.pop %v2435
        %v2442 = vrsqrt.pop %v2436
        %v2443 = vrsqrt.pop %v2437
        %v2444 = vrsqrt.pop %v2438
        %v2445 = vrsqrt.pop %v2439
        %v2446 = vrsqrt.pop %v2440
        %v2447 = vmul.f32 %v2399, %v2441
        %v2448 = vmul.f32 %v2400, %v2442
        %v2449 = vmul.f32 %v2401, %v2443
        %v2450 = vmul.f32 %v2402, %v2444
        %v2451 = vmul.f32 %v2403, %v2445
        %v2452 = vmul.f32 %v2404, %v2446
        %v2453 = vlaneseq
        %v2454 = vshrl.u32 %v2453, 7
        %v2455 = vsub.s32 2, %v2454
        %v2456 = vrot.slane %v1361, %v2455
        %v2457 = vmul.f32 %v2447, %v2456
        %v2458 = vmul.f32 %v2448, %v2456
        %v2459 = vmul.f32 %v2449, %v2456
        %v2460 = vmul.f32 %v2450, %v2456
        %v2461 = vmul.f32 %v2451, %v2456
        %v2462 = vmul.f32 %v2452, %v2456
        %v2463 = vlaneseq
        %v2464 = vshrl.u32 %v2463, 7
        %v2465 = vsub.s32 3, %v2464
        %v2466 = vrot.slane %v1361, %v2465
        %v2467 = vadd.f32 %v2457, %v2466
        %v2468 = vadd.f32 %v2458, %v2466
        %v2469 = vadd.f32 %v2459, %v2466
        %v2470 = vadd.f32 %v2460, %v2466
        %v2471 = vadd.f32 %v2461, %v2466
        %v2472 = vadd.f32 %v2462, %v2466
        %v2473 = vpack.c.bf16 %v2468, %v2467
        %v2474 = vpack.c.bf16 %v2470, %v2469
        %v2475 = vpack.c.bf16 %v2472, %v2471
        %v2477 = vlaneseq
        %v2478 = vshrl.u32 %v2477, 7
        %v2479 = vsub.s32 0, %v2478
        %v2480 = vrot.slane %v1375, %v2479
        %v2486 = vunpack.c.l.b16 %v1371
        %v2487 = vunpack.c.l.b16 %v1372
        %v2488 = vunpack.c.l.b16 %v1373
        %v2489 = vunpack.c.l.b16 %v1374
        %v2490 = vpack.c.b16 %v2487, %v2486
        %v2491 = vpack.c.b16 %v2489, %v2488
        %v2495 = vsel %vm1390, %v2473, 0
        %v2498 = vsel %vm1390, %v2474, 0
        %v2501 = vsel %vm1390, %v2475, 0
        %2503 = vmatprep.subr.bf16.mxu0 0
        %2504 = vmatpush1.bf16.msra.mxu0 0
        %2505 = vmatprep.subr.bf16.mxu0 0
        %2506 = vmatpush1.bf16.msra.mxu0 0
        %2507 = vmatprep.subr.bf16.mxu0 0
        %2508 = vmatpush1.bf16.msra.mxu0 0
        %2509 = vmatprep.subr.bf16.mxu0 0
        %2510 = vmatpush1.bf16.msra.mxu0 0
        %2511 = vmatprep.subr.bf16.mxu0 0
        %2512 = vmatpush1.bf16.msra.mxu0 0
        %2513 = vmatprep.subr.bf16.mxu0 0
        %2514 = vmatpush1.bf16.msra.mxu0 0
        %2515 = vmatprep.subr.bf16.mxu0 0
        %2516 = vmatpush1.bf16.msra.mxu0 %v2491
        %2517 = vmatprep.subr.bf16.mxu0 0
        %2518 = vmatpush1.bf16.msra.mxu0 %v2490
        %2519 = vmatprep.subr.bf16.mxu0 0
        %2520 = vmatpush2.bf16.msra.mxu0 0
        %2521 = vmatprep.subr.bf16.mxu0 0
        %2522 = vmatpush2.bf16.msra.mxu0 0
        %2523 = vmatprep.subr.bf16.mxu0 0
        %2524 = vmatpush2.bf16.msra.mxu0 0
        %2525 = vmatprep.subr.bf16.mxu0 0
        %2526 = vmatpush2.bf16.msra.mxu0 0
        %2527 = vmatprep.subr.bf16.mxu0 0
        %2528 = vmatpush2.bf16.msra.mxu0 0
        %2529 = vmatprep.subr.bf16.mxu0 0
        %2530 = vmatpush2.bf16.msra.mxu0 0
        %2531 = vmatprep.subr.bf16.mxu0 0
        %2532 = vmatpush2.bf16.msra.mxu0 0
        %2533 = vmatprep.subr.bf16.mxu0 0
        %2534 = vmatpush2.bf16.msra.mxu0 0
        %2535 = vmatprep.mubr.bf16.mxu0 0
        %2536 = vmatmul.mubr.bf16.gmra.mxu0 %v2495
        %v2537 = vpop.f32.mrf.mxu0
        %v2538 = vadd.f32 %v2480, %v2537
        %v2539 = vpop.f32.mrf.mxu0
        %v2540 = vpop.f32.mrf.mxu0
        %v2541 = vadd.f32 %v2480, %v2540
        %v2542 = vpop.f32.mrf.mxu0
        %2543 = vmatprep.mubr.bf16.mxu0 0
        %2544 = vmatmul.mubr.bf16.gmra.mxu0 %v2498
        %v2545 = vpop.f32.mrf.mxu0
        %v2546 = vadd.f32 %v2480, %v2545
        %v2547 = vpop.f32.mrf.mxu0
        %v2548 = vpop.f32.mrf.mxu0
        %v2549 = vadd.f32 %v2480, %v2548
        %v2550 = vpop.f32.mrf.mxu0
        %2551 = vmatprep.mubr.bf16.mxu0 0
        %2552 = vmatmul.mubr.bf16.gmra.mxu0 %v2501
        %v2553 = vpop.f32.mrf.mxu0
        %v2554 = vadd.f32 %v2480, %v2553
        %v2555 = vpop.f32.mrf.mxu0
        %v2556 = vpop.f32.mrf.mxu0
        %v2557 = vadd.f32 %v2480, %v2556
        %v2558 = vpop.f32.mrf.mxu0
        %2559 = vdwg.mxu0
        %v2560 = vmul.f32 %v2538, 0.5
        %v2561 = vmul.f32 %v2541, 0.5
        %v2562 = vmul.f32 %v2546, 0.5
        %v2563 = vmul.f32 %v2549, 0.5
        %v2564 = vmul.f32 %v2554, 0.5
        %v2565 = vmul.f32 %v2557, 0.5
        %v2566 = vmul.f32 %v2538, %v2538
        %v2567 = vmul.f32 %v2541, %v2541
        %v2568 = vmul.f32 %v2546, %v2546
        %v2569 = vmul.f32 %v2549, %v2549
        %v2570 = vmul.f32 %v2554, %v2554
        %v2571 = vmul.f32 %v2557, %v2557
        %v2572 = vmul.f32 %v2566, %v2538
        %v2573 = vmul.f32 %v2567, %v2541
        %v2574 = vmul.f32 %v2568, %v2546
        %v2575 = vmul.f32 %v2569, %v2549
        %v2576 = vmul.f32 %v2570, %v2554
        %v2577 = vmul.f32 %v2571, %v2557
        %v2578 = vmul.f32 %v2572, 0.044715
        %v2579 = vmul.f32 %v2573, 0.044715
        %v2580 = vmul.f32 %v2574, 0.044715
        %v2581 = vmul.f32 %v2575, 0.044715
        %v2582 = vmul.f32 %v2576, 0.044715
        %v2583 = vmul.f32 %v2577, 0.044715
        %v2584 = vadd.f32 %v2538, %v2578
        %v2585 = vadd.f32 %v2541, %v2579
        %v2586 = vadd.f32 %v2546, %v2580
        %v2587 = vadd.f32 %v2549, %v2581
        %v2588 = vadd.f32 %v2554, %v2582
        %v2589 = vadd.f32 %v2557, %v2583
        %v2590 = vmul.f32 %v2584, 0.7978846
        %v2591 = vmul.f32 %v2585, 0.7978846
        %v2592 = vmul.f32 %v2586, 0.7978846
        %v2593 = vmul.f32 %v2587, 0.7978846
        %v2594 = vmul.f32 %v2588, 0.7978846
        %v2595 = vmul.f32 %v2589, 0.7978846
        %v2596 = vtanh.pop %v2590
        %v2597 = vtanh.pop %v2591
        %v2598 = vtanh.pop %v2592
        %v2599 = vtanh.pop %v2593
        %v2600 = vtanh.pop %v2594
        %v2601 = vtanh.pop %v2595
        %v2602 = vadd.f32 %v2596, 1.0
        %v2603 = vadd.f32 %v2597, 1.0
        %v2604 = vadd.f32 %v2598, 1.0
        %v2605 = vadd.f32 %v2599, 1.0
        %v2606 = vadd.f32 %v2600, 1.0
        %v2607 = vadd.f32 %v2601, 1.0
        %v2608 = vmul.f32 %v2560, %v2602
        %v2609 = vmul.f32 %v2561, %v2603
        %v2610 = vmul.f32 %v2562, %v2604
        %v2611 = vmul.f32 %v2563, %v2605
        %v2612 = vmul.f32 %v2564, %v2606
        %v2613 = vmul.f32 %v2565, %v2607
        %v2614 = vpack.c.bf16 %v2609, %v2608
        %v2615 = vpack.c.bf16 %v2611, %v2610
        %v2616 = vpack.c.bf16 %v2613, %v2612
        %v2625 = vunpack.c.l.b16 %v1376
        %v2626 = vunpack.c.l.b16 %v1377
        %v2627 = vunpack.c.l.b16 %v1378
        %v2628 = vunpack.c.l.b16 %v1379
        %v2629 = vunpack.c.l.b16 %v1380
        %v2630 = vunpack.c.l.b16 %v1381
        %v2631 = vunpack.c.l.b16 %v1382
        %v2632 = vunpack.c.l.b16 %v1383
        %v2633 = vpack.c.b16 %v2626, %v2625
        %v2634 = vpack.c.b16 %v2628, %v2627
        %v2635 = vpack.c.b16 %v2630, %v2629
        %v2636 = vpack.c.b16 %v2632, %v2631
        %vm2641 = vcmask 523264
        %v2643 = vsel %vm2641, %v2614, 0
        %v2646 = vsel %vm2641, %v2615, 0
        %v2649 = vsel %vm2641, %v2616, 0
        %2651 = vmatprep.subr.bf16.mxu0 0
        %2652 = vmatpush1.bf16.msra.mxu0 0
        %2653 = vmatprep.subr.bf16.mxu0 0
        %2654 = vmatpush1.bf16.msra.mxu0 0
        %2655 = vmatprep.subr.bf16.mxu0 0
        %2656 = vmatpush1.bf16.msra.mxu0 0
        %2657 = vmatprep.subr.bf16.mxu0 0
        %2658 = vmatpush1.bf16.msra.mxu0 0
        %2659 = vmatprep.subr.bf16.mxu0 0
        %2660 = vmatpush1.bf16.msra.mxu0 %v2636
        %2661 = vmatprep.subr.bf16.mxu0 0
        %2662 = vmatpush1.bf16.msra.mxu0 %v2635
        %2663 = vmatprep.subr.bf16.mxu0 0
        %2664 = vmatpush1.bf16.msra.mxu0 %v2634
        %2665 = vmatprep.subr.bf16.mxu0 0
        %2666 = vmatpush1.bf16.msra.mxu0 %v2633
        %2667 = vmatprep.subr.bf16.mxu0 0
        %2668 = vmatpush2.bf16.msra.mxu0 0
        %2669 = vmatprep.subr.bf16.mxu0 0
        %2670 = vmatpush2.bf16.msra.mxu0 0
        %2671 = vmatprep.subr.bf16.mxu0 0
        %2672 = vmatpush2.bf16.msra.mxu0 0
        %2673 = vmatprep.subr.bf16.mxu0 0
        %2674 = vmatpush2.bf16.msra.mxu0 0
        %2675 = vmatprep.subr.bf16.mxu0 0
        %2676 = vmatpush2.bf16.msra.mxu0 0
        %2677 = vmatprep.subr.bf16.mxu0 0
        %2678 = vmatpush2.bf16.msra.mxu0 0
        %2679 = vmatprep.subr.bf16.mxu0 0
        %2680 = vmatpush2.bf16.msra.mxu0 0
        %2681 = vmatprep.subr.bf16.mxu0 0
        %2682 = vmatpush2.bf16.msra.mxu0 0
        %2683 = vmatprep.mubr.bf16.mxu0 0
        %2684 = vmatmul.mubr.bf16.gmra.mxu0 %v2643
        %v2685 = vpop.f32.mrf.mxu0
        %v2686 = vadd.f32 0.0, %v2685
        %v2687 = vpop.f32.mrf.mxu0
        %v2688 = vpop.f32.mrf.mxu0
        %v2689 = vadd.f32 0.0, %v2688
        %v2690 = vpop.f32.mrf.mxu0
        %2691 = vmatprep.mubr.bf16.mxu0 0
        %2692 = vmatmul.mubr.bf16.gmra.mxu0 %v2646
        %v2693 = vpop.f32.mrf.mxu0
        %v2694 = vadd.f32 0.0, %v2693
        %v2695 = vpop.f32.mrf.mxu0
        %v2696 = vpop.f32.mrf.mxu0
        %v2697 = vadd.f32 0.0, %v2696
        %v2698 = vpop.f32.mrf.mxu0
        %2699 = vmatprep.mubr.bf16.mxu0 0
        %2700 = vmatmul.mubr.bf16.gmra.mxu0 %v2649
        %v2701 = vpop.f32.mrf.mxu0
        %v2702 = vadd.f32 0.0, %v2701
        %v2703 = vpop.f32.mrf.mxu0
        %v2704 = vpop.f32.mrf.mxu0
        %v2705 = vadd.f32 0.0, %v2704
        %v2706 = vpop.f32.mrf.mxu0
        %2707 = vdwg.mxu0
        %v2708 = vadd.f32 %v2369, %v2686
        %v2709 = vadd.f32 %v2370, %v2689
        %v2710 = vadd.f32 %v2371, %v2694
        %v2711 = vadd.f32 %v2372, %v2697
        %v2712 = vadd.f32 %v2373, %v2702
        %v2713 = vadd.f32 %v2374, %v2705
        %v2714 = vlaneseq
        %v2715 = vshrl.u32 %v2714, 7
        %v2716 = vsub.s32 5, %v2715
        %v2717 = vrot.slane %v1361, %v2716
        %v2718 = vadd.f32 %v2708, %v2717
        %v2719 = vadd.f32 %v2709, %v2717
        %v2720 = vadd.f32 %v2710, %v2717
        %v2721 = vadd.f32 %v2711, %v2717
        %v2722 = vadd.f32 %v2712, %v2717
        %v2723 = vadd.f32 %v2713, %v2717
        %2724 = vst.msk [vmem:[#allocation2] sm:$0xff] %vm1390, %v2718
        %2725 = vst.msk [vmem:[#allocation2 + $0x8] sm:$0xff] %vm1390, %v2719
        %2726 = vst.msk [vmem:[#allocation2 + $0x10] sm:$0xff] %vm1390, %v2720
        %2727 = vst.msk [vmem:[#allocation2 + $0x18] sm:$0xff] %vm1390, %v2721
        %2728 = vst.msk [vmem:[#allocation2 + $0x20] sm:$0xff] %vm1390, %v2722
        %2729 = vst.msk [vmem:[#allocation2 + $0x28] sm:$0xff] %vm1390, %v2723
        %p2730 = scmp.eq.s32.totalorder %s38, 1
        // Predicated region
        $region113: #{tpu_custom_call.1} parent=75 // pred_check
          %p2731 = pneg %p2730
        $region114: #{tpu_custom_call.1} parent=75 // pred_check_branch
          %2733 = sbr.rel (%p2731) target = $region116
        $region115: #{tpu_custom_call.1} parent=75 // pred_region
          %v2734 = vld [vmem:[#allocation8 + $0x1] sm:$0x1]
          %v2735 = vld [vmem:[#allocation8 + $0x2] sm:$0x1]
          %v2736 = vsel %vm1390, %v2718, 0.0
          %2737 = vadd.xlane.f32.xlu0 %v2736
          %v2738 = vpop.xlane.xlu0 %2737
          %v2739 = vsel %vm1390, %v2719, 0.0
          %2740 = vadd.xlane.f32.xlu0 %v2739
          %v2741 = vpop.xlane.xlu0 %2740
          %v2742 = vsel %vm1390, %v2720, 0.0
          %2743 = vadd.xlane.f32.xlu0 %v2742
          %v2744 = vpop.xlane.xlu0 %2743
          %v2745 = vsel %vm1390, %v2721, 0.0
          %2746 = vadd.xlane.f32.xlu0 %v2745
          %v2747 = vpop.xlane.xlu0 %2746
          %v2748 = vsel %vm1390, %v2722, 0.0
          %2749 = vadd.xlane.f32.xlu0 %v2748
          %v2750 = vpop.xlane.xlu0 %2749
          %v2751 = vsel %vm1390, %v2723, 0.0
          %2752 = vadd.xlane.f32.xlu0 %v2751
          %v2753 = vpop.xlane.xlu0 %2752
          %v2754 = vmul.f32 %v2738, %v1409
          %v2755 = vmul.f32 %v2741, %v1409
          %v2756 = vmul.f32 %v2744, %v1409
          %v2757 = vmul.f32 %v2747, %v1409
          %v2758 = vmul.f32 %v2750, %v1409
          %v2759 = vmul.f32 %v2753, %v1409
          %v2760 = vsub.f32 %v2718, %v2754
          %v2761 = vsub.f32 %v2719, %v2755
          %v2762 = vsub.f32 %v2720, %v2756
          %v2763 = vsub.f32 %v2721, %v2757
          %v2764 = vsub.f32 %v2722, %v2758
          %v2765 = vsub.f32 %v2723, %v2759
          %v2766 = vmul.f32 %v2760, %v2760
          %v2767 = vmul.f32 %v2761, %v2761
          %v2768 = vmul.f32 %v2762, %v2762
          %v2769 = vmul.f32 %v2763, %v2763
          %v2770 = vmul.f32 %v2764, %v2764
          %v2771 = vmul.f32 %v2765, %v2765
          %v2772 = vsel %vm1390, %v2766, 0.0
          %2773 = vadd.xlane.f32.xlu0 %v2772
          %v2774 = vpop.xlane.xlu0 %2773
          %v2775 = vsel %vm1390, %v2767, 0.0
          %2776 = vadd.xlane.f32.xlu0 %v2775
          %v2777 = vpop.xlane.xlu0 %2776
          %v2778 = vsel %vm1390, %v2768, 0.0
          %2779 = vadd.xlane.f32.xlu0 %v2778
          %v2780 = vpop.xlane.xlu0 %2779
          %v2781 = vsel %vm1390, %v2769, 0.0
          %2782 = vadd.xlane.f32.xlu0 %v2781
          %v2783 = vpop.xlane.xlu0 %2782
          %v2784 = vsel %vm1390, %v2770, 0.0
          %2785 = vadd.xlane.f32.xlu0 %v2784
          %v2786 = vpop.xlane.xlu0 %2785
          %v2787 = vsel %vm1390, %v2771, 0.0
          %2788 = vadd.xlane.f32.xlu0 %v2787
          %v2789 = vpop.xlane.xlu0 %2788
          %v2790 = vmul.f32 %v2774, %v1409
          %v2791 = vmul.f32 %v2777, %v1409
          %v2792 = vmul.f32 %v2780, %v1409
          %v2793 = vmul.f32 %v2783, %v1409
          %v2794 = vmul.f32 %v2786, %v1409
          %v2795 = vmul.f32 %v2789, %v1409
          %v2796 = vadd.f32 %v2790, 1e-05
          %v2797 = vadd.f32 %v2791, 1e-05
          %v2798 = vadd.f32 %v2792, 1e-05
          %v2799 = vadd.f32 %v2793, 1e-05
          %v2800 = vadd.f32 %v2794, 1e-05
          %v2801 = vadd.f32 %v2795, 1e-05
          %v2802 = vrsqrt.pop %v2796
          %v2803 = vrsqrt.pop %v2797
          %v2804 = vrsqrt.pop %v2798
          %v2805 = vrsqrt.pop %v2799
          %v2806 = vrsqrt.pop %v2800
          %v2807 = vrsqrt.pop %v2801
          %v2808 = vmul.f32 %v2760, %v2802
          %v2809 = vmul.f32 %v2761, %v2803
          %v2810 = vmul.f32 %v2762, %v2804
          %v2811 = vmul.f32 %v2763, %v2805
          %v2812 = vmul.f32 %v2764, %v2806
          %v2813 = vmul.f32 %v2765, %v2807
          %v2814 = vlaneseq
          %v2815 = vshrl.u32 %v2814, 7
          %v2816 = vsub.s32 0, %v2815
          %v2817 = vrot.slane %v2734, %v2816
          %v2818 = vmul.f32 %v2808, %v2817
          %v2819 = vmul.f32 %v2809, %v2817
          %v2820 = vmul.f32 %v2810, %v2817
          %v2821 = vmul.f32 %v2811, %v2817
          %v2822 = vmul.f32 %v2812, %v2817
          %v2823 = vmul.f32 %v2813, %v2817
          %v2824 = vlaneseq
          %v2825 = vshrl.u32 %v2824, 7
          %v2826 = vsub.s32 0, %v2825
          %v2827 = vrot.slane %v2735, %v2826
          %v2828 = vadd.f32 %v2818, %v2827
          %v2829 = vadd.f32 %v2819, %v2827
          %v2830 = vadd.f32 %v2820, %v2827
          %v2831 = vadd.f32 %v2821, %v2827
          %v2832 = vadd.f32 %v2822, %v2827
          %v2833 = vadd.f32 %v2823, %v2827
          %v2834 = vpack.c.bf16 %v2829, %v2828
          %v2835 = vpack.c.bf16 %v2832, %v2831
          %v2838 = vunpack.c.l.b16 %v2834
          %v2839 = vunpack.c.h.b16 %v2834
          %v2840 = vunpack.c.l.b16 %v2835
          %v2841 = vunpack.c.h.b16 %v2835
          %v2842 = vpack.c.b16 %v2838, %v2838
          %v2843 = vpack.c.b16 %v2839, %v2839
          %v2844 = vpack.c.b16 %v2840, %v2840
          %v2845 = vpack.c.b16 %v2841, %v2841
          %vm2850 = vcmask 257024
          %2851 = vst.msk [vmem:[#allocation17] sm:$0xf] %vm2850, %v2842
          %2852 = vst.msk [vmem:[#allocation17 + $0x4] sm:$0xf] %vm2850, %v2843
          %2853 = vst.msk [vmem:[#allocation17 + $0x8] sm:$0xf] %vm2850, %v2844
          %2854 = vst.msk [vmem:[#allocation17 + $0xc] sm:$0xf] %vm2850, %v2845
          %v2855 = vld [vmem:[#allocation11] sm:$0xf]
          %v2856 = vld [vmem:[#allocation11 + $0x4] sm:$0xf]
          %v2857 = vld [vmem:[#allocation11 + $0x8] sm:$0xf]
          %v2858 = vld [vmem:[#allocation11 + $0xc] sm:$0xf]
          %v2863 = vunpack.c.l.b16 %v2855
          %v2864 = vunpack.c.l.b16 %v2856
          %v2865 = vunpack.c.l.b16 %v2857
          %v2866 = vunpack.c.l.b16 %v2858
          %v2867 = vpack.c.b16 %v2864, %v2863
          %v2868 = vpack.c.b16 %v2866, %v2865
          %v2872 = vsel %vm1390, %v2834, 0
          %v2875 = vsel %vm1390, %v2835, 0
          %2877 = vmatprep.subr.bf16.mxu0 0
          %2878 = vmatpush1.bf16.msra.mxu0 0
          %2879 = vmatprep.subr.bf16.mxu0 0
          %2880 = vmatpush1.bf16.msra.mxu0 0
          %2881 = vmatprep.subr.bf16.mxu0 0
          %2882 = vmatpush1.bf16.msra.mxu0 0
          %2883 = vmatprep.subr.bf16.mxu0 0
          %2884 = vmatpush1.bf16.msra.mxu0 0
          %2885 = vmatprep.subr.bf16.mxu0 0
          %2886 = vmatpush1.bf16.msra.mxu0 0
          %2887 = vmatprep.subr.bf16.mxu0 0
          %2888 = vmatpush1.bf16.msra.mxu0 0
          %2889 = vmatprep.subr.bf16.mxu0 0
          %2890 = vmatpush1.bf16.msra.mxu0 %v2868
          %2891 = vmatprep.subr.bf16.mxu0 0
          %2892 = vmatpush1.bf16.msra.mxu0 %v2867
          %2893 = vmatprep.subr.bf16.mxu0 0
          %2894 = vmatpush2.bf16.msra.mxu0 0
          %2895 = vmatprep.subr.bf16.mxu0 0
          %2896 = vmatpush2.bf16.msra.mxu0 0
          %2897 = vmatprep.subr.bf16.mxu0 0
          %2898 = vmatpush2.bf16.msra.mxu0 0
          %2899 = vmatprep.subr.bf16.mxu0 0
          %2900 = vmatpush2.bf16.msra.mxu0 0
          %2901 = vmatprep.subr.bf16.mxu0 0
          %2902 = vmatpush2.bf16.msra.mxu0 0
          %2903 = vmatprep.subr.bf16.mxu0 0
          %2904 = vmatpush2.bf16.msra.mxu0 0
          %2905 = vmatprep.subr.bf16.mxu0 0
          %2906 = vmatpush2.bf16.msra.mxu0 0
          %2907 = vmatprep.subr.bf16.mxu0 0
          %2908 = vmatpush2.bf16.msra.mxu0 0
          %2909 = vmatprep.mubr.bf16.mxu0 0
          %2910 = vmatmul.mubr.bf16.gmra.mxu0 %v2872
          %v2911 = vpop.f32.mrf.mxu0
          %v2912 = vadd.f32 0.0, %v2911
          %v2913 = vpop.f32.mrf.mxu0
          %v2914 = vpop.f32.mrf.mxu0
          %v2915 = vadd.f32 0.0, %v2914
          %v2916 = vpop.f32.mrf.mxu0
          %2917 = vmatprep.mubr.bf16.mxu0 0
          %2918 = vmatmul.mubr.bf16.gmra.mxu0 %v2875
          %v2919 = vpop.f32.mrf.mxu0
          %v2920 = vadd.f32 0.0, %v2919
          %v2921 = vpop.f32.mrf.mxu0
          %v2922 = vpop.f32.mrf.mxu0
          %v2923 = vadd.f32 0.0, %v2922
          %v2924 = vpop.f32.mrf.mxu0
          %2925 = vdwg.mxu0
          %v2926 = vpack.c.bf16 %v2833, %v2830
          %v2927 = vld [vmem:[#allocation12] sm:$0xf]
          %v2928 = vld [vmem:[#allocation12 + $0x4] sm:$0xf]
          %v2929 = vld [vmem:[#allocation12 + $0x8] sm:$0xf]
          %v2930 = vld [vmem:[#allocation12 + $0xc] sm:$0xf]
          %v2935 = vunpack.c.l.b16 %v2927
          %v2936 = vunpack.c.l.b16 %v2928
          %v2937 = vunpack.c.l.b16 %v2929
          %v2938 = vunpack.c.l.b16 %v2930
          %v2939 = vpack.c.b16 %v2936, %v2935
          %v2940 = vpack.c.b16 %v2938, %v2937
          %v2944 = vsel %vm1390, %v2926, 0
          %2946 = vmatprep.subr.bf16.mxu0 0
          %2947 = vmatpush1.bf16.msra.mxu0 0
          %2948 = vmatprep.subr.bf16.mxu0 0
          %2949 = vmatpush1.bf16.msra.mxu0 0
          %2950 = vmatprep.subr.bf16.mxu0 0
          %2951 = vmatpush1.bf16.msra.mxu0 0
          %2952 = vmatprep.subr.bf16.mxu0 0
          %2953 = vmatpush1.bf16.msra.mxu0 0
          %2954 = vmatprep.subr.bf16.mxu0 0
          %2955 = vmatpush1.bf16.msra.mxu0 0
          %2956 = vmatprep.subr.bf16.mxu0 0
          %2957 = vmatpush1.bf16.msra.mxu0 0
          %2958 = vmatprep.subr.bf16.mxu0 0
          %2959 = vmatpush1.bf16.msra.mxu0 %v2940
          %2960 = vmatprep.subr.bf16.mxu0 0
          %2961 = vmatpush1.bf16.msra.mxu0 %v2939
          %2962 = vmatprep.subr.bf16.mxu0 0
          %2963 = vmatpush2.bf16.msra.mxu0 0
          %2964 = vmatprep.subr.bf16.mxu0 0
          %2965 = vmatpush2.bf16.msra.mxu0 0
          %2966 = vmatprep.subr.bf16.mxu0 0
          %2967 = vmatpush2.bf16.msra.mxu0 0
          %2968 = vmatprep.subr.bf16.mxu0 0
          %2969 = vmatpush2.bf16.msra.mxu0 0
          %2970 = vmatprep.subr.bf16.mxu0 0
          %2971 = vmatpush2.bf16.msra.mxu0 0
          %2972 = vmatprep.subr.bf16.mxu0 0
          %2973 = vmatpush2.bf16.msra.mxu0 0
          %2974 = vmatprep.subr.bf16.mxu0 0
          %2975 = vmatpush2.bf16.msra.mxu0 0
          %2976 = vmatprep.subr.bf16.mxu0 0
          %2977 = vmatpush2.bf16.msra.mxu0 0
          %2978 = vmatprep.mubr.bf16.mxu0 0
          %2979 = vmatmul.mubr.bf16.gmra.mxu0 %v2944
          %v2980 = vpop.f32.mrf.mxu0
          %v2981 = vadd.f32 0.0, %v2980
          %v2982 = vpop.f32.mrf.mxu0
          %v2983 = vpop.f32.mrf.mxu0
          %v2984 = vadd.f32 0.0, %v2983
          %v2985 = vpop.f32.mrf.mxu0
          %2986 = vdwg.mxu0
          %v2987 = vmul.f32 %v2912, %v2912
          %v2988 = vmul.f32 %v2915, %v2915
          %v2989 = vmul.f32 %v2920, %v2920
          %v2990 = vmul.f32 %v2923, %v2923
          %v2991 = vsel %vm1390, %v2987, 0.0
          %2992 = vadd.xlane.f32.xlu0 %v2991
          %v2993 = vpop.xlane.xlu0 %2992
          %v2994 = vsel %vm1390, %v2988, 0.0
          %2995 = vadd.xlane.f32.xlu0 %v2994
          %v2996 = vpop.xlane.xlu0 %2995
          %v2997 = vsel %vm1390, %v2989, 0.0
          %2998 = vadd.xlane.f32.xlu0 %v2997
          %v2999 = vpop.xlane.xlu0 %2998
          %v3000 = vsel %vm1390, %v2990, 0.0
          %3001 = vadd.xlane.f32.xlu0 %v3000
          %v3002 = vpop.xlane.xlu0 %3001
          %v3003 = vrsqrt.pop %v2993
          %v3004 = vrsqrt.pop %v2996
          %v3005 = vrsqrt.pop %v2999
          %v3006 = vrsqrt.pop %v3002
          %v3007 = vmul.f32 %v2912, %v3003
          %v3008 = vmul.f32 %v2915, %v3004
          %v3009 = vmul.f32 %v2920, %v3005
          %v3010 = vmul.f32 %v2923, %v3006
          %v3011 = vmul.f32 %v2981, %v2981
          %v3012 = vmul.f32 %v2984, %v2984
          %v3013 = vsel %vm1390, %v3011, 0.0
          %3014 = vadd.xlane.f32.xlu0 %v3013
          %v3015 = vpop.xlane.xlu0 %3014
          %v3016 = vsel %vm1390, %v3012, 0.0
          %3017 = vadd.xlane.f32.xlu0 %v3016
          %v3018 = vpop.xlane.xlu0 %3017
          %v3019 = vrsqrt.pop %v3015
          %v3020 = vrsqrt.pop %v3018
          %v3021 = vmul.f32 %v2981, %v3019
          %v3022 = vmul.f32 %v2984, %v3020
          %v3024 = vsel %vm1390, %v3007, 0
          %v3027 = vsel %vm1390, %v3008, 0
          %v3030 = vsel %vm1390, %v3021, 0
          %3032 = vmatprep.subr.mxu0 0.0
          %3033 = vmatpush1.xpose.msra.mxu0 0.0
          %3034 = vmatprep.subr.mxu0 0.0
          %3035 = vmatpush1.xpose.msra.mxu0 0.0
          %3036 = vmatprep.subr.mxu0 0.0
          %3037 = vmatpush1.xpose.msra.mxu0 0.0
          %3038 = vmatprep.subr.mxu0 0.0
          %3039 = vmatpush1.xpose.msra.mxu0 0.0
          %3040 = vmatprep.subr.mxu0 0.0
          %3041 = vmatpush1.xpose.msra.mxu0 0.0
          %3042 = vmatprep.subr.mxu0 0.0
          %3043 = vmatpush1.xpose.msra.mxu0 0.0
          %3044 = vmatprep.subr.mxu0 0.0
          %3045 = vmatpush1.xpose.msra.mxu0 0.0
          %3046 = vmatprep.subr.mxu0 0.0
          %3047 = vmatpush1.xpose.msra.mxu0 0.0
          %3048 = vmatprep.subr.mxu0 0.0
          %3049 = vmatpush1.xpose.msra.mxu0 0.0
          %3050 = vmatprep.subr.mxu0 0.0
          %3051 = vmatpush1.xpose.msra.mxu0 0.0
          %3052 = vmatprep.subr.mxu0 0.0
          %3053 = vmatpush1.xpose.msra.mxu0 0.0
          %3054 = vmatprep.subr.mxu0 0.0
          %3055 = vmatpush1.xpose.msra.mxu0 0.0
          %3056 = vmatprep.subr.mxu0 0.0
          %3057 = vmatpush1.xpose.msra.mxu0 0.0
          %3058 = vmatprep.subr.mxu0 0.0
          %3059 = vmatpush1.xpose.msra.mxu0 0.0
          %3060 = vmatprep.subr.mxu0 0.0
          %3061 = vmatpush1.xpose.msra.mxu0 0.0
          %3062 = vmatprep.subr.mxu0 0.0
          %3063 = vmatpush1.xpose.msra.mxu0 %v3030
          %3064 = vmatprep.subr.mxu0 0.0
          %3065 = vmatpush2.xpose.msra.mxu0 0.0
          %3066 = vmatprep.subr.mxu0 0.0
          %3067 = vmatpush2.xpose.msra.mxu0 0.0
          %3068 = vmatprep.subr.mxu0 0.0
          %3069 = vmatpush2.xpose.msra.mxu0 0.0
          %3070 = vmatprep.subr.mxu0 0.0
          %3071 = vmatpush2.xpose.msra.mxu0 0.0
          %3072 = vmatprep.subr.mxu0 0.0
          %3073 = vmatpush2.xpose.msra.mxu0 0.0
          %3074 = vmatprep.subr.mxu0 0.0
          %3075 = vmatpush2.xpose.msra.mxu0 0.0
          %3076 = vmatprep.subr.mxu0 0.0
          %3077 = vmatpush2.xpose.msra.mxu0 0.0
          %3078 = vmatprep.subr.mxu0 0.0
          %3079 = vmatpush2.xpose.msra.mxu0 0.0
          %3080 = vmatprep.subr.mxu0 0.0
          %3081 = vmatpush2.xpose.msra.mxu0 0.0
          %3082 = vmatprep.subr.mxu0 0.0
          %3083 = vmatpush2.xpose.msra.mxu0 0.0
          %3084 = vmatprep.subr.mxu0 0.0
          %3085 = vmatpush2.xpose.msra.mxu0 0.0
          %3086 = vmatprep.subr.mxu0 0.0
          %3087 = vmatpush2.xpose.msra.mxu0 0.0
          %3088 = vmatprep.subr.mxu0 0.0
          %3089 = vmatpush2.xpose.msra.mxu0 0.0
          %3090 = vmatprep.subr.mxu0 0.0
          %3091 = vmatpush2.xpose.msra.mxu0 0.0
          %3092 = vmatprep.subr.mxu0 0.0
          %3093 = vmatpush2.xpose.msra.mxu0 0.0
          %3094 = vmatprep.subr.mxu0 0.0
          %3095 = vmatpush2.xpose.msra.mxu0 0.0
          %3096 = vmatprep.mubr.f32.mxu0 0.0
          %3097 = vmatmul.mubr.f32.gmra.mxu0 %v3024
          %v3098 = vpop.f32.mrf.mxu0
          %v3099 = vadd.f32 0.0, %v3098
          %v3100 = vpop.f32.mrf.mxu0
          %3101 = vmatprep.mubr.f32.mxu0 0.0
          %3102 = vmatmul.mubr.f32.gmra.mxu0 %v3027
          %v3103 = vpop.f32.mrf.mxu0
          %v3104 = vadd.f32 0.0, %v3103
          %v3105 = vpop.f32.mrf.mxu0
          %3106 = vdwg.mxu0
          %v3108 = vsel %vm1390, %v3009, 0
          %v3111 = vsel %vm1390, %v3010, 0
          %v3114 = vsel %vm1390, %v3022, 0
          %3116 = vmatprep.subr.mxu0 0.0
          %3117 = vmatpush1.xpose.msra.mxu0 0.0
          %3118 = vmatprep.subr.mxu0 0.0
          %3119 = vmatpush1.xpose.msra.mxu0 0.0
          %3120 = vmatprep.subr.mxu0 0.0
          %3121 = vmatpush1.xpose.msra.mxu0 0.0
          %3122 = vmatprep.subr.mxu0 0.0
          %3123 = vmatpush1.xpose.msra.mxu0 0.0
          %3124 = vmatprep.subr.mxu0 0.0
          %3125 = vmatpush1.xpose.msra.mxu0 0.0
          %3126 = vmatprep.subr.mxu0 0.0
          %3127 = vmatpush1.xpose.msra.mxu0 0.0
          %3128 = vmatprep.subr.mxu0 0.0
          %3129 = vmatpush1.xpose.msra.mxu0 0.0
          %3130 = vmatprep.subr.mxu0 0.0
          %3131 = vmatpush1.xpose.msra.mxu0 0.0
          %3132 = vmatprep.subr.mxu0 0.0
          %3133 = vmatpush1.xpose.msra.mxu0 0.0
          %3134 = vmatprep.subr.mxu0 0.0
          %3135 = vmatpush1.xpose.msra.mxu0 0.0
          %3136 = vmatprep.subr.mxu0 0.0
          %3137 = vmatpush1.xpose.msra.mxu0 0.0
          %3138 = vmatprep.subr.mxu0 0.0
          %3139 = vmatpush1.xpose.msra.mxu0 0.0
          %3140 = vmatprep.subr.mxu0 0.0
          %3141 = vmatpush1.xpose.msra.mxu0 0.0
          %3142 = vmatprep.subr.mxu0 0.0
          %3143 = vmatpush1.xpose.msra.mxu0 0.0
          %3144 = vmatprep.subr.mxu0 0.0
          %3145 = vmatpush1.xpose.msra.mxu0 0.0
          %3146 = vmatprep.subr.mxu0 0.0
          %3147 = vmatpush1.xpose.msra.mxu0 %v3114
          %3148 = vmatprep.subr.mxu0 0.0
          %3149 = vmatpush2.xpose.msra.mxu0 0.0
          %3150 = vmatprep.subr.mxu0 0.0
          %3151 = vmatpush2.xpose.msra.mxu0 0.0
          %3152 = vmatprep.subr.mxu0 0.0
          %3153 = vmatpush2.xpose.msra.mxu0 0.0
          %3154 = vmatprep.subr.mxu0 0.0
          %3155 = vmatpush2.xpose.msra.mxu0 0.0
          %3156 = vmatprep.subr.mxu0 0.0
          %3157 = vmatpush2.xpose.msra.mxu0 0.0
          %3158 = vmatprep.subr.mxu0 0.0
          %3159 = vmatpush2.xpose.msra.mxu0 0.0
          %3160 = vmatprep.subr.mxu0 0.0
          %3161 = vmatpush2.xpose.msra.mxu0 0.0
          %3162 = vmatprep.subr.mxu0 0.0
          %3163 = vmatpush2.xpose.msra.mxu0 0.0
          %3164 = vmatprep.subr.mxu0 0.0
          %3165 = vmatpush2.xpose.msra.mxu0 0.0
          %3166 = vmatprep.subr.mxu0 0.0
          %3167 = vmatpush2.xpose.msra.mxu0 0.0
          %3168 = vmatprep.subr.mxu0 0.0
          %3169 = vmatpush2.xpose.msra.mxu0 0.0
          %3170 = vmatprep.subr.mxu0 0.0
          %3171 = vmatpush2.xpose.msra.mxu0 0.0
          %3172 = vmatprep.subr.mxu0 0.0
          %3173 = vmatpush2.xpose.msra.mxu0 0.0
          %3174 = vmatprep.subr.mxu0 0.0
          %3175 = vmatpush2.xpose.msra.mxu0 0.0
          %3176 = vmatprep.subr.mxu0 0.0
          %3177 = vmatpush2.xpose.msra.mxu0 0.0
          %3178 = vmatprep.subr.mxu0 0.0
          %3179 = vmatpush2.xpose.msra.mxu0 0.0
          %3180 = vmatprep.mubr.f32.mxu0 0.0
          %3181 = vmatmul.mubr.f32.gmra.mxu0 %v3108
          %v3182 = vpop.f32.mrf.mxu0
          %v3183 = vadd.f32 0.0, %v3182
          %v3184 = vpop.f32.mrf.mxu0
          %3185 = vmatprep.mubr.f32.mxu0 0.0
          %3186 = vmatmul.mubr.f32.gmra.mxu0 %v3111
          %v3187 = vpop.f32.mrf.mxu0
          %v3188 = vadd.f32 0.0, %v3187
          %v3189 = vpop.f32.mrf.mxu0
          %3190 = vdwg.mxu0
          %v3191 = vld [vmem:[#allocation9] sm:$0x1]
          %v3192 = vld [vmem:[#allocation9 + $0x1] sm:$0x1]
          %vm3193 = vcmask 64512
          %v3194 = vsel %vm3193, %v3099, 0.0
          %3195 = vadd.xlane.f32.xlu0 %v3194
          %v3196 = vpop.xlane.xlu0 %3195
          %v3197 = vsel %vm3193, %v3104, 0.0
          %3198 = vadd.xlane.f32.xlu0 %v3197
          %v3199 = vpop.xlane.xlu0 %3198
          %v3200 = vsel %vm3193, %v3183, 0.0
          %3201 = vadd.xlane.f32.xlu0 %v3200
          %v3202 = vpop.xlane.xlu0 %3201
          %v3203 = vsel %vm3193, %v3188, 0.0
          %3204 = vadd.xlane.f32.xlu0 %v3203
          %v3205 = vpop.xlane.xlu0 %3204
          %v3206 = vrcp.pop 8.0
          %v3207 = vmul.f32 %v3196, %v3206
          %v3208 = vmul.f32 %v3199, %v3206
          %v3209 = vmul.f32 %v3202, %v3206
          %v3210 = vmul.f32 %v3205, %v3206
          %v3211 = vsub.f32 %v3099, %v3207
          %v3212 = vsub.f32 %v3104, %v3208
          %v3213 = vsub.f32 %v3183, %v3209
          %v3214 = vsub.f32 %v3188, %v3210
          %v3215 = vmul.f32 %v3211, %v3211
          %v3216 = vmul.f32 %v3212, %v3212
          %v3217 = vmul.f32 %v3213, %v3213
          %v3218 = vmul.f32 %v3214, %v3214
          %v3219 = vsel %vm3193, %v3215, 0.0
          %3220 = vadd.xlane.f32.xlu0 %v3219
          %v3221 = vpop.xlane.xlu0 %3220
          %v3222 = vsel %vm3193, %v3216, 0.0
          %3223 = vadd.xlane.f32.xlu0 %v3222
          %v3224 = vpop.xlane.xlu0 %3223
          %v3225 = vsel %vm3193, %v3217, 0.0
          %3226 = vadd.xlane.f32.xlu0 %v3225
          %v3227 = vpop.xlane.xlu0 %3226
          %v3228 = vsel %vm3193, %v3218, 0.0
          %3229 = vadd.xlane.f32.xlu0 %v3228
          %v3230 = vpop.xlane.xlu0 %3229
          %v3231 = vmul.f32 %v3221, %v3206
          %v3232 = vmul.f32 %v3224, %v3206
          %v3233 = vmul.f32 %v3227, %v3206
          %v3234 = vmul.f32 %v3230, %v3206
          %v3235 = vadd.f32 %v3231, 1e-05
          %v3236 = vadd.f32 %v3232, 1e-05
          %v3237 = vadd.f32 %v3233, 1e-05
          %v3238 = vadd.f32 %v3234, 1e-05
          %v3239 = vrsqrt.pop %v3235
          %v3240 = vrsqrt.pop %v3236
          %v3241 = vrsqrt.pop %v3237
          %v3242 = vrsqrt.pop %v3238
          %v3243 = vmul.f32 %v3211, %v3239
          %v3244 = vmul.f32 %v3212, %v3240
          %v3245 = vmul.f32 %v3213, %v3241
          %v3246 = vmul.f32 %v3214, %v3242
          %v3247 = vlaneseq
          %v3248 = vshrl.u32 %v3247, 7
          %v3249 = vsub.s32 0, %v3248
          %v3250 = vrot.slane %v3191, %v3249
          %v3251 = vmul.f32 %v3243, %v3250
          %v3252 = vmul.f32 %v3244, %v3250
          %v3253 = vmul.f32 %v3245, %v3250
          %v3254 = vmul.f32 %v3246, %v3250
          %v3255 = vlaneseq
          %v3256 = vshrl.u32 %v3255, 7
          %v3257 = vsub.s32 0, %v3256
          %v3258 = vrot.slane %v3192, %v3257
          %v3259 = vadd.f32 %v3251, %v3258
          %v3260 = vadd.f32 %v3252, %v3258
          %v3261 = vadd.f32 %v3253, %v3258
          %v3262 = vadd.f32 %v3254, %v3258
          %3263 = vst.msk [vmem:[#allocation16] sm:$0xff] %vm3193, %v3259
          %3264 = vst.msk [vmem:[#allocation16 + $0x8] sm:$0xff] %vm3193, %v3260
          %3265 = vst.msk [vmem:[#allocation16 + $0x10] sm:$0xff] %vm3193, %v3261
          %3266 = vst.msk [vmem:[#allocation16 + $0x18] sm:$0xff] %vm3193, %v3262
        $region116: #{tpu_custom_call.1} parent=75 // pred_fallthru
          _
        // Predicated region
        $region117: #{tpu_custom_call.1} parent=75 // pred_check
          %p3267 = pneg %p565
        $region118: #{tpu_custom_call.1} parent=75 // pred_check_branch
          %3269 = sbr.rel (%p3267) target = $region120
        $region119: #{tpu_custom_call.1} parent=75 // pred_region
          %s3270 = smul.u32 2, %s37
          %s3272 = ssub.s32 512, 512
          %3273 = vsyncadd [#allocation5], %s3272
          %s3274 = smul.addr %s3270, 2
          %s3275 = smul.addr %s3274, 128
          %s3276 = scalar_lea.hbm %s14, %s3275
          %s3277 = sshll.u32 [#allocation16], 4
          %s3278 = int_to_ptr.vmem [resolvable:$true] %s3277
          %3283 = dma.vmem_to_hbm [thread:$0]  %s3278, 512, %s3276, [#allocation5], 128, 128, 8
        $region120: #{tpu_custom_call.1} parent=75 // pred_fallthru
          _
        // Predicated region
        $region121: #{tpu_custom_call.1} parent=75 // pred_check
          %p3284 = pneg %p591
        $region122: #{tpu_custom_call.1} parent=75 // pred_check_branch
          %3286 = sbr.rel (%p3284) target = $region124
        $region123: #{tpu_custom_call.1} parent=75 // pred_region
          %s3287 = smul.u32 2, %s37
          %s3289 = ssub.s32 256, 256
          %3290 = vsyncadd [#allocation18], %s3289
          %s3291 = smul.addr %s3287, 2
          %s3292 = smul.addr %s3291, 64
          %s3293 = scalar_lea.hbm %s15, %s3292
          %s3294 = sshll.u32 [#allocation17], 4
          %s3295 = int_to_ptr.vmem [resolvable:$true] %s3294
          %3300 = dma.vmem_to_hbm [thread:$0]  %s3295, 256, %s3293, [#allocation18], 64, 64, 4
        $region124: #{tpu_custom_call.1} parent=75 // pred_fallthru
          _
        // Predicated region
        $region125: #{tpu_custom_call.1} parent=75 // pred_check
          %p3301 = pneg %p565
        $region126: #{tpu_custom_call.1} parent=75 // pred_check_branch
          %3303 = sbr.rel (%p3301) target = $region128
        $region127: #{tpu_custom_call.1} parent=75 // pred_region
          %3304 = dma.done [#allocation5], 512
        $region128: #{tpu_custom_call.1} parent=75 // pred_fallthru
          _
        // Predicated region
        $region129: #{tpu_custom_call.1} parent=75 // pred_check
          %p3305 = pneg %p591
        $region130: #{tpu_custom_call.1} parent=75 // pred_check_branch
          %3307 = sbr.rel (%p3305) target = $region132
        $region131: #{tpu_custom_call.1} parent=75 // pred_region
          %3308 = dma.done [#allocation18], 256
        $region132: #{tpu_custom_call.1} parent=75 // pred_fallthru
          _
      $region76: #{tpu_custom_call.1} parent=5 // pred_fallthru
        _
      %p3309 = scmp.le.s32.totalorder 2, %s28
      // Predicated region
      $region133: #{tpu_custom_call.1} parent=5 // pred_check
        %p3310 = pneg %p3309
      $region134: #{tpu_custom_call.1} parent=5 // pred_check_branch
        %3312 = sbr.rel (%p3310) target = $region136
      $region135: #{tpu_custom_call.1} parent=5 // pred_region
        %s3313 = ssub.s32 %s28, 2
      $region136: #{tpu_custom_call.1} parent=5 // pred_fallthru
        _
    $region6: #{tpu_custom_call.1} parent=1 // loop_footer
      %s32 = sadd.s32 1, %s28
    $region7: #{tpu_custom_call.1} parent=1 // loop_footer_branch
      %27 = sbr.rel target = $region3
    $region8: #{tpu_custom_call.1} parent=1 // loop_exit
      _
    %3314 = vsyncpa [#allocation4], 1
    %s3315 = scalar_lea.sflag [#allocation4], 1
    %3316 = vsyncpa %s3315, 1
    %3317 = vsyncpa [#allocation7], 1
    %3318 = vsyncpa [#allocation10], 1
    %3319 = vsyncpa [#allocation13], 1
    %3320 = vsyncpa [#allocation5], 1
    %s3321 = scalar_lea.sflag [#allocation5], 1
    %3322 = vsyncpa %s3321, 1
    %3323 = vsyncpa [#allocation18], 1

</llo_original>
